<compile_context>
chip_gen: v5e
topology: v5e:2x2
jax: 0.10.0
libtpu: 0.0.40
codegen_flags: <defaults>
</compile_context>

<pallas_src>
import functools

import jax
import jax.numpy as jnp
from jax.experimental import pallas as pl
from jax.experimental.pallas import tpu as pltpu

# Same full-precision MXU path for the kernel and the pure-JAX reference.
jax.config.update("jax_default_matmul_precision", "highest")


def _gelu_tanh(z):
    # tanh-approximate GELU (lowers cleanly on Mosaic).
    # TODO(synk): PyTorch nn.GELU() default is the exact erf form; the tanh
    # approximation differs by ~1e-3 max abs (no native erf on the EUP).
    c = 0.7978845608028654  # sqrt(2/pi)
    return 0.5 * z * (1.0 + jnp.tanh(c * (z + 0.044715 * z * z * z)))


# -----------------------------------------------------------------------------
# Fused Block kernel: one grid step per batch *block* of `bb` batch elements.
# -----------------------------------------------------------------------------
def _block_kernel(x_ref, pos_ref,
                  g1_ref, be1_ref,
                  wqk_ref, wv_ref, wp_ref, bp_ref,
                  g2_ref, be2_ref,
                  w1_ref, c1_ref, w2_ref, c2_ref, w3_ref, c3_ref,
                  y_ref, wei_ref,
                  *, n_heads, head_size, bb, seq_len):
    f32 = jnp.float32
    T = seq_len
    H = n_heads * head_size

    x3 = x_ref[...]                                    # (bb, T, C)
    C = x3.shape[-1]
    pos = pos_ref[...]                                 # (T, C)

    # ---- ln1 (eps = 1e-5, biased variance) ----
    mu1 = jnp.mean(x3, axis=-1, keepdims=True)
    var1 = jnp.mean(jnp.square(x3 - mu1), axis=-1, keepdims=True)
    h1_3 = (x3 - mu1) * jax.lax.rsqrt(var1 + 1e-5) * g1_ref[...] + be1_ref[...]

    # Fold the batch block into the row dimension for all dense matmuls.
    xp = (h1_3 + pos).reshape(bb * T, C)               # Q/K input (pos added once)
    h1 = h1_3.reshape(bb * T, C)                       # V input
    xf = x3.reshape(bb * T, C)                         # residual input

    # ---- folded Q|K matmul (scale pre-folded into the Q half) and V matmul --
    qk = jnp.dot(xp, wqk_ref[...], preferred_element_type=f32)   # (bb*T, 2H)
    v = jnp.dot(h1, wv_ref[...], preferred_element_type=f32)     # (bb*T, H)

    # additive causal mask, built once per grid step
    row = jax.lax.broadcasted_iota(jnp.int32, (T, T), 0)
    col = jax.lax.broadcasted_iota(jnp.int32, (T, T), 1)
    neg = jnp.where(col <= row, 0.0, -jnp.inf).astype(f32)

    # ---- per-(batch, head) scores / softmax / PV ----
    o_rows = []
    for b in range(bb):
        r0 = b * T
        q_b = qk[r0:r0 + T, :H]
        k_b = qk[r0:r0 + T, H:]
        v_b = v[r0:r0 + T, :]
        oh = []
        for hd in range(n_heads):
            lo = hd * head_size
            qh = q_b[:, lo:lo + head_size]             # (T, hs), already scaled
            kh = k_b[:, lo:lo + head_size]             # (T, hs)
            vh = v_b[:, lo:lo + head_size]             # (T, hs)
            # q @ k^T without materialising kh.T (trans_b contraction)
            s = jax.lax.dot_general(qh, kh, (((1,), (1,)), ((), ())),
                                    preferred_element_type=f32)   # (T, T)
            s = s + neg
            m = jnp.max(s, axis=-1, keepdims=True)
            e = jnp.exp(s - m)
            w = e / jnp.sum(e, axis=-1, keepdims=True)             # (T, T)
            wei_ref[b, hd] = w
            oh.append(jnp.dot(w, vh, preferred_element_type=f32))  # (T, hs)
        o_rows.append(jnp.concatenate(oh, axis=-1))                # (T, H)
    o_all = o_rows[0] if bb == 1 else jnp.concatenate(o_rows, axis=0)  # (bb*T, H)

    # ---- single fused output projection over all heads / batch rows ----
    sa = jnp.dot(o_all, wp_ref[...], preferred_element_type=f32) + bp_ref[...]
    x1 = xf + sa                                                   # residual 1

    # ---- ln2 + feed-forward (Linear-GELU-Linear-GELU-Linear), dropout = id --
    mu2 = jnp.mean(x1, axis=-1, keepdims=True)
    var2 = jnp.mean(jnp.square(x1 - mu2), axis=-1, keepdims=True)
    h2 = (x1 - mu2) * jax.lax.rsqrt(var2 + 1e-5) * g2_ref[...] + be2_ref[...]

    f = _gelu_tanh(jnp.dot(h2, w1_ref[...], preferred_element_type=f32) + c1_ref[...])
    f = _gelu_tanh(jnp.dot(f, w2_ref[...], preferred_element_type=f32) + c2_ref[...])
    f = jnp.dot(f, w3_ref[...], preferred_element_type=f32) + c3_ref[...]

    y_ref[...] = (x1 + f).reshape(bb, T, C)                        # residual 2


# -----------------------------------------------------------------------------
# One-time weight repacking (hoisted out of the per-call hot path).
# -----------------------------------------------------------------------------
def prepare_params(params, *, n_heads):
    C = params["ln1_w"].shape[0]
    head_size = C // n_heads
    H = n_heads * head_size
    scale = head_size ** -0.5

    wq, wk, wv = params["wq"], params["wk"], params["wv"]          # (nh, hs, C)
    wq_s = jnp.transpose(wq, (2, 0, 1)).reshape(C, H) * scale      # scale folded
    wk_s = jnp.transpose(wk, (2, 0, 1)).reshape(C, H)
    return {
        "wqk": jnp.concatenate([wq_s, wk_s], axis=1),              # (C, 2H)
        "wv": jnp.transpose(wv, (2, 0, 1)).reshape(C, H),          # (C, H)
        "wp": jnp.transpose(params["w_proj"]),                     # (H, C)
        "bp": params["b_proj"].reshape(1, C),
        "g1": params["ln1_w"].reshape(1, C), "be1": params["ln1_b"].reshape(1, C),
        "g2": params["ln2_w"].reshape(1, C), "be2": params["ln2_b"].reshape(1, C),
        "w1": jnp.transpose(params["w1"]), "c1": params["b1"].reshape(1, -1),
        "w2": jnp.transpose(params["w2"]), "c2": params["b2"].reshape(1, -1),
        "w3": jnp.transpose(params["w3"]), "c3": params["b3"].reshape(1, -1),
    }


def _pick_batch_block(batch):
    """Fold the whole batch into one grid step on single-TensorCore chips
    (v5e/v6e); keep one batch element per parallel grid step on v7x so both
    TensorCores get work."""
    try:
        kind = jax.devices()[0].device_kind.lower()
    except Exception:
        return 1
    if "v7" in kind or "7x" in kind:
        return 1
    return batch


# -----------------------------------------------------------------------------
# Wrapper: BlockSpecs + one pallas_call.
# -----------------------------------------------------------------------------
def block_forward(x, pos_emb, prep, *, n_heads, batch_block=None):
    """x: (B, T, C) f32, pos_emb: (T, C) f32, prep = prepare_params(...)."""
    B, T, C = x.shape
    head_size = C // n_heads
    bb = _pick_batch_block(B) if batch_block is None else batch_block
    if bb < 1 or B % bb != 0:
        bb = 1

    def fixed(arr):
        nd = arr.ndim
        return pl.BlockSpec(arr.shape, lambda i, _nd=nd: (0,) * _nd)

    in_specs = [
        pl.BlockSpec((bb, T, C), lambda i: (i, 0, 0)),             # x
        fixed(pos_emb),
        fixed(prep["g1"]), fixed(prep["be1"]),
        fixed(prep["wqk"]), fixed(prep["wv"]), fixed(prep["wp"]), fixed(prep["bp"]),
        fixed(prep["g2"]), fixed(prep["be2"]),
        fixed(prep["w1"]), fixed(prep["c1"]),
        fixed(prep["w2"]), fixed(prep["c2"]),
        fixed(prep["w3"]), fixed(prep["c3"]),
    ]
    out_specs = (
        pl.BlockSpec((bb, T, C), lambda i: (i, 0, 0)),
        pl.BlockSpec((bb, n_heads, T, T), lambda i: (i, 0, 0, 0)),
    )
    out_shape = (
        jax.ShapeDtypeStruct((B, T, C), jnp.float32),
        jax.ShapeDtypeStruct((B, n_heads, T, T), jnp.float32),
    )

    kernel = functools.partial(_block_kernel, n_heads=n_heads,
                               head_size=head_size, bb=bb, seq_len=T)
    y, att_wei = pl.pallas_call(
        kernel,
        grid=(B // bb,),
        in_specs=in_specs,
        out_specs=out_specs,
        out_shape=out_shape,
        compiler_params=pltpu.CompilerParams(dimension_semantics=("parallel",)),
    )(x, pos_emb, prep["g1"], prep["be1"], prep["wqk"], prep["wv"], prep["wp"],
      prep["bp"], prep["g2"], prep["be2"], prep["w1"], prep["c1"], prep["w2"],
      prep["c2"], prep["w3"], prep["c3"])
    return y, att_wei


# -----------------------------------------------------------------------------
# Pure-JAX reference (mirrors the PyTorch module, PyTorch weight layout).
# -----------------------------------------------------------------------------
def reference(x, pos_emb, params, *, n_heads):
    B, T, C = x.shape
    head_size = C // n_heads

    def ln(z, g, b):
        m = jnp.mean(z, axis=-1, keepdims=True)
        v = jnp.mean(jnp.square(z - m), axis=-1, keepdims=True)
        return (z - m) / jnp.sqrt(v + 1e-5) * g + b

    h1 = ln(x, params["ln1_w"], params["ln1_b"])
    xp = h1 + pos_emb
    tril = jnp.tril(jnp.ones((T, T), jnp.float32))
    outs, weis = [], []
    for h in range(n_heads):
        q = xp @ params["wq"][h].T
        k = xp @ params["wk"][h].T
        v = h1 @ params["wv"][h].T
        wei = (q @ jnp.swapaxes(k, -1, -2)) * (head_size ** -0.5)
        wei = jnp.where(tril == 0, -jnp.inf, wei)
        wei = jax.nn.softmax(wei, axis=-1)
        outs.append(wei @ v)
        weis.append(wei)
    cat = jnp.concatenate(outs, axis=-1)
    x1 = x + cat @ params["w_proj"].T + params["b_proj"]
    h2 = ln(x1, params["ln2_w"], params["ln2_b"])
    f = _gelu_tanh(h2 @ params["w1"].T + params["b1"])
    f = _gelu_tanh(f @ params["w2"].T + params["b2"])
    f = f @ params["w3"].T + params["b3"]
    return x1 + f, jnp.stack(weis, axis=1)


if __name__ == "__main__":
    # Block config: n_embd=32, n_head=4 (head_size=8), block_size T=8, B=2.
    B, T = 2, 8
    C, n_heads = 32, 4
    head_size = C // n_heads
    H = n_heads * head_size

    key = jax.random.PRNGKey(0)
    ks = jax.random.split(key, 17)
    x = jax.random.normal(ks[0], (B, T, C), jnp.float32)
    pos_emb = jax.random.normal(ks[1], (T, C), jnp.float32)
    params = {
        "ln1_w": 1.0 + 0.1 * jax.random.normal(ks[2], (C,), jnp.float32),
        "ln1_b": 0.1 * jax.random.normal(ks[3], (C,), jnp.float32),
        "wq": 0.1 * jax.random.normal(ks[4], (n_heads, head_size, C), jnp.float32),
        "wk": 0.1 * jax.random.normal(ks[5], (n_heads, head_size, C), jnp.float32),
        "wv": 0.1 * jax.random.normal(ks[6], (n_heads, head_size, C), jnp.float32),
        "w_proj": 0.1 * jax.random.normal(ks[7], (C, H), jnp.float32),
        "b_proj": 0.1 * jax.random.normal(ks[8], (C,), jnp.float32),
        "ln2_w": 1.0 + 0.1 * jax.random.normal(ks[9], (C,), jnp.float32),
        "ln2_b": 0.1 * jax.random.normal(ks[10], (C,), jnp.float32),
        "w1": 0.1 * jax.random.normal(ks[11], (4 * C, C), jnp.float32),
        "b1": 0.1 * jax.random.normal(ks[12], (4 * C,), jnp.float32),
        "w2": 0.1 * jax.random.normal(ks[13], (2 * C, 4 * C), jnp.float32),
        "b2": 0.1 * jax.random.normal(ks[14], (2 * C,), jnp.float32),
        "w3": 0.1 * jax.random.normal(ks[15], (C, 2 * C), jnp.float32),
        "b3": 0.1 * jax.random.normal(ks[16], (C,), jnp.float32),
    }

    prep = prepare_params(params, n_heads=n_heads)     # one-time weight repack
    y, att = block_forward(x, pos_emb, prep, n_heads=n_heads)
    y = jax.block_until_ready(y)
    att = jax.block_until_ready(att)

    y_ref, att_ref = reference(x, pos_emb, params, n_heads=n_heads)
    att_err = float(jnp.max(jnp.abs(att - att_ref)))
    y_err = float(jnp.max(jnp.abs(y - y_ref)))
    assert jnp.allclose(att, att_ref, atol=1e-4, rtol=1e-4), att_err
    assert jnp.allclose(y, y_ref, atol=2e-3, rtol=2e-3), y_err

    print("KERNEL_OK")
</pallas_src>

<mosaic_0001>
module attributes {stable_mosaic.version = 11 : i64} {
  func.func @_block_kernel(%arg0: i32, %arg1: memref<2x8x32xf32, #tpu.memory_space<vmem>>, %arg2: memref<8x32xf32, #tpu.memory_space<vmem>>, %arg3: memref<1x32xf32, #tpu.memory_space<vmem>>, %arg4: memref<1x32xf32, #tpu.memory_space<vmem>>, %arg5: memref<32x64xf32, #tpu.memory_space<vmem>>, %arg6: memref<32x32xf32, #tpu.memory_space<vmem>>, %arg7: memref<32x32xf32, #tpu.memory_space<vmem>>, %arg8: memref<1x32xf32, #tpu.memory_space<vmem>>, %arg9: memref<1x32xf32, #tpu.memory_space<vmem>>, %arg10: memref<1x32xf32, #tpu.memory_space<vmem>>, %arg11: memref<32x128xf32, #tpu.memory_space<vmem>>, %arg12: memref<1x128xf32, #tpu.memory_space<vmem>>, %arg13: memref<128x64xf32, #tpu.memory_space<vmem>>, %arg14: memref<1x64xf32, #tpu.memory_space<vmem>>, %arg15: memref<64x32xf32, #tpu.memory_space<vmem>>, %arg16: memref<1x32xf32, #tpu.memory_space<vmem>>, %arg17: memref<2x8x32xf32, #tpu.memory_space<vmem>>, %arg18: memref<2x4x8x8xf32, #tpu.memory_space<vmem>>) attributes {dimension_semantics = [#tpu.dimension_semantics<parallel>], iteration_bounds = array<i64: 1>, scalar_prefetch = 0 : i64, scratch_operands = 0 : i64, tpu.core_type = #tpu.core_type<tc>, window_params = [{transform_indices = @transform_0, window_bounds = array<i64: 2, 8, 32>}, {pipeline_mode = #tpu.pipeline_mode<synchronous>, transform_indices = @transform_1, window_bounds = array<i64: 8, 32>}, {pipeline_mode = #tpu.pipeline_mode<synchronous>, transform_indices = @transform_2, window_bounds = array<i64: 1, 32>}, {pipeline_mode = #tpu.pipeline_mode<synchronous>, transform_indices = @transform_3, window_bounds = array<i64: 1, 32>}, {pipeline_mode = #tpu.pipeline_mode<synchronous>, transform_indices = @transform_4, window_bounds = array<i64: 32, 64>}, {pipeline_mode = #tpu.pipeline_mode<synchronous>, transform_indices = @transform_5, window_bounds = array<i64: 32, 32>}, {pipeline_mode = #tpu.pipeline_mode<synchronous>, transform_indices = @transform_6, window_bounds = array<i64: 32, 32>}, {pipeline_mode = #tpu.pipeline_mode<synchronous>, transform_indices = @transform_7, window_bounds = array<i64: 1, 32>}, {pipeline_mode = #tpu.pipeline_mode<synchronous>, transform_indices = @transform_8, window_bounds = array<i64: 1, 32>}, {pipeline_mode = #tpu.pipeline_mode<synchronous>, transform_indices = @transform_9, window_bounds = array<i64: 1, 32>}, {pipeline_mode = #tpu.pipeline_mode<synchronous>, transform_indices = @transform_10, window_bounds = array<i64: 32, 128>}, {pipeline_mode = #tpu.pipeline_mode<synchronous>, transform_indices = @transform_11, window_bounds = array<i64: 1, 128>}, {pipeline_mode = #tpu.pipeline_mode<synchronous>, transform_indices = @transform_12, window_bounds = array<i64: 128, 64>}, {pipeline_mode = #tpu.pipeline_mode<synchronous>, transform_indices = @transform_13, window_bounds = array<i64: 1, 64>}, {pipeline_mode = #tpu.pipeline_mode<synchronous>, transform_indices = @transform_14, window_bounds = array<i64: 64, 32>}, {pipeline_mode = #tpu.pipeline_mode<synchronous>, transform_indices = @transform_15, window_bounds = array<i64: 1, 32>}, {transform_indices = @transform_16, window_bounds = array<i64: 2, 8, 32>}, {transform_indices = @transform_17, window_bounds = array<i64: 2, 4, 8, 8>}]} {
    %c0 = arith.constant 0 : index
    %c0_0 = arith.constant 0 : index
    %c0_1 = arith.constant 0 : index
    %0 = vector.load %arg1[%c0, %c0_0, %c0_1] : memref<2x8x32xf32, #tpu.memory_space<vmem>>, vector<2x8x32xf32>
    %c0_2 = arith.constant 0 : index
    %c0_3 = arith.constant 0 : index
    %1 = vector.load %arg2[%c0_2, %c0_3] : memref<8x32xf32, #tpu.memory_space<vmem>>, vector<8x32xf32>
    %cst = arith.constant dense<0.000000e+00> : vector<2x8xf32>
    %2 = vector.multi_reduction <add>, %0, %cst [2] : vector<2x8x32xf32> to vector<2x8xf32>
    %3 = vector.shape_cast %2 : vector<2x8xf32> to vector<2x8x1xf32>
    %cst_4 = arith.constant 3.200000e+01 : f32
    %4 = vector.broadcast %cst_4 : f32 to vector<2x8x1xf32>
    %5 = arith.divf %3, %4 : vector<2x8x1xf32>
    %6 = vector.broadcast %5 : vector<2x8x1xf32> to vector<2x8x32xf32>
    %7 = arith.subf %0, %6 : vector<2x8x32xf32>
    %8 = arith.mulf %7, %7 : vector<2x8x32xf32>
    %cst_5 = arith.constant dense<0.000000e+00> : vector<2x8xf32>
    %9 = vector.multi_reduction <add>, %8, %cst_5 [2] : vector<2x8x32xf32> to vector<2x8xf32>
    %10 = vector.shape_cast %9 : vector<2x8xf32> to vector<2x8x1xf32>
    %cst_6 = arith.constant 3.200000e+01 : f32
    %11 = vector.broadcast %cst_6 : f32 to vector<2x8x1xf32>
    %12 = arith.divf %10, %11 : vector<2x8x1xf32>
    %13 = vector.broadcast %5 : vector<2x8x1xf32> to vector<2x8x32xf32>
    %14 = arith.subf %0, %13 : vector<2x8x32xf32>
    %cst_7 = arith.constant 9.99999974E-6 : f32
    %15 = vector.broadcast %cst_7 : f32 to vector<2x8x1xf32>
    %16 = arith.addf %12, %15 : vector<2x8x1xf32>
    %17 = math.rsqrt %16 : vector<2x8x1xf32>
    %18 = vector.broadcast %17 : vector<2x8x1xf32> to vector<2x8x32xf32>
    %19 = arith.mulf %14, %18 : vector<2x8x32xf32>
    %c0_8 = arith.constant 0 : index
    %c0_9 = arith.constant 0 : index
    %20 = vector.load %arg3[%c0_8, %c0_9] : memref<1x32xf32, #tpu.memory_space<vmem>>, vector<1x32xf32>
    %21 = vector.shape_cast %20 : vector<1x32xf32> to vector<1x1x32xf32>
    %22 = vector.broadcast %21 : vector<1x1x32xf32> to vector<2x8x32xf32>
    %23 = arith.mulf %19, %22 : vector<2x8x32xf32>
    %c0_10 = arith.constant 0 : index
    %c0_11 = arith.constant 0 : index
    %24 = vector.load %arg4[%c0_10, %c0_11] : memref<1x32xf32, #tpu.memory_space<vmem>>, vector<1x32xf32>
    %25 = vector.shape_cast %24 : vector<1x32xf32> to vector<1x1x32xf32>
    %26 = vector.broadcast %25 : vector<1x1x32xf32> to vector<2x8x32xf32>
    %27 = arith.addf %23, %26 : vector<2x8x32xf32>
    %28 = vector.shape_cast %1 : vector<8x32xf32> to vector<1x8x32xf32>
    %29 = vector.broadcast %28 : vector<1x8x32xf32> to vector<2x8x32xf32>
    %30 = arith.addf %27, %29 : vector<2x8x32xf32>
    %31 = vector.shape_cast %30 : vector<2x8x32xf32> to vector<16x32xf32>
    %32 = vector.shape_cast %27 : vector<2x8x32xf32> to vector<16x32xf32>
    %33 = vector.shape_cast %0 : vector<2x8x32xf32> to vector<16x32xf32>
    %c0_12 = arith.constant 0 : index
    %c0_13 = arith.constant 0 : index
    %34 = vector.load %arg5[%c0_12, %c0_13] : memref<32x64xf32, #tpu.memory_space<vmem>>, vector<32x64xf32>
    %cst_14 = arith.constant dense<0.000000e+00> : vector<16x64xf32>
    %35 = tpu.matmul %31, %34, %cst_14 {dimension_numbers = #tpu.dot_dimension_numbers<[1], [0], [0], [1], [0, 0, 1, 1], [], []>, precision = #tpu.contract_precision<fp32>} : vector<16x32xf32>, vector<32x64xf32>, vector<16x64xf32> -> vector<16x64xf32>
    %c0_15 = arith.constant 0 : index
    %c0_16 = arith.constant 0 : index
    %36 = vector.load %arg6[%c0_15, %c0_16] : memref<32x32xf32, #tpu.memory_space<vmem>>, vector<32x32xf32>
    %cst_17 = arith.constant dense<0.000000e+00> : vector<16x32xf32>
    %37 = tpu.matmul %32, %36, %cst_17 {dimension_numbers = #tpu.dot_dimension_numbers<[1], [0], [0], [1], [0, 0, 1, 1], [], []>, precision = #tpu.contract_precision<fp32>} : vector<16x32xf32>, vector<32x32xf32>, vector<16x32xf32> -> vector<16x32xf32>
    %38 = tpu.iota {dimensions = array<i32: 0>} : vector<8x8xi32>
    %39 = tpu.iota {dimensions = array<i32: 1>} : vector<8x8xi32>
    %40 = arith.cmpi sle, %39, %38 : vector<8x8xi32>
    %cst_18 = arith.constant 0.000000e+00 : f32
    %cst_19 = arith.constant 0xFF800000 : f32
    %41 = vector.broadcast %cst_18 : f32 to vector<8x8xf32>
    %42 = vector.broadcast %cst_19 : f32 to vector<8x8xf32>
    %43 = arith.select %40, %41, %42 : vector<8x8xi1>, vector<8x8xf32>
    %44 = vector.extract_strided_slice %35 {offsets = [0, 0], sizes = [8, 32], strides = [1, 1]} : vector<16x64xf32> to vector<8x32xf32>
    %45 = vector.extract_strided_slice %35 {offsets = [0, 32], sizes = [8, 32], strides = [1, 1]} : vector<16x64xf32> to vector<8x32xf32>
    %46 = vector.extract_strided_slice %37 {offsets = [0, 0], sizes = [8, 32], strides = [1, 1]} : vector<16x32xf32> to vector<8x32xf32>
    %47 = vector.extract_strided_slice %44 {offsets = [0, 0], sizes = [8, 8], strides = [1, 1]} : vector<8x32xf32> to vector<8x8xf32>
    %48 = vector.extract_strided_slice %45 {offsets = [0, 0], sizes = [8, 8], strides = [1, 1]} : vector<8x32xf32> to vector<8x8xf32>
    %49 = vector.extract_strided_slice %46 {offsets = [0, 0], sizes = [8, 8], strides = [1, 1]} : vector<8x32xf32> to vector<8x8xf32>
    %cst_20 = arith.constant dense<0.000000e+00> : vector<8x8xf32>
    %50 = tpu.matmul %47, %48, %cst_20 {dimension_numbers = #tpu.dot_dimension_numbers<[1], [1], [0], [0], [0, 0, 1, 0], [], []>, precision = #tpu.contract_precision<fp32>} : vector<8x8xf32>, vector<8x8xf32>, vector<8x8xf32> -> vector<8x8xf32>
    %51 = arith.addf %50, %43 : vector<8x8xf32>
    %cst_21 = arith.constant dense<0xFF800000> : vector<8xf32>
    %52 = vector.multi_reduction <maximumf>, %51, %cst_21 [1] : vector<8x8xf32> to vector<8xf32>
    %53 = vector.shape_cast %52 : vector<8xf32> to vector<8x1xf32>
    %54 = vector.broadcast %53 : vector<8x1xf32> to vector<8x8xf32>
    %55 = arith.subf %51, %54 : vector<8x8xf32>
    %56 = math.exp %55 : vector<8x8xf32>
    %cst_22 = arith.constant dense<0.000000e+00> : vector<8xf32>
    %57 = vector.multi_reduction <add>, %56, %cst_22 [1] : vector<8x8xf32> to vector<8xf32>
    %58 = vector.shape_cast %57 : vector<8xf32> to vector<8x1xf32>
    %59 = vector.broadcast %58 : vector<8x1xf32> to vector<8x8xf32>
    %60 = arith.divf %56, %59 : vector<8x8xf32>
    %c0_23 = arith.constant 0 : index
    %c0_24 = arith.constant 0 : index
    %c0_25 = arith.constant 0 : index
    %c0_26 = arith.constant 0 : index
    %61 = vector.load %arg18[%c0_23, %c0_24, %c0_25, %c0_26] : memref<2x4x8x8xf32, #tpu.memory_space<vmem>>, vector<1x1x8x8xf32>
    %62 = vector.shape_cast %61 : vector<1x1x8x8xf32> to vector<8x8xf32>
    %63 = vector.shape_cast %60 : vector<8x8xf32> to vector<1x1x8x8xf32>
    tpu.vector_store %arg18[%c0_23, %c0_24, %c0_25, %c0_26], %63 {strides = array<i32>} : memref<2x4x8x8xf32, #tpu.memory_space<vmem>>, vector<1x1x8x8xf32>,
    %cst_27 = arith.constant dense<0.000000e+00> : vector<8x8xf32>
    %64 = tpu.matmul %60, %49, %cst_27 {dimension_numbers = #tpu.dot_dimension_numbers<[1], [0], [0], [1], [0, 0, 1, 1], [], []>, precision = #tpu.contract_precision<fp32>} : vector<8x8xf32>, vector<8x8xf32>, vector<8x8xf32> -> vector<8x8xf32>
    %65 = vector.extract_strided_slice %44 {offsets = [0, 8], sizes = [8, 8], strides = [1, 1]} : vector<8x32xf32> to vector<8x8xf32>
    %66 = vector.extract_strided_slice %45 {offsets = [0, 8], sizes = [8, 8], strides = [1, 1]} : vector<8x32xf32> to vector<8x8xf32>
    %67 = vector.extract_strided_slice %46 {offsets = [0, 8], sizes = [8, 8], strides = [1, 1]} : vector<8x32xf32> to vector<8x8xf32>
    %cst_28 = arith.constant dense<0.000000e+00> : vector<8x8xf32>
    %68 = tpu.matmul %65, %66, %cst_28 {dimension_numbers = #tpu.dot_dimension_numbers<[1], [1], [0], [0], [0, 0, 1, 0], [], []>, precision = #tpu.contract_precision<fp32>} : vector<8x8xf32>, vector<8x8xf32>, vector<8x8xf32> -> vector<8x8xf32>
    %69 = arith.addf %68, %43 : vector<8x8xf32>
    %cst_29 = arith.constant dense<0xFF800000> : vector<8xf32>
    %70 = vector.multi_reduction <maximumf>, %69, %cst_29 [1] : vector<8x8xf32> to vector<8xf32>
    %71 = vector.shape_cast %70 : vector<8xf32> to vector<8x1xf32>
    %72 = vector.broadcast %71 : vector<8x1xf32> to vector<8x8xf32>
    %73 = arith.subf %69, %72 : vector<8x8xf32>
    %74 = math.exp %73 : vector<8x8xf32>
    %cst_30 = arith.constant dense<0.000000e+00> : vector<8xf32>
    %75 = vector.multi_reduction <add>, %74, %cst_30 [1] : vector<8x8xf32> to vector<8xf32>
    %76 = vector.shape_cast %75 : vector<8xf32> to vector<8x1xf32>
    %77 = vector.broadcast %76 : vector<8x1xf32> to vector<8x8xf32>
    %78 = arith.divf %74, %77 : vector<8x8xf32>
    %c0_31 = arith.constant 0 : index
    %c1 = arith.constant 1 : index
    %c0_32 = arith.constant 0 : index
    %c0_33 = arith.constant 0 : index
    %79 = vector.load %arg18[%c0_31, %c1, %c0_32, %c0_33] : memref<2x4x8x8xf32, #tpu.memory_space<vmem>>, vector<1x1x8x8xf32>
    %80 = vector.shape_cast %79 : vector<1x1x8x8xf32> to vector<8x8xf32>
    %81 = vector.shape_cast %78 : vector<8x8xf32> to vector<1x1x8x8xf32>
    tpu.vector_store %arg18[%c0_31, %c1, %c0_32, %c0_33], %81 {strides = array<i32>} : memref<2x4x8x8xf32, #tpu.memory_space<vmem>>, vector<1x1x8x8xf32>,
    %cst_34 = arith.constant dense<0.000000e+00> : vector<8x8xf32>
    %82 = tpu.matmul %78, %67, %cst_34 {dimension_numbers = #tpu.dot_dimension_numbers<[1], [0], [0], [1], [0, 0, 1, 1], [], []>, precision = #tpu.contract_precision<fp32>} : vector<8x8xf32>, vector<8x8xf32>, vector<8x8xf32> -> vector<8x8xf32>
    %83 = vector.extract_strided_slice %44 {offsets = [0, 16], sizes = [8, 8], strides = [1, 1]} : vector<8x32xf32> to vector<8x8xf32>
    %84 = vector.extract_strided_slice %45 {offsets = [0, 16], sizes = [8, 8], strides = [1, 1]} : vector<8x32xf32> to vector<8x8xf32>
    %85 = vector.extract_strided_slice %46 {offsets = [0, 16], sizes = [8, 8], strides = [1, 1]} : vector<8x32xf32> to vector<8x8xf32>
    %cst_35 = arith.constant dense<0.000000e+00> : vector<8x8xf32>
    %86 = tpu.matmul %83, %84, %cst_35 {dimension_numbers = #tpu.dot_dimension_numbers<[1], [1], [0], [0], [0, 0, 1, 0], [], []>, precision = #tpu.contract_precision<fp32>} : vector<8x8xf32>, vector<8x8xf32>, vector<8x8xf32> -> vector<8x8xf32>
    %87 = arith.addf %86, %43 : vector<8x8xf32>
    %cst_36 = arith.constant dense<0xFF800000> : vector<8xf32>
    %88 = vector.multi_reduction <maximumf>, %87, %cst_36 [1] : vector<8x8xf32> to vector<8xf32>
    %89 = vector.shape_cast %88 : vector<8xf32> to vector<8x1xf32>
    %90 = vector.broadcast %89 : vector<8x1xf32> to vector<8x8xf32>
    %91 = arith.subf %87, %90 : vector<8x8xf32>
    %92 = math.exp %91 : vector<8x8xf32>
    %cst_37 = arith.constant dense<0.000000e+00> : vector<8xf32>
    %93 = vector.multi_reduction <add>, %92, %cst_37 [1] : vector<8x8xf32> to vector<8xf32>
    %94 = vector.shape_cast %93 : vector<8xf32> to vector<8x1xf32>
    %95 = vector.broadcast %94 : vector<8x1xf32> to vector<8x8xf32>
    %96 = arith.divf %92, %95 : vector<8x8xf32>
    %c0_38 = arith.constant 0 : index
    %c2 = arith.constant 2 : index
    %c0_39 = arith.constant 0 : index
    %c0_40 = arith.constant 0 : index
    %97 = vector.load %arg18[%c0_38, %c2, %c0_39, %c0_40] : memref<2x4x8x8xf32, #tpu.memory_space<vmem>>, vector<1x1x8x8xf32>
    %98 = vector.shape_cast %97 : vector<1x1x8x8xf32> to vector<8x8xf32>
    %99 = vector.shape_cast %96 : vector<8x8xf32> to vector<1x1x8x8xf32>
    tpu.vector_store %arg18[%c0_38, %c2, %c0_39, %c0_40], %99 {strides = array<i32>} : memref<2x4x8x8xf32, #tpu.memory_space<vmem>>, vector<1x1x8x8xf32>,
    %cst_41 = arith.constant dense<0.000000e+00> : vector<8x8xf32>
    %100 = tpu.matmul %96, %85, %cst_41 {dimension_numbers = #tpu.dot_dimension_numbers<[1], [0], [0], [1], [0, 0, 1, 1], [], []>, precision = #tpu.contract_precision<fp32>} : vector<8x8xf32>, vector<8x8xf32>, vector<8x8xf32> -> vector<8x8xf32>
    %101 = vector.extract_strided_slice %44 {offsets = [0, 24], sizes = [8, 8], strides = [1, 1]} : vector<8x32xf32> to vector<8x8xf32>
    %102 = vector.extract_strided_slice %45 {offsets = [0, 24], sizes = [8, 8], strides = [1, 1]} : vector<8x32xf32> to vector<8x8xf32>
    %103 = vector.extract_strided_slice %46 {offsets = [0, 24], sizes = [8, 8], strides = [1, 1]} : vector<8x32xf32> to vector<8x8xf32>
    %cst_42 = arith.constant dense<0.000000e+00> : vector<8x8xf32>
    %104 = tpu.matmul %101, %102, %cst_42 {dimension_numbers = #tpu.dot_dimension_numbers<[1], [1], [0], [0], [0, 0, 1, 0], [], []>, precision = #tpu.contract_precision<fp32>} : vector<8x8xf32>, vector<8x8xf32>, vector<8x8xf32> -> vector<8x8xf32>
    %105 = arith.addf %104, %43 : vector<8x8xf32>
    %cst_43 = arith.constant dense<0xFF800000> : vector<8xf32>
    %106 = vector.multi_reduction <maximumf>, %105, %cst_43 [1] : vector<8x8xf32> to vector<8xf32>
    %107 = vector.shape_cast %106 : vector<8xf32> to vector<8x1xf32>
    %108 = vector.broadcast %107 : vector<8x1xf32> to vector<8x8xf32>
    %109 = arith.subf %105, %108 : vector<8x8xf32>
    %110 = math.exp %109 : vector<8x8xf32>
    %cst_44 = arith.constant dense<0.000000e+00> : vector<8xf32>
    %111 = vector.multi_reduction <add>, %110, %cst_44 [1] : vector<8x8xf32> to vector<8xf32>
    %112 = vector.shape_cast %111 : vector<8xf32> to vector<8x1xf32>
    %113 = vector.broadcast %112 : vector<8x1xf32> to vector<8x8xf32>
    %114 = arith.divf %110, %113 : vector<8x8xf32>
    %c0_45 = arith.constant 0 : index
    %c3 = arith.constant 3 : index
    %c0_46 = arith.constant 0 : index
    %c0_47 = arith.constant 0 : index
    %115 = vector.load %arg18[%c0_45, %c3, %c0_46, %c0_47] : memref<2x4x8x8xf32, #tpu.memory_space<vmem>>, vector<1x1x8x8xf32>
    %116 = vector.shape_cast %115 : vector<1x1x8x8xf32> to vector<8x8xf32>
    %117 = vector.shape_cast %114 : vector<8x8xf32> to vector<1x1x8x8xf32>
    tpu.vector_store %arg18[%c0_45, %c3, %c0_46, %c0_47], %117 {strides = array<i32>} : memref<2x4x8x8xf32, #tpu.memory_space<vmem>>, vector<1x1x8x8xf32>,
    %cst_48 = arith.constant dense<0.000000e+00> : vector<8x8xf32>
    %118 = tpu.matmul %114, %103, %cst_48 {dimension_numbers = #tpu.dot_dimension_numbers<[1], [0], [0], [1], [0, 0, 1, 1], [], []>, precision = #tpu.contract_precision<fp32>} : vector<8x8xf32>, vector<8x8xf32>, vector<8x8xf32> -> vector<8x8xf32>
    %119 = tpu.concatenate %64, %82, %100, %118 in 1 : vector<8x8xf32>, vector<8x8xf32>, vector<8x8xf32>, vector<8x8xf32> -> vector<8x32xf32>
    %120 = vector.extract_strided_slice %35 {offsets = [8, 0], sizes = [8, 32], strides = [1, 1]} : vector<16x64xf32> to vector<8x32xf32>
    %121 = vector.extract_strided_slice %35 {offsets = [8, 32], sizes = [8, 32], strides = [1, 1]} : vector<16x64xf32> to vector<8x32xf32>
    %122 = vector.extract_strided_slice %37 {offsets = [8, 0], sizes = [8, 32], strides = [1, 1]} : vector<16x32xf32> to vector<8x32xf32>
    %123 = vector.extract_strided_slice %120 {offsets = [0, 0], sizes = [8, 8], strides = [1, 1]} : vector<8x32xf32> to vector<8x8xf32>
    %124 = vector.extract_strided_slice %121 {offsets = [0, 0], sizes = [8, 8], strides = [1, 1]} : vector<8x32xf32> to vector<8x8xf32>
    %125 = vector.extract_strided_slice %122 {offsets = [0, 0], sizes = [8, 8], strides = [1, 1]} : vector<8x32xf32> to vector<8x8xf32>
    %cst_49 = arith.constant dense<0.000000e+00> : vector<8x8xf32>
    %126 = tpu.matmul %123, %124, %cst_49 {dimension_numbers = #tpu.dot_dimension_numbers<[1], [1], [0], [0], [0, 0, 1, 0], [], []>, precision = #tpu.contract_precision<fp32>} : vector<8x8xf32>, vector<8x8xf32>, vector<8x8xf32> -> vector<8x8xf32>
    %127 = arith.addf %126, %43 : vector<8x8xf32>
    %cst_50 = arith.constant dense<0xFF800000> : vector<8xf32>
    %128 = vector.multi_reduction <maximumf>, %127, %cst_50 [1] : vector<8x8xf32> to vector<8xf32>
    %129 = vector.shape_cast %128 : vector<8xf32> to vector<8x1xf32>
    %130 = vector.broadcast %129 : vector<8x1xf32> to vector<8x8xf32>
    %131 = arith.subf %127, %130 : vector<8x8xf32>
    %132 = math.exp %131 : vector<8x8xf32>
    %cst_51 = arith.constant dense<0.000000e+00> : vector<8xf32>
    %133 = vector.multi_reduction <add>, %132, %cst_51 [1] : vector<8x8xf32> to vector<8xf32>
    %134 = vector.shape_cast %133 : vector<8xf32> to vector<8x1xf32>
    %135 = vector.broadcast %134 : vector<8x1xf32> to vector<8x8xf32>
    %136 = arith.divf %132, %135 : vector<8x8xf32>
    %c1_52 = arith.constant 1 : index
    %c0_53 = arith.constant 0 : index
    %c0_54 = arith.constant 0 : index
    %c0_55 = arith.constant 0 : index
    %137 = vector.load %arg18[%c1_52, %c0_53, %c0_54, %c0_55] : memref<2x4x8x8xf32, #tpu.memory_space<vmem>>, vector<1x1x8x8xf32>
    %138 = vector.shape_cast %137 : vector<1x1x8x8xf32> to vector<8x8xf32>
    %139 = vector.shape_cast %136 : vector<8x8xf32> to vector<1x1x8x8xf32>
    tpu.vector_store %arg18[%c1_52, %c0_53, %c0_54, %c0_55], %139 {strides = array<i32>} : memref<2x4x8x8xf32, #tpu.memory_space<vmem>>, vector<1x1x8x8xf32>,
    %cst_56 = arith.constant dense<0.000000e+00> : vector<8x8xf32>
    %140 = tpu.matmul %136, %125, %cst_56 {dimension_numbers = #tpu.dot_dimension_numbers<[1], [0], [0], [1], [0, 0, 1, 1], [], []>, precision = #tpu.contract_precision<fp32>} : vector<8x8xf32>, vector<8x8xf32>, vector<8x8xf32> -> vector<8x8xf32>
    %141 = vector.extract_strided_slice %120 {offsets = [0, 8], sizes = [8, 8], strides = [1, 1]} : vector<8x32xf32> to vector<8x8xf32>
    %142 = vector.extract_strided_slice %121 {offsets = [0, 8], sizes = [8, 8], strides = [1, 1]} : vector<8x32xf32> to vector<8x8xf32>
    %143 = vector.extract_strided_slice %122 {offsets = [0, 8], sizes = [8, 8], strides = [1, 1]} : vector<8x32xf32> to vector<8x8xf32>
    %cst_57 = arith.constant dense<0.000000e+00> : vector<8x8xf32>
    %144 = tpu.matmul %141, %142, %cst_57 {dimension_numbers = #tpu.dot_dimension_numbers<[1], [1], [0], [0], [0, 0, 1, 0], [], []>, precision = #tpu.contract_precision<fp32>} : vector<8x8xf32>, vector<8x8xf32>, vector<8x8xf32> -> vector<8x8xf32>
    %145 = arith.addf %144, %43 : vector<8x8xf32>
    %cst_58 = arith.constant dense<0xFF800000> : vector<8xf32>
    %146 = vector.multi_reduction <maximumf>, %145, %cst_58 [1] : vector<8x8xf32> to vector<8xf32>
    %147 = vector.shape_cast %146 : vector<8xf32> to vector<8x1xf32>
    %148 = vector.broadcast %147 : vector<8x1xf32> to vector<8x8xf32>
    %149 = arith.subf %145, %148 : vector<8x8xf32>
    %150 = math.exp %149 : vector<8x8xf32>
    %cst_59 = arith.constant dense<0.000000e+00> : vector<8xf32>
    %151 = vector.multi_reduction <add>, %150, %cst_59 [1] : vector<8x8xf32> to vector<8xf32>
    %152 = vector.shape_cast %151 : vector<8xf32> to vector<8x1xf32>
    %153 = vector.broadcast %152 : vector<8x1xf32> to vector<8x8xf32>
    %154 = arith.divf %150, %153 : vector<8x8xf32>
    %c1_60 = arith.constant 1 : index
    %c1_61 = arith.constant 1 : index
    %c0_62 = arith.constant 0 : index
    %c0_63 = arith.constant 0 : index
    %155 = vector.load %arg18[%c1_60, %c1_61, %c0_62, %c0_63] : memref<2x4x8x8xf32, #tpu.memory_space<vmem>>, vector<1x1x8x8xf32>
    %156 = vector.shape_cast %155 : vector<1x1x8x8xf32> to vector<8x8xf32>
    %157 = vector.shape_cast %154 : vector<8x8xf32> to vector<1x1x8x8xf32>
    tpu.vector_store %arg18[%c1_60, %c1_61, %c0_62, %c0_63], %157 {strides = array<i32>} : memref<2x4x8x8xf32, #tpu.memory_space<vmem>>, vector<1x1x8x8xf32>,
    %cst_64 = arith.constant dense<0.000000e+00> : vector<8x8xf32>
    %158 = tpu.matmul %154, %143, %cst_64 {dimension_numbers = #tpu.dot_dimension_numbers<[1], [0], [0], [1], [0, 0, 1, 1], [], []>, precision = #tpu.contract_precision<fp32>} : vector<8x8xf32>, vector<8x8xf32>, vector<8x8xf32> -> vector<8x8xf32>
    %159 = vector.extract_strided_slice %120 {offsets = [0, 16], sizes = [8, 8], strides = [1, 1]} : vector<8x32xf32> to vector<8x8xf32>
    %160 = vector.extract_strided_slice %121 {offsets = [0, 16], sizes = [8, 8], strides = [1, 1]} : vector<8x32xf32> to vector<8x8xf32>
    %161 = vector.extract_strided_slice %122 {offsets = [0, 16], sizes = [8, 8], strides = [1, 1]} : vector<8x32xf32> to vector<8x8xf32>
    %cst_65 = arith.constant dense<0.000000e+00> : vector<8x8xf32>
    %162 = tpu.matmul %159, %160, %cst_65 {dimension_numbers = #tpu.dot_dimension_numbers<[1], [1], [0], [0], [0, 0, 1, 0], [], []>, precision = #tpu.contract_precision<fp32>} : vector<8x8xf32>, vector<8x8xf32>, vector<8x8xf32> -> vector<8x8xf32>
    %163 = arith.addf %162, %43 : vector<8x8xf32>
    %cst_66 = arith.constant dense<0xFF800000> : vector<8xf32>
    %164 = vector.multi_reduction <maximumf>, %163, %cst_66 [1] : vector<8x8xf32> to vector<8xf32>
    %165 = vector.shape_cast %164 : vector<8xf32> to vector<8x1xf32>
    %166 = vector.broadcast %165 : vector<8x1xf32> to vector<8x8xf32>
    %167 = arith.subf %163, %166 : vector<8x8xf32>
    %168 = math.exp %167 : vector<8x8xf32>
    %cst_67 = arith.constant dense<0.000000e+00> : vector<8xf32>
    %169 = vector.multi_reduction <add>, %168, %cst_67 [1] : vector<8x8xf32> to vector<8xf32>
    %170 = vector.shape_cast %169 : vector<8xf32> to vector<8x1xf32>
    %171 = vector.broadcast %170 : vector<8x1xf32> to vector<8x8xf32>
    %172 = arith.divf %168, %171 : vector<8x8xf32>
    %c1_68 = arith.constant 1 : index
    %c2_69 = arith.constant 2 : index
    %c0_70 = arith.constant 0 : index
    %c0_71 = arith.constant 0 : index
    %173 = vector.load %arg18[%c1_68, %c2_69, %c0_70, %c0_71] : memref<2x4x8x8xf32, #tpu.memory_space<vmem>>, vector<1x1x8x8xf32>
    %174 = vector.shape_cast %173 : vector<1x1x8x8xf32> to vector<8x8xf32>
    %175 = vector.shape_cast %172 : vector<8x8xf32> to vector<1x1x8x8xf32>
    tpu.vector_store %arg18[%c1_68, %c2_69, %c0_70, %c0_71], %175 {strides = array<i32>} : memref<2x4x8x8xf32, #tpu.memory_space<vmem>>, vector<1x1x8x8xf32>,
    %cst_72 = arith.constant dense<0.000000e+00> : vector<8x8xf32>
    %176 = tpu.matmul %172, %161, %cst_72 {dimension_numbers = #tpu.dot_dimension_numbers<[1], [0], [0], [1], [0, 0, 1, 1], [], []>, precision = #tpu.contract_precision<fp32>} : vector<8x8xf32>, vector<8x8xf32>, vector<8x8xf32> -> vector<8x8xf32>
    %177 = vector.extract_strided_slice %120 {offsets = [0, 24], sizes = [8, 8], strides = [1, 1]} : vector<8x32xf32> to vector<8x8xf32>
    %178 = vector.extract_strided_slice %121 {offsets = [0, 24], sizes = [8, 8], strides = [1, 1]} : vector<8x32xf32> to vector<8x8xf32>
    %179 = vector.extract_strided_slice %122 {offsets = [0, 24], sizes = [8, 8], strides = [1, 1]} : vector<8x32xf32> to vector<8x8xf32>
    %cst_73 = arith.constant dense<0.000000e+00> : vector<8x8xf32>
    %180 = tpu.matmul %177, %178, %cst_73 {dimension_numbers = #tpu.dot_dimension_numbers<[1], [1], [0], [0], [0, 0, 1, 0], [], []>, precision = #tpu.contract_precision<fp32>} : vector<8x8xf32>, vector<8x8xf32>, vector<8x8xf32> -> vector<8x8xf32>
    %181 = arith.addf %180, %43 : vector<8x8xf32>
    %cst_74 = arith.constant dense<0xFF800000> : vector<8xf32>
    %182 = vector.multi_reduction <maximumf>, %181, %cst_74 [1] : vector<8x8xf32> to vector<8xf32>
    %183 = vector.shape_cast %182 : vector<8xf32> to vector<8x1xf32>
    %184 = vector.broadcast %183 : vector<8x1xf32> to vector<8x8xf32>
    %185 = arith.subf %181, %184 : vector<8x8xf32>
    %186 = math.exp %185 : vector<8x8xf32>
    %cst_75 = arith.constant dense<0.000000e+00> : vector<8xf32>
    %187 = vector.multi_reduction <add>, %186, %cst_75 [1] : vector<8x8xf32> to vector<8xf32>
    %188 = vector.shape_cast %187 : vector<8xf32> to vector<8x1xf32>
    %189 = vector.broadcast %188 : vector<8x1xf32> to vector<8x8xf32>
    %190 = arith.divf %186, %189 : vector<8x8xf32>
    %c1_76 = arith.constant 1 : index
    %c3_77 = arith.constant 3 : index
    %c0_78 = arith.constant 0 : index
    %c0_79 = arith.constant 0 : index
    %191 = vector.load %arg18[%c1_76, %c3_77, %c0_78, %c0_79] : memref<2x4x8x8xf32, #tpu.memory_space<vmem>>, vector<1x1x8x8xf32>
    %192 = vector.shape_cast %191 : vector<1x1x8x8xf32> to vector<8x8xf32>
    %193 = vector.shape_cast %190 : vector<8x8xf32> to vector<1x1x8x8xf32>
    tpu.vector_store %arg18[%c1_76, %c3_77, %c0_78, %c0_79], %193 {strides = array<i32>} : memref<2x4x8x8xf32, #tpu.memory_space<vmem>>, vector<1x1x8x8xf32>,
    %cst_80 = arith.constant dense<0.000000e+00> : vector<8x8xf32>
    %194 = tpu.matmul %190, %179, %cst_80 {dimension_numbers = #tpu.dot_dimension_numbers<[1], [0], [0], [1], [0, 0, 1, 1], [], []>, precision = #tpu.contract_precision<fp32>} : vector<8x8xf32>, vector<8x8xf32>, vector<8x8xf32> -> vector<8x8xf32>
    %195 = tpu.concatenate %140, %158, %176, %194 in 1 : vector<8x8xf32>, vector<8x8xf32>, vector<8x8xf32>, vector<8x8xf32> -> vector<8x32xf32>
    %196 = tpu.concatenate %119, %195 in 0 : vector<8x32xf32>, vector<8x32xf32> -> vector<16x32xf32>
    %c0_81 = arith.constant 0 : index
    %c0_82 = arith.constant 0 : index
    %197 = vector.load %arg7[%c0_81, %c0_82] : memref<32x32xf32, #tpu.memory_space<vmem>>, vector<32x32xf32>
    %cst_83 = arith.constant dense<0.000000e+00> : vector<16x32xf32>
    %198 = tpu.matmul %196, %197, %cst_83 {dimension_numbers = #tpu.dot_dimension_numbers<[1], [0], [0], [1], [0, 0, 1, 1], [], []>, precision = #tpu.contract_precision<fp32>} : vector<16x32xf32>, vector<32x32xf32>, vector<16x32xf32> -> vector<16x32xf32>
    %c0_84 = arith.constant 0 : index
    %c0_85 = arith.constant 0 : index
    %199 = vector.load %arg8[%c0_84, %c0_85] : memref<1x32xf32, #tpu.memory_space<vmem>>, vector<1x32xf32>
    %200 = vector.broadcast %199 : vector<1x32xf32> to vector<16x32xf32>
    %201 = arith.addf %198, %200 : vector<16x32xf32>
    %202 = arith.addf %33, %201 : vector<16x32xf32>
    %cst_86 = arith.constant dense<0.000000e+00> : vector<16xf32>
    %203 = vector.multi_reduction <add>, %202, %cst_86 [1] : vector<16x32xf32> to vector<16xf32>
    %204 = vector.shape_cast %203 : vector<16xf32> to vector<16x1xf32>
    %cst_87 = arith.constant 3.200000e+01 : f32
    %205 = vector.broadcast %cst_87 : f32 to vector<16x1xf32>
    %206 = arith.divf %204, %205 : vector<16x1xf32>
    %207 = vector.broadcast %206 : vector<16x1xf32> to vector<16x32xf32>
    %208 = arith.subf %202, %207 : vector<16x32xf32>
    %209 = arith.mulf %208, %208 : vector<16x32xf32>
    %cst_88 = arith.constant dense<0.000000e+00> : vector<16xf32>
    %210 = vector.multi_reduction <add>, %209, %cst_88 [1] : vector<16x32xf32> to vector<16xf32>
    %211 = vector.shape_cast %210 : vector<16xf32> to vector<16x1xf32>
    %cst_89 = arith.constant 3.200000e+01 : f32
    %212 = vector.broadcast %cst_89 : f32 to vector<16x1xf32>
    %213 = arith.divf %211, %212 : vector<16x1xf32>
    %214 = vector.broadcast %206 : vector<16x1xf32> to vector<16x32xf32>
    %215 = arith.subf %202, %214 : vector<16x32xf32>
    %cst_90 = arith.constant 9.99999974E-6 : f32
    %216 = vector.broadcast %cst_90 : f32 to vector<16x1xf32>
    %217 = arith.addf %213, %216 : vector<16x1xf32>
    %218 = math.rsqrt %217 : vector<16x1xf32>
    %219 = vector.broadcast %218 : vector<16x1xf32> to vector<16x32xf32>
    %220 = arith.mulf %215, %219 : vector<16x32xf32>
    %c0_91 = arith.constant 0 : index
    %c0_92 = arith.constant 0 : index
    %221 = vector.load %arg9[%c0_91, %c0_92] : memref<1x32xf32, #tpu.memory_space<vmem>>, vector<1x32xf32>
    %222 = vector.broadcast %221 : vector<1x32xf32> to vector<16x32xf32>
    %223 = arith.mulf %220, %222 : vector<16x32xf32>
    %c0_93 = arith.constant 0 : index
    %c0_94 = arith.constant 0 : index
    %224 = vector.load %arg10[%c0_93, %c0_94] : memref<1x32xf32, #tpu.memory_space<vmem>>, vector<1x32xf32>
    %225 = vector.broadcast %224 : vector<1x32xf32> to vector<16x32xf32>
    %226 = arith.addf %223, %225 : vector<16x32xf32>
    %c0_95 = arith.constant 0 : index
    %c0_96 = arith.constant 0 : index
    %227 = vector.load %arg11[%c0_95, %c0_96] : memref<32x128xf32, #tpu.memory_space<vmem>>, vector<32x128xf32>
    %cst_97 = arith.constant dense<0.000000e+00> : vector<16x128xf32>
    %228 = tpu.matmul %226, %227, %cst_97 {dimension_numbers = #tpu.dot_dimension_numbers<[1], [0], [0], [1], [0, 0, 1, 1], [], []>, precision = #tpu.contract_precision<fp32>} : vector<16x32xf32>, vector<32x128xf32>, vector<16x128xf32> -> vector<16x128xf32>
    %c0_98 = arith.constant 0 : index
    %c0_99 = arith.constant 0 : index
    %229 = vector.load %arg12[%c0_98, %c0_99] : memref<1x128xf32, #tpu.memory_space<vmem>>, vector<1x128xf32>
    %230 = vector.broadcast %229 : vector<1x128xf32> to vector<16x128xf32>
    %231 = arith.addf %228, %230 : vector<16x128xf32>
    %cst_100 = arith.constant 5.000000e-01 : f32
    %232 = vector.broadcast %cst_100 : f32 to vector<16x128xf32>
    %233 = arith.mulf %232, %231 : vector<16x128xf32>
    %cst_101 = arith.constant 4.471500e-02 : f32
    %234 = vector.broadcast %cst_101 : f32 to vector<16x128xf32>
    %235 = arith.mulf %234, %231 : vector<16x128xf32>
    %236 = arith.mulf %235, %231 : vector<16x128xf32>
    %237 = arith.mulf %236, %231 : vector<16x128xf32>
    %238 = arith.addf %231, %237 : vector<16x128xf32>
    %cst_102 = arith.constant 0.797884583 : f32
    %239 = vector.broadcast %cst_102 : f32 to vector<16x128xf32>
    %240 = arith.mulf %239, %238 : vector<16x128xf32>
    %241 = math.tanh %240 : vector<16x128xf32>
    %cst_103 = arith.constant 1.000000e+00 : f32
    %242 = vector.broadcast %cst_103 : f32 to vector<16x128xf32>
    %243 = arith.addf %242, %241 : vector<16x128xf32>
    %244 = arith.mulf %233, %243 : vector<16x128xf32>
    %c0_104 = arith.constant 0 : index
    %c0_105 = arith.constant 0 : index
    %245 = vector.load %arg13[%c0_104, %c0_105] : memref<128x64xf32, #tpu.memory_space<vmem>>, vector<128x64xf32>
    %cst_106 = arith.constant dense<0.000000e+00> : vector<16x64xf32>
    %246 = tpu.matmul %244, %245, %cst_106 {dimension_numbers = #tpu.dot_dimension_numbers<[1], [0], [0], [1], [0, 0, 1, 1], [], []>, precision = #tpu.contract_precision<fp32>} : vector<16x128xf32>, vector<128x64xf32>, vector<16x64xf32> -> vector<16x64xf32>
    %c0_107 = arith.constant 0 : index
    %c0_108 = arith.constant 0 : index
    %247 = vector.load %arg14[%c0_107, %c0_108] : memref<1x64xf32, #tpu.memory_space<vmem>>, vector<1x64xf32>
    %248 = vector.broadcast %247 : vector<1x64xf32> to vector<16x64xf32>
    %249 = arith.addf %246, %248 : vector<16x64xf32>
    %cst_109 = arith.constant 5.000000e-01 : f32
    %250 = vector.broadcast %cst_109 : f32 to vector<16x64xf32>
    %251 = arith.mulf %250, %249 : vector<16x64xf32>
    %cst_110 = arith.constant 4.471500e-02 : f32
    %252 = vector.broadcast %cst_110 : f32 to vector<16x64xf32>
    %253 = arith.mulf %252, %249 : vector<16x64xf32>
    %254 = arith.mulf %253, %249 : vector<16x64xf32>
    %255 = arith.mulf %254, %249 : vector<16x64xf32>
    %256 = arith.addf %249, %255 : vector<16x64xf32>
    %cst_111 = arith.constant 0.797884583 : f32
    %257 = vector.broadcast %cst_111 : f32 to vector<16x64xf32>
    %258 = arith.mulf %257, %256 : vector<16x64xf32>
    %259 = math.tanh %258 : vector<16x64xf32>
    %cst_112 = arith.constant 1.000000e+00 : f32
    %260 = vector.broadcast %cst_112 : f32 to vector<16x64xf32>
    %261 = arith.addf %260, %259 : vector<16x64xf32>
    %262 = arith.mulf %251, %261 : vector<16x64xf32>
    %c0_113 = arith.constant 0 : index
    %c0_114 = arith.constant 0 : index
    %263 = vector.load %arg15[%c0_113, %c0_114] : memref<64x32xf32, #tpu.memory_space<vmem>>, vector<64x32xf32>
    %cst_115 = arith.constant dense<0.000000e+00> : vector<16x32xf32>
    %264 = tpu.matmul %262, %263, %cst_115 {dimension_numbers = #tpu.dot_dimension_numbers<[1], [0], [0], [1], [0, 0, 1, 1], [], []>, precision = #tpu.contract_precision<fp32>} : vector<16x64xf32>, vector<64x32xf32>, vector<16x32xf32> -> vector<16x32xf32>
    %c0_116 = arith.constant 0 : index
    %c0_117 = arith.constant 0 : index
    %265 = vector.load %arg16[%c0_116, %c0_117] : memref<1x32xf32, #tpu.memory_space<vmem>>, vector<1x32xf32>
    %266 = vector.broadcast %265 : vector<1x32xf32> to vector<16x32xf32>
    %267 = arith.addf %264, %266 : vector<16x32xf32>
    %268 = arith.addf %202, %267 : vector<16x32xf32>
    %269 = vector.shape_cast %268 : vector<16x32xf32> to vector<2x8x32xf32>
    %c0_118 = arith.constant 0 : index
    %c0_119 = arith.constant 0 : index
    %c0_120 = arith.constant 0 : index
    %270 = vector.load %arg17[%c0_118, %c0_119, %c0_120] : memref<2x8x32xf32, #tpu.memory_space<vmem>>, vector<2x8x32xf32>
    tpu.vector_store %arg17[%c0_118, %c0_119, %c0_120], %269 {strides = array<i32>} : memref<2x8x32xf32, #tpu.memory_space<vmem>>, vector<2x8x32xf32>,
    return
  }
  func.func @transform_0(%arg0: i32) -> (i32, i32, i32) {
    %c0_i32 = arith.constant 0 : i32
    %c0_i32_0 = arith.constant 0 : i32
    %c0_i32_1 = arith.constant 0 : i32
    return %arg0, %c0_i32, %c0_i32_0 : i32, i32, i32
  }
  func.func @transform_1(%arg0: i32) -> (i32, i32) {
    %c0_i32 = arith.constant 0 : i32
    %c0_i32_0 = arith.constant 0 : i32
    %c0_i32_1 = arith.constant 0 : i32
    return %c0_i32, %c0_i32_0 : i32, i32
  }
  func.func @transform_2(%arg0: i32) -> (i32, i32) {
    %c0_i32 = arith.constant 0 : i32
    %c0_i32_0 = arith.constant 0 : i32
    %c0_i32_1 = arith.constant 0 : i32
    return %c0_i32, %c0_i32_0 : i32, i32
  }
  func.func @transform_3(%arg0: i32) -> (i32, i32) {
    %c0_i32 = arith.constant 0 : i32
    %c0_i32_0 = arith.constant 0 : i32
    %c0_i32_1 = arith.constant 0 : i32
    return %c0_i32, %c0_i32_0 : i32, i32
  }
  func.func @transform_4(%arg0: i32) -> (i32, i32) {
    %c0_i32 = arith.constant 0 : i32
    %c0_i32_0 = arith.constant 0 : i32
    %c0_i32_1 = arith.constant 0 : i32
    return %c0_i32, %c0_i32_0 : i32, i32
  }
  func.func @transform_5(%arg0: i32) -> (i32, i32) {
    %c0_i32 = arith.constant 0 : i32
    %c0_i32_0 = arith.constant 0 : i32
    %c0_i32_1 = arith.constant 0 : i32
    return %c0_i32, %c0_i32_0 : i32, i32
  }
  func.func @transform_6(%arg0: i32) -> (i32, i32) {
    %c0_i32 = arith.constant 0 : i32
    %c0_i32_0 = arith.constant 0 : i32
    %c0_i32_1 = arith.constant 0 : i32
    return %c0_i32, %c0_i32_0 : i32, i32
  }
  func.func @transform_7(%arg0: i32) -> (i32, i32) {
    %c0_i32 = arith.constant 0 : i32
    %c0_i32_0 = arith.constant 0 : i32
    %c0_i32_1 = arith.constant 0 : i32
    return %c0_i32, %c0_i32_0 : i32, i32
  }
  func.func @transform_8(%arg0: i32) -> (i32, i32) {
    %c0_i32 = arith.constant 0 : i32
    %c0_i32_0 = arith.constant 0 : i32
    %c0_i32_1 = arith.constant 0 : i32
    return %c0_i32, %c0_i32_0 : i32, i32
  }
  func.func @transform_9(%arg0: i32) -> (i32, i32) {
    %c0_i32 = arith.constant 0 : i32
    %c0_i32_0 = arith.constant 0 : i32
    %c0_i32_1 = arith.constant 0 : i32
    return %c0_i32, %c0_i32_0 : i32, i32
  }
  func.func @transform_10(%arg0: i32) -> (i32, i32) {
    %c0_i32 = arith.constant 0 : i32
    %c0_i32_0 = arith.constant 0 : i32
    %c0_i32_1 = arith.constant 0 : i32
    return %c0_i32, %c0_i32_0 : i32, i32
  }
  func.func @transform_11(%arg0: i32) -> (i32, i32) {
    %c0_i32 = arith.constant 0 : i32
    %c0_i32_0 = arith.constant 0 : i32
    %c0_i32_1 = arith.constant 0 : i32
    return %c0_i32, %c0_i32_0 : i32, i32
  }
  func.func @transform_12(%arg0: i32) -> (i32, i32) {
    %c0_i32 = arith.constant 0 : i32
    %c0_i32_0 = arith.constant 0 : i32
    %c0_i32_1 = arith.constant 0 : i32
    return %c0_i32, %c0_i32_0 : i32, i32
  }
  func.func @transform_13(%arg0: i32) -> (i32, i32) {
    %c0_i32 = arith.constant 0 : i32
    %c0_i32_0 = arith.constant 0 : i32
    %c0_i32_1 = arith.constant 0 : i32
    return %c0_i32, %c0_i32_0 : i32, i32
  }
  func.func @transform_14(%arg0: i32) -> (i32, i32) {
    %c0_i32 = arith.constant 0 : i32
    %c0_i32_0 = arith.constant 0 : i32
    %c0_i32_1 = arith.constant 0 : i32
    return %c0_i32, %c0_i32_0 : i32, i32
  }
  func.func @transform_15(%arg0: i32) -> (i32, i32) {
    %c0_i32 = arith.constant 0 : i32
    %c0_i32_0 = arith.constant 0 : i32
    %c0_i32_1 = arith.constant 0 : i32
    return %c0_i32, %c0_i32_0 : i32, i32
  }
  func.func @transform_16(%arg0: i32) -> (i32, i32, i32) {
    %c0_i32 = arith.constant 0 : i32
    %c0_i32_0 = arith.constant 0 : i32
    %c0_i32_1 = arith.constant 0 : i32
    return %arg0, %c0_i32, %c0_i32_0 : i32, i32, i32
  }
  func.func @transform_17(%arg0: i32) -> (i32, i32, i32, i32) {
    %c0_i32 = arith.constant 0 : i32
    %c0_i32_0 = arith.constant 0 : i32
    %c0_i32_1 = arith.constant 0 : i32
    %c0_i32_2 = arith.constant 0 : i32
    return %arg0, %c0_i32, %c0_i32_0, %c0_i32_1 : i32, i32, i32, i32
  }
}

</mosaic_0001>

<llo_original>
// kernel: tpu_custom_call.1
$region0: #{tpu_custom_call.1}
  #allocation0 [shape = 'u32[]', space=smem, size = 0x4, offset = 0x4, fixed_abs, tag = 'smem constant byte address 0x4 - core index']
  #allocation1 [shape = 'u32[72,128]{1,0:T(1,128)}', space=vmem, size = 0x9000, scoped, tag = 'internal scratch']
  %s0 = inlined_call_operand.vmem [shape: f32[2,8,32], index: 0, kind: input, shape index: {}]
  %s1 = inlined_call_operand.vmem [shape: f32[8,32], index: 1, kind: input, shape index: {}]
  %s2 = inlined_call_operand.vmem [shape: f32[1,32], index: 2, kind: input, shape index: {}]
  %s3 = inlined_call_operand.vmem [shape: f32[1,32], index: 3, kind: input, shape index: {}]
  %s4 = inlined_call_operand.vmem [shape: f32[32,64], index: 4, kind: input, shape index: {}]
  %s5 = inlined_call_operand.vmem [shape: f32[32,32], index: 5, kind: input, shape index: {}]
  %s6 = inlined_call_operand.vmem [shape: f32[32,32], index: 6, kind: input, shape index: {}]
  %s7 = inlined_call_operand.vmem [shape: f32[1,32], index: 7, kind: input, shape index: {}]
  %s8 = inlined_call_operand.vmem [shape: f32[1,32], index: 8, kind: input, shape index: {}]
  %s9 = inlined_call_operand.vmem [shape: f32[1,32], index: 9, kind: input, shape index: {}]
  %s10 = inlined_call_operand.vmem [shape: f32[32,128], index: 10, kind: input, shape index: {}]
  %s11 = inlined_call_operand.vmem [shape: f32[1,128], index: 11, kind: input, shape index: {}]
  %s12 = inlined_call_operand.vmem [shape: f32[128,64], index: 12, kind: input, shape index: {}]
  %s13 = inlined_call_operand.vmem [shape: f32[1,64], index: 13, kind: input, shape index: {}]
  %s14 = inlined_call_operand.vmem [shape: f32[64,32], index: 14, kind: input, shape index: {}]
  %s15 = inlined_call_operand.vmem [shape: f32[1,32], index: 15, kind: input, shape index: {}]
  %s16 = inlined_call_operand.hbm [shape: f32[2,8,32], index: 16, kind: output, shape index: {0}]
  %s17 = inlined_call_operand.hbm [shape: f32[2,4,8,8], index: 17, kind: output, shape index: {1}]
  %18 = xla_tuple %s16, %s17
  %s19 = sld [smem:[#allocation0]]
  $region82: #{tpu_custom_call.1} parent=0
    _
  %s21 = ssub.s32 1, %s19
  %s22 = scalar_select 0, %s21, %s19
  $region1: #{tpu_custom_call.1} parent=0
    #allocation2 [shape = 'u8[8192]{0}', space=vmem, size = 0x2000, scoped, tag = 'output window, operand 0, single buffered']
    #allocation3 [shape = 's32[1]{0}', space=sflag, size = 0x4, scoped, tag = 'scoped memory for tpu_custom_call.1']
    #allocation4 [shape = 'u8[32768]{0}', space=vmem, size = 0x8000, scoped, tag = 'output window, operand 1, single buffered']
    #allocation5 [shape = 's32[1]{0}', space=sflag, size = 0x4, scoped, tag = 'scoped memory for tpu_custom_call.1']
    %23 = vsyncpa [#allocation3], 0
    %24 = vsyncpa [#allocation5], 0
    // Predicated region
    $region2: #{tpu_custom_call.1} parent=1 // pred_check
      _
    $region3: #{tpu_custom_call.1} parent=1 // pred_check_branch
      %26 = sbr.rel (0) target = $region5
    $region4: #{tpu_custom_call.1} parent=1 // pred_region
      _
    $region5: #{tpu_custom_call.1} parent=1 // pred_fallthru
      _
    // Predicated region
    $region6: #{tpu_custom_call.1} parent=1 // pred_check
      _
    $region7: #{tpu_custom_call.1} parent=1 // pred_check_branch
      %28 = sbr.rel (0) target = $region9
    $region8: #{tpu_custom_call.1} parent=1 // pred_region
      _
    $region9: #{tpu_custom_call.1} parent=1 // pred_fallthru
      _
    // Predicated region
    $region10: #{tpu_custom_call.1} parent=1 // pred_check
      _
    $region11: #{tpu_custom_call.1} parent=1 // pred_check_branch
      %30 = sbr.rel (0) target = $region13
    $region12: #{tpu_custom_call.1} parent=1 // pred_region
      _
    $region13: #{tpu_custom_call.1} parent=1 // pred_fallthru
      _
    // Predicated region
    $region14: #{tpu_custom_call.1} parent=1 // pred_check
      _
    $region15: #{tpu_custom_call.1} parent=1 // pred_check_branch
      %32 = sbr.rel (0) target = $region17
    $region16: #{tpu_custom_call.1} parent=1 // pred_region
      _
    $region17: #{tpu_custom_call.1} parent=1 // pred_fallthru
      _
    // Predicated region
    $region18: #{tpu_custom_call.1} parent=1 // pred_check
      _
    $region19: #{tpu_custom_call.1} parent=1 // pred_check_branch
      %34 = sbr.rel (0) target = $region21
    $region20: #{tpu_custom_call.1} parent=1 // pred_region
      _
    $region21: #{tpu_custom_call.1} parent=1 // pred_fallthru
      _
    // Predicated region
    $region22: #{tpu_custom_call.1} parent=1 // pred_check
      _
    $region23: #{tpu_custom_call.1} parent=1 // pred_check_branch
      %36 = sbr.rel (0) target = $region25
    $region24: #{tpu_custom_call.1} parent=1 // pred_region
      _
    $region25: #{tpu_custom_call.1} parent=1 // pred_fallthru
      _
    // Predicated region
    $region26: #{tpu_custom_call.1} parent=1 // pred_check
      _
    $region27: #{tpu_custom_call.1} parent=1 // pred_check_branch
      %38 = sbr.rel (0) target = $region29
    $region28: #{tpu_custom_call.1} parent=1 // pred_region
      _
    $region29: #{tpu_custom_call.1} parent=1 // pred_fallthru
      _
    // Predicated region
    $region30: #{tpu_custom_call.1} parent=1 // pred_check
      _
    $region31: #{tpu_custom_call.1} parent=1 // pred_check_branch
      %40 = sbr.rel (0) target = $region33
    $region32: #{tpu_custom_call.1} parent=1 // pred_region
      _
    $region33: #{tpu_custom_call.1} parent=1 // pred_fallthru
      _
    // Predicated region
    $region34: #{tpu_custom_call.1} parent=1 // pred_check
      _
    $region35: #{tpu_custom_call.1} parent=1 // pred_check_branch
      %42 = sbr.rel (0) target = $region37
    $region36: #{tpu_custom_call.1} parent=1 // pred_region
      _
    $region37: #{tpu_custom_call.1} parent=1 // pred_fallthru
      _
    // Predicated region
    $region38: #{tpu_custom_call.1} parent=1 // pred_check
      _
    $region39: #{tpu_custom_call.1} parent=1 // pred_check_branch
      %44 = sbr.rel (0) target = $region41
    $region40: #{tpu_custom_call.1} parent=1 // pred_region
      _
    $region41: #{tpu_custom_call.1} parent=1 // pred_fallthru
      _
    // Predicated region
    $region42: #{tpu_custom_call.1} parent=1 // pred_check
      _
    $region43: #{tpu_custom_call.1} parent=1 // pred_check_branch
      %46 = sbr.rel (0) target = $region45
    $region44: #{tpu_custom_call.1} parent=1 // pred_region
      _
    $region45: #{tpu_custom_call.1} parent=1 // pred_fallthru
      _
    // Predicated region
    $region46: #{tpu_custom_call.1} parent=1 // pred_check
      _
    $region47: #{tpu_custom_call.1} parent=1 // pred_check_branch
      %48 = sbr.rel (0) target = $region49
    $region48: #{tpu_custom_call.1} parent=1 // pred_region
      _
    $region49: #{tpu_custom_call.1} parent=1 // pred_fallthru
      _
    // Predicated region
    $region50: #{tpu_custom_call.1} parent=1 // pred_check
      _
    $region51: #{tpu_custom_call.1} parent=1 // pred_check_branch
      %50 = sbr.rel (0) target = $region53
    $region52: #{tpu_custom_call.1} parent=1 // pred_region
      _
    $region53: #{tpu_custom_call.1} parent=1 // pred_fallthru
      _
    // Predicated region
    $region54: #{tpu_custom_call.1} parent=1 // pred_check
      _
    $region55: #{tpu_custom_call.1} parent=1 // pred_check_branch
      %52 = sbr.rel (0) target = $region57
    $region56: #{tpu_custom_call.1} parent=1 // pred_region
      _
    $region57: #{tpu_custom_call.1} parent=1 // pred_fallthru
      _
    // Predicated region
    $region58: #{tpu_custom_call.1} parent=1 // pred_check
      _
    $region59: #{tpu_custom_call.1} parent=1 // pred_check_branch
      %54 = sbr.rel (0) target = $region61
    $region60: #{tpu_custom_call.1} parent=1 // pred_region
      _
    $region61: #{tpu_custom_call.1} parent=1 // pred_fallthru
      _
    // Predicated region
    $region62: #{tpu_custom_call.1} parent=1 // pred_check
      _
    $region63: #{tpu_custom_call.1} parent=1 // pred_check_branch
      %56 = sbr.rel (0) target = $region65
    $region64: #{tpu_custom_call.1} parent=1 // pred_region
      _
    $region65: #{tpu_custom_call.1} parent=1 // pred_fallthru
      _
    %v57 = vld [vmem:[%s0] sm:$0xff]
    %v58 = vld [vmem:[%s0 + $0x8] sm:$0xff]
    %v59 = vld [vmem:[%s1] sm:$0xff]
    %vm60 = vcmask 261120
    %v61 = vsel %vm60, %v57, 0.0
    %62 = vadd.xlane.f32.xlu0 %v61
    %v63 = vpop.xlane.xlu0 %62
    %v64 = vsel %vm60, %v58, 0.0
    %65 = vadd.xlane.f32.xlu0 %v64
    %v66 = vpop.xlane.xlu0 %65
    %v67 = vrcp.pop 32.0
    %v68 = vmul.f32 32.0, %v67
    %v69 = vsub.f32 1.0, %v68
    %v70 = vmul.f32 %v67, %v69
    %v71 = vadd.f32 %v67, %v70
    %vm72 = vweird.f32 %v67
    %v73 = vsel %vm72, %v67, %v71
    %v74 = vmul.f32 %v63, %v73
    %v75 = vmul.f32 %v66, %v73
    %v76 = vsub.f32 %v57, %v74
    %v77 = vsub.f32 %v58, %v75
    %v78 = vmul.f32 %v76, %v76
    %v79 = vmul.f32 %v77, %v77
    %v80 = vsel %vm60, %v78, 0.0
    %81 = vadd.xlane.f32.xlu0 %v80
    %v82 = vpop.xlane.xlu0 %81
    %v83 = vsel %vm60, %v79, 0.0
    %84 = vadd.xlane.f32.xlu0 %v83
    %v85 = vpop.xlane.xlu0 %84
    %v86 = vmul.f32 %v82, %v73
    %v87 = vmul.f32 %v85, %v73
    %v88 = vadd.f32 %v86, 1e-05
    %v89 = vadd.f32 %v87, 1e-05
    %v90 = vrsqrt.pop %v88
    %v91 = vmul.f32 %v90, %v88
    %v92 = vmul.f32 %v91, %v90
    %v93 = vmul.f32 0.5, %v92
    %v94 = vsub.f32 1.5, %v93
    %v95 = vmul.f32 %v90, %v94
    %vm96 = vweird.f32 %v88
    %vm97 = vweird.f32 %v90
    %vm98 = vmor %vm96, %vm97
    %v99 = vsel %vm98, %v90, %v95
    %v100 = vrsqrt.pop %v89
    %v101 = vmul.f32 %v100, %v89
    %v102 = vmul.f32 %v101, %v100
    %v103 = vmul.f32 0.5, %v102
    %v104 = vsub.f32 1.5, %v103
    %v105 = vmul.f32 %v100, %v104
    %vm106 = vweird.f32 %v89
    %vm107 = vweird.f32 %v100
    %vm108 = vmor %vm106, %vm107
    %v109 = vsel %vm108, %v100, %v105
    %v110 = vmul.f32 %v76, %v99
    %v111 = vmul.f32 %v77, %v109
    %v112 = vld [vmem:[%s2] sm:$0x1]
    %v114 = vperm.slane %v112, 0
    %v116 = vmul.f32 %v110, %v114
    %v117 = vmul.f32 %v111, %v114
    %v118 = vld [vmem:[%s3] sm:$0x1]
    %v120 = vperm.slane %v118, 0
    %v122 = vadd.f32 %v116, %v120
    %v123 = vadd.f32 %v117, %v120
    %v124 = vadd.f32 %v122, %v59
    %v125 = vadd.f32 %v123, %v59
    %v126 = vld [vmem:[%s4] sm:$0xff]
    %v127 = vld [vmem:[%s4 + $0x8] sm:$0xff]
    %v128 = vld [vmem:[%s4 + $0x10] sm:$0xff]
    %v129 = vld [vmem:[%s4 + $0x18] sm:$0xff]
    %v131 = vsel %vm60, %v124, 0
    %v134 = vsel %vm60, %v125, 0
    %136 = vmatpush.msra.mxu0 0.0
    %137 = vmatpush.msra.mxu0 0.0
    %138 = vmatpush.msra.mxu0 0.0
    %139 = vmatpush.msra.mxu0 0.0
    %140 = vmatpush.msra.mxu0 0.0
    %141 = vmatpush.msra.mxu0 0.0
    %142 = vmatpush.msra.mxu0 0.0
    %143 = vmatpush.msra.mxu0 0.0
    %144 = vmatpush.msra.mxu0 0.0
    %145 = vmatpush.msra.mxu0 0.0
    %146 = vmatpush.msra.mxu0 0.0
    %147 = vmatpush.msra.mxu0 0.0
    %v148 = vand.u32 %v129, 4294901760
    %149 = vmatpush.msra.mxu0 %v148
    %v150 = vand.u32 %v128, 4294901760
    %151 = vmatpush.msra.mxu0 %v150
    %v152 = vand.u32 %v127, 4294901760
    %153 = vmatpush.msra.mxu0 %v152
    %v154 = vand.u32 %v126, 4294901760
    %155 = vmatpush.msra.mxu0 %v154
    %v156 = vand.u32 %v131, 4294901760
    %v157 = vsub.f32 %v131, %v156
    %v158 = vand.u32 %v157, 4294901760
    %v159 = vsub.f32 %v157, %v158
    %v160 = vand.u32 %v159, 4294901760
    %161 = vmatmul.f32.gmra.mxu0 %v160
    %v162 = vpop.f32.mrf.mxu0
    %v163 = vadd.f32 0.0, %v162
    %v164 = vand.u32 %v134, 4294901760
    %v165 = vsub.f32 %v134, %v164
    %v166 = vand.u32 %v165, 4294901760
    %v167 = vsub.f32 %v165, %v166
    %v168 = vand.u32 %v167, 4294901760
    %169 = vmatmul.f32.gmra.mxu0 %v168
    %v170 = vpop.f32.mrf.mxu0
    %v171 = vadd.f32 0.0, %v170
    %172 = vdwg.mxu0
    %173 = vmatpush.msra.mxu0 0.0
    %174 = vmatpush.msra.mxu0 0.0
    %175 = vmatpush.msra.mxu0 0.0
    %176 = vmatpush.msra.mxu0 0.0
    %177 = vmatpush.msra.mxu0 0.0
    %178 = vmatpush.msra.mxu0 0.0
    %179 = vmatpush.msra.mxu0 0.0
    %180 = vmatpush.msra.mxu0 0.0
    %181 = vmatpush.msra.mxu0 0.0
    %182 = vmatpush.msra.mxu0 0.0
    %183 = vmatpush.msra.mxu0 0.0
    %184 = vmatpush.msra.mxu0 0.0
    %v185 = vand.u32 %v129, 4294901760
    %v186 = vsub.f32 %v129, %v185
    %v187 = vand.u32 %v186, 4294901760
    %v188 = vsub.f32 %v186, %v187
    %v189 = vand.u32 %v188, 4294901760
    %190 = vmatpush.msra.mxu0 %v189
    %v191 = vand.u32 %v128, 4294901760
    %v192 = vsub.f32 %v128, %v191
    %v193 = vand.u32 %v192, 4294901760
    %v194 = vsub.f32 %v192, %v193
    %v195 = vand.u32 %v194, 4294901760
    %196 = vmatpush.msra.mxu0 %v195
    %v197 = vand.u32 %v127, 4294901760
    %v198 = vsub.f32 %v127, %v197
    %v199 = vand.u32 %v198, 4294901760
    %v200 = vsub.f32 %v198, %v199
    %v201 = vand.u32 %v200, 4294901760
    %202 = vmatpush.msra.mxu0 %v201
    %v203 = vand.u32 %v126, 4294901760
    %v204 = vsub.f32 %v126, %v203
    %v205 = vand.u32 %v204, 4294901760
    %v206 = vsub.f32 %v204, %v205
    %v207 = vand.u32 %v206, 4294901760
    %208 = vmatpush.msra.mxu0 %v207
    %v209 = vand.u32 %v131, 4294901760
    %210 = vmatmul.f32.gmra.mxu0 %v209
    %v211 = vpop.f32.mrf.mxu0
    %v212 = vadd.f32 %v163, %v211
    %v213 = vand.u32 %v134, 4294901760
    %214 = vmatmul.f32.gmra.mxu0 %v213
    %v215 = vpop.f32.mrf.mxu0
    %v216 = vadd.f32 %v171, %v215
    %217 = vdwg.mxu0
    %218 = vmatpush.msra.mxu0 0.0
    %219 = vmatpush.msra.mxu0 0.0
    %220 = vmatpush.msra.mxu0 0.0
    %221 = vmatpush.msra.mxu0 0.0
    %222 = vmatpush.msra.mxu0 0.0
    %223 = vmatpush.msra.mxu0 0.0
    %224 = vmatpush.msra.mxu0 0.0
    %225 = vmatpush.msra.mxu0 0.0
    %226 = vmatpush.msra.mxu0 0.0
    %227 = vmatpush.msra.mxu0 0.0
    %228 = vmatpush.msra.mxu0 0.0
    %229 = vmatpush.msra.mxu0 0.0
    %v230 = vand.u32 %v129, 4294901760
    %v231 = vsub.f32 %v129, %v230
    %232 = vmatpush.msra.mxu0 %v231
    %v233 = vand.u32 %v128, 4294901760
    %v234 = vsub.f32 %v128, %v233
    %235 = vmatpush.msra.mxu0 %v234
    %v236 = vand.u32 %v127, 4294901760
    %v237 = vsub.f32 %v127, %v236
    %238 = vmatpush.msra.mxu0 %v237
    %v239 = vand.u32 %v126, 4294901760
    %v240 = vsub.f32 %v126, %v239
    %241 = vmatpush.msra.mxu0 %v240
    %v242 = vand.u32 %v131, 4294901760
    %v243 = vsub.f32 %v131, %v242
    %244 = vmatmul.f32.gmra.mxu0 %v243
    %v245 = vpop.f32.mrf.mxu0
    %v246 = vadd.f32 %v212, %v245
    %v247 = vand.u32 %v134, 4294901760
    %v248 = vsub.f32 %v134, %v247
    %249 = vmatmul.f32.gmra.mxu0 %v248
    %v250 = vpop.f32.mrf.mxu0
    %v251 = vadd.f32 %v216, %v250
    %252 = vdwg.mxu0
    %253 = vmatpush.msra.mxu0 0.0
    %254 = vmatpush.msra.mxu0 0.0
    %255 = vmatpush.msra.mxu0 0.0
    %256 = vmatpush.msra.mxu0 0.0
    %257 = vmatpush.msra.mxu0 0.0
    %258 = vmatpush.msra.mxu0 0.0
    %259 = vmatpush.msra.mxu0 0.0
    %260 = vmatpush.msra.mxu0 0.0
    %261 = vmatpush.msra.mxu0 0.0
    %262 = vmatpush.msra.mxu0 0.0
    %263 = vmatpush.msra.mxu0 0.0
    %264 = vmatpush.msra.mxu0 0.0
    %v265 = vand.u32 %v129, 4294901760
    %266 = vmatpush.msra.mxu0 %v265
    %v267 = vand.u32 %v128, 4294901760
    %268 = vmatpush.msra.mxu0 %v267
    %v269 = vand.u32 %v127, 4294901760
    %270 = vmatpush.msra.mxu0 %v269
    %v271 = vand.u32 %v126, 4294901760
    %272 = vmatpush.msra.mxu0 %v271
    %v273 = vand.u32 %v131, 4294901760
    %v274 = vsub.f32 %v131, %v273
    %v275 = vand.u32 %v274, 4294901760
    %276 = vmatmul.f32.gmra.mxu0 %v275
    %v277 = vpop.f32.mrf.mxu0
    %v278 = vadd.f32 %v246, %v277
    %v279 = vand.u32 %v134, 4294901760
    %v280 = vsub.f32 %v134, %v279
    %v281 = vand.u32 %v280, 4294901760
    %282 = vmatmul.f32.gmra.mxu0 %v281
    %v283 = vpop.f32.mrf.mxu0
    %v284 = vadd.f32 %v251, %v283
    %285 = vdwg.mxu0
    %286 = vmatpush.msra.mxu0 0.0
    %287 = vmatpush.msra.mxu0 0.0
    %288 = vmatpush.msra.mxu0 0.0
    %289 = vmatpush.msra.mxu0 0.0
    %290 = vmatpush.msra.mxu0 0.0
    %291 = vmatpush.msra.mxu0 0.0
    %292 = vmatpush.msra.mxu0 0.0
    %293 = vmatpush.msra.mxu0 0.0
    %294 = vmatpush.msra.mxu0 0.0
    %295 = vmatpush.msra.mxu0 0.0
    %296 = vmatpush.msra.mxu0 0.0
    %297 = vmatpush.msra.mxu0 0.0
    %v298 = vand.u32 %v129, 4294901760
    %v299 = vsub.f32 %v129, %v298
    %v300 = vand.u32 %v299, 4294901760
    %301 = vmatpush.msra.mxu0 %v300
    %v302 = vand.u32 %v128, 4294901760
    %v303 = vsub.f32 %v128, %v302
    %v304 = vand.u32 %v303, 4294901760
    %305 = vmatpush.msra.mxu0 %v304
    %v306 = vand.u32 %v127, 4294901760
    %v307 = vsub.f32 %v127, %v306
    %v308 = vand.u32 %v307, 4294901760
    %309 = vmatpush.msra.mxu0 %v308
    %v310 = vand.u32 %v126, 4294901760
    %v311 = vsub.f32 %v126, %v310
    %v312 = vand.u32 %v311, 4294901760
    %313 = vmatpush.msra.mxu0 %v312
    %v314 = vand.u32 %v131, 4294901760
    %315 = vmatmul.f32.gmra.mxu0 %v314
    %v316 = vpop.f32.mrf.mxu0
    %v317 = vadd.f32 %v278, %v316
    %v318 = vand.u32 %v134, 4294901760
    %319 = vmatmul.f32.gmra.mxu0 %v318
    %v320 = vpop.f32.mrf.mxu0
    %v321 = vadd.f32 %v284, %v320
    %322 = vdwg.mxu0
    %323 = vmatpush.msra.mxu0 0.0
    %324 = vmatpush.msra.mxu0 0.0
    %325 = vmatpush.msra.mxu0 0.0
    %326 = vmatpush.msra.mxu0 0.0
    %327 = vmatpush.msra.mxu0 0.0
    %328 = vmatpush.msra.mxu0 0.0
    %329 = vmatpush.msra.mxu0 0.0
    %330 = vmatpush.msra.mxu0 0.0
    %331 = vmatpush.msra.mxu0 0.0
    %332 = vmatpush.msra.mxu0 0.0
    %333 = vmatpush.msra.mxu0 0.0
    %334 = vmatpush.msra.mxu0 0.0
    %v335 = vand.u32 %v129, 4294901760
    %336 = vmatpush.msra.mxu0 %v335
    %v337 = vand.u32 %v128, 4294901760
    %338 = vmatpush.msra.mxu0 %v337
    %v339 = vand.u32 %v127, 4294901760
    %340 = vmatpush.msra.mxu0 %v339
    %v341 = vand.u32 %v126, 4294901760
    %342 = vmatpush.msra.mxu0 %v341
    %v343 = vand.u32 %v131, 4294901760
    %344 = vmatmul.f32.gmra.mxu0 %v343
    %v345 = vpop.f32.mrf.mxu0
    %v346 = vadd.f32 %v317, %v345
    %v347 = vand.u32 %v134, 4294901760
    %348 = vmatmul.f32.gmra.mxu0 %v347
    %v349 = vpop.f32.mrf.mxu0
    %v350 = vadd.f32 %v321, %v349
    %351 = vdwg.mxu0
    %v352 = vld [vmem:[%s5] sm:$0xff]
    %v353 = vld [vmem:[%s5 + $0x8] sm:$0xff]
    %v354 = vld [vmem:[%s5 + $0x10] sm:$0xff]
    %v355 = vld [vmem:[%s5 + $0x18] sm:$0xff]
    %v357 = vsel %vm60, %v122, 0
    %v360 = vsel %vm60, %v123, 0
    %362 = vmatpush.msra.mxu0 0.0
    %363 = vmatpush.msra.mxu0 0.0
    %364 = vmatpush.msra.mxu0 0.0
    %365 = vmatpush.msra.mxu0 0.0
    %366 = vmatpush.msra.mxu0 0.0
    %367 = vmatpush.msra.mxu0 0.0
    %368 = vmatpush.msra.mxu0 0.0
    %369 = vmatpush.msra.mxu0 0.0
    %370 = vmatpush.msra.mxu0 0.0
    %371 = vmatpush.msra.mxu0 0.0
    %372 = vmatpush.msra.mxu0 0.0
    %373 = vmatpush.msra.mxu0 0.0
    %v374 = vand.u32 %v355, 4294901760
    %375 = vmatpush.msra.mxu0 %v374
    %v376 = vand.u32 %v354, 4294901760
    %377 = vmatpush.msra.mxu0 %v376
    %v378 = vand.u32 %v353, 4294901760
    %379 = vmatpush.msra.mxu0 %v378
    %v380 = vand.u32 %v352, 4294901760
    %381 = vmatpush.msra.mxu0 %v380
    %v382 = vand.u32 %v357, 4294901760
    %v383 = vsub.f32 %v357, %v382
    %v384 = vand.u32 %v383, 4294901760
    %v385 = vsub.f32 %v383, %v384
    %v386 = vand.u32 %v385, 4294901760
    %387 = vmatmul.f32.gmra.mxu0 %v386
    %v388 = vpop.f32.mrf.mxu0
    %v389 = vadd.f32 0.0, %v388
    %v390 = vand.u32 %v360, 4294901760
    %v391 = vsub.f32 %v360, %v390
    %v392 = vand.u32 %v391, 4294901760
    %v393 = vsub.f32 %v391, %v392
    %v394 = vand.u32 %v393, 4294901760
    %395 = vmatmul.f32.gmra.mxu0 %v394
    %v396 = vpop.f32.mrf.mxu0
    %v397 = vadd.f32 0.0, %v396
    %398 = vdwg.mxu0
    %399 = vmatpush.msra.mxu0 0.0
    %400 = vmatpush.msra.mxu0 0.0
    %401 = vmatpush.msra.mxu0 0.0
    %402 = vmatpush.msra.mxu0 0.0
    %403 = vmatpush.msra.mxu0 0.0
    %404 = vmatpush.msra.mxu0 0.0
    %405 = vmatpush.msra.mxu0 0.0
    %406 = vmatpush.msra.mxu0 0.0
    %407 = vmatpush.msra.mxu0 0.0
    %408 = vmatpush.msra.mxu0 0.0
    %409 = vmatpush.msra.mxu0 0.0
    %410 = vmatpush.msra.mxu0 0.0
    %v411 = vand.u32 %v355, 4294901760
    %v412 = vsub.f32 %v355, %v411
    %v413 = vand.u32 %v412, 4294901760
    %v414 = vsub.f32 %v412, %v413
    %v415 = vand.u32 %v414, 4294901760
    %416 = vmatpush.msra.mxu0 %v415
    %v417 = vand.u32 %v354, 4294901760
    %v418 = vsub.f32 %v354, %v417
    %v419 = vand.u32 %v418, 4294901760
    %v420 = vsub.f32 %v418, %v419
    %v421 = vand.u32 %v420, 4294901760
    %422 = vmatpush.msra.mxu0 %v421
    %v423 = vand.u32 %v353, 4294901760
    %v424 = vsub.f32 %v353, %v423
    %v425 = vand.u32 %v424, 4294901760
    %v426 = vsub.f32 %v424, %v425
    %v427 = vand.u32 %v426, 4294901760
    %428 = vmatpush.msra.mxu0 %v427
    %v429 = vand.u32 %v352, 4294901760
    %v430 = vsub.f32 %v352, %v429
    %v431 = vand.u32 %v430, 4294901760
    %v432 = vsub.f32 %v430, %v431
    %v433 = vand.u32 %v432, 4294901760
    %434 = vmatpush.msra.mxu0 %v433
    %v435 = vand.u32 %v357, 4294901760
    %436 = vmatmul.f32.gmra.mxu0 %v435
    %v437 = vpop.f32.mrf.mxu0
    %v438 = vadd.f32 %v389, %v437
    %v439 = vand.u32 %v360, 4294901760
    %440 = vmatmul.f32.gmra.mxu0 %v439
    %v441 = vpop.f32.mrf.mxu0
    %v442 = vadd.f32 %v397, %v441
    %443 = vdwg.mxu0
    %444 = vmatpush.msra.mxu0 0.0
    %445 = vmatpush.msra.mxu0 0.0
    %446 = vmatpush.msra.mxu0 0.0
    %447 = vmatpush.msra.mxu0 0.0
    %448 = vmatpush.msra.mxu0 0.0
    %449 = vmatpush.msra.mxu0 0.0
    %450 = vmatpush.msra.mxu0 0.0
    %451 = vmatpush.msra.mxu0 0.0
    %452 = vmatpush.msra.mxu0 0.0
    %453 = vmatpush.msra.mxu0 0.0
    %454 = vmatpush.msra.mxu0 0.0
    %455 = vmatpush.msra.mxu0 0.0
    %v456 = vand.u32 %v355, 4294901760
    %v457 = vsub.f32 %v355, %v456
    %458 = vmatpush.msra.mxu0 %v457
    %v459 = vand.u32 %v354, 4294901760
    %v460 = vsub.f32 %v354, %v459
    %461 = vmatpush.msra.mxu0 %v460
    %v462 = vand.u32 %v353, 4294901760
    %v463 = vsub.f32 %v353, %v462
    %464 = vmatpush.msra.mxu0 %v463
    %v465 = vand.u32 %v352, 4294901760
    %v466 = vsub.f32 %v352, %v465
    %467 = vmatpush.msra.mxu0 %v466
    %v468 = vand.u32 %v357, 4294901760
    %v469 = vsub.f32 %v357, %v468
    %470 = vmatmul.f32.gmra.mxu0 %v469
    %v471 = vpop.f32.mrf.mxu0
    %v472 = vadd.f32 %v438, %v471
    %v473 = vand.u32 %v360, 4294901760
    %v474 = vsub.f32 %v360, %v473
    %475 = vmatmul.f32.gmra.mxu0 %v474
    %v476 = vpop.f32.mrf.mxu0
    %v477 = vadd.f32 %v442, %v476
    %478 = vdwg.mxu0
    %479 = vmatpush.msra.mxu0 0.0
    %480 = vmatpush.msra.mxu0 0.0
    %481 = vmatpush.msra.mxu0 0.0
    %482 = vmatpush.msra.mxu0 0.0
    %483 = vmatpush.msra.mxu0 0.0
    %484 = vmatpush.msra.mxu0 0.0
    %485 = vmatpush.msra.mxu0 0.0
    %486 = vmatpush.msra.mxu0 0.0
    %487 = vmatpush.msra.mxu0 0.0
    %488 = vmatpush.msra.mxu0 0.0
    %489 = vmatpush.msra.mxu0 0.0
    %490 = vmatpush.msra.mxu0 0.0
    %v491 = vand.u32 %v355, 4294901760
    %492 = vmatpush.msra.mxu0 %v491
    %v493 = vand.u32 %v354, 4294901760
    %494 = vmatpush.msra.mxu0 %v493
    %v495 = vand.u32 %v353, 4294901760
    %496 = vmatpush.msra.mxu0 %v495
    %v497 = vand.u32 %v352, 4294901760
    %498 = vmatpush.msra.mxu0 %v497
    %v499 = vand.u32 %v357, 4294901760
    %v500 = vsub.f32 %v357, %v499
    %v501 = vand.u32 %v500, 4294901760
    %502 = vmatmul.f32.gmra.mxu0 %v501
    %v503 = vpop.f32.mrf.mxu0
    %v504 = vadd.f32 %v472, %v503
    %v505 = vand.u32 %v360, 4294901760
    %v506 = vsub.f32 %v360, %v505
    %v507 = vand.u32 %v506, 4294901760
    %508 = vmatmul.f32.gmra.mxu0 %v507
    %v509 = vpop.f32.mrf.mxu0
    %v510 = vadd.f32 %v477, %v509
    %511 = vdwg.mxu0
    %512 = vmatpush.msra.mxu0 0.0
    %513 = vmatpush.msra.mxu0 0.0
    %514 = vmatpush.msra.mxu0 0.0
    %515 = vmatpush.msra.mxu0 0.0
    %516 = vmatpush.msra.mxu0 0.0
    %517 = vmatpush.msra.mxu0 0.0
    %518 = vmatpush.msra.mxu0 0.0
    %519 = vmatpush.msra.mxu0 0.0
    %520 = vmatpush.msra.mxu0 0.0
    %521 = vmatpush.msra.mxu0 0.0
    %522 = vmatpush.msra.mxu0 0.0
    %523 = vmatpush.msra.mxu0 0.0
    %v524 = vand.u32 %v355, 4294901760
    %v525 = vsub.f32 %v355, %v524
    %v526 = vand.u32 %v525, 4294901760
    %527 = vmatpush.msra.mxu0 %v526
    %v528 = vand.u32 %v354, 4294901760
    %v529 = vsub.f32 %v354, %v528
    %v530 = vand.u32 %v529, 4294901760
    %531 = vmatpush.msra.mxu0 %v530
    %v532 = vand.u32 %v353, 4294901760
    %v533 = vsub.f32 %v353, %v532
    %v534 = vand.u32 %v533, 4294901760
    %535 = vmatpush.msra.mxu0 %v534
    %v536 = vand.u32 %v352, 4294901760
    %v537 = vsub.f32 %v352, %v536
    %v538 = vand.u32 %v537, 4294901760
    %539 = vmatpush.msra.mxu0 %v538
    %v540 = vand.u32 %v357, 4294901760
    %541 = vmatmul.f32.gmra.mxu0 %v540
    %v542 = vpop.f32.mrf.mxu0
    %v543 = vadd.f32 %v504, %v542
    %v544 = vand.u32 %v360, 4294901760
    %545 = vmatmul.f32.gmra.mxu0 %v544
    %v546 = vpop.f32.mrf.mxu0
    %v547 = vadd.f32 %v510, %v546
    %548 = vdwg.mxu0
    %549 = vmatpush.msra.mxu0 0.0
    %550 = vmatpush.msra.mxu0 0.0
    %551 = vmatpush.msra.mxu0 0.0
    %552 = vmatpush.msra.mxu0 0.0
    %553 = vmatpush.msra.mxu0 0.0
    %554 = vmatpush.msra.mxu0 0.0
    %555 = vmatpush.msra.mxu0 0.0
    %556 = vmatpush.msra.mxu0 0.0
    %557 = vmatpush.msra.mxu0 0.0
    %558 = vmatpush.msra.mxu0 0.0
    %559 = vmatpush.msra.mxu0 0.0
    %560 = vmatpush.msra.mxu0 0.0
    %v561 = vand.u32 %v355, 4294901760
    %562 = vmatpush.msra.mxu0 %v561
    %v563 = vand.u32 %v354, 4294901760
    %564 = vmatpush.msra.mxu0 %v563
    %v565 = vand.u32 %v353, 4294901760
    %566 = vmatpush.msra.mxu0 %v565
    %v567 = vand.u32 %v352, 4294901760
    %568 = vmatpush.msra.mxu0 %v567
    %v569 = vand.u32 %v357, 4294901760
    %570 = vmatmul.f32.gmra.mxu0 %v569
    %v571 = vpop.f32.mrf.mxu0
    %v572 = vadd.f32 %v543, %v571
    %v573 = vand.u32 %v360, 4294901760
    %574 = vmatmul.f32.gmra.mxu0 %v573
    %v575 = vpop.f32.mrf.mxu0
    %v576 = vadd.f32 %v547, %v575
    %577 = vdwg.mxu0
    %v578 = vlaneseq
    %v579 = vshrl.u32 %v578, 7
    %v580 = vlaneseq
    %v581 = vand.u32 %v580, 127
    %vm582 = vcmp.le.s32.totalorder %v581, %v579
    %v583 = vsel %vm582, 0.0, -inf
    %585 = vrot.lane.b32.xlu0 %v346, 96
    %v586 = vpop.permute.xlu0 %585
    %vm587 = vcmask 64512
    %v588 = vsel %vm587, %v346, 0
    %v590 = vsel %vm587, %v586, 0
    %592 = vmatpush.xpose.msra.mxu0 0.0
    %593 = vmatpush.xpose.msra.mxu0 0.0
    %594 = vmatpush.xpose.msra.mxu0 0.0
    %595 = vmatpush.xpose.msra.mxu0 0.0
    %596 = vmatpush.xpose.msra.mxu0 0.0
    %597 = vmatpush.xpose.msra.mxu0 0.0
    %598 = vmatpush.xpose.msra.mxu0 0.0
    %599 = vmatpush.xpose.msra.mxu0 0.0
    %600 = vmatpush.xpose.msra.mxu0 0.0
    %601 = vmatpush.xpose.msra.mxu0 0.0
    %602 = vmatpush.xpose.msra.mxu0 0.0
    %603 = vmatpush.xpose.msra.mxu0 0.0
    %604 = vmatpush.xpose.msra.mxu0 0.0
    %605 = vmatpush.xpose.msra.mxu0 0.0
    %606 = vmatpush.xpose.msra.mxu0 0.0
    %v607 = vand.u32 %v590, 4294901760
    %608 = vmatpush.xpose.msra.mxu0 %v607
    %v609 = vand.u32 %v588, 4294901760
    %v610 = vsub.f32 %v588, %v609
    %v611 = vand.u32 %v610, 4294901760
    %v612 = vsub.f32 %v610, %v611
    %v613 = vand.u32 %v612, 4294901760
    %614 = vmatmul.f32.gmra.mxu0 %v613
    %v615 = vpop.f32.mrf.mxu0
    %v616 = vadd.f32 %v583, %v615
    %617 = vdwg.mxu0
    %618 = vmatpush.xpose.msra.mxu0 0.0
    %619 = vmatpush.xpose.msra.mxu0 0.0
    %620 = vmatpush.xpose.msra.mxu0 0.0
    %621 = vmatpush.xpose.msra.mxu0 0.0
    %622 = vmatpush.xpose.msra.mxu0 0.0
    %623 = vmatpush.xpose.msra.mxu0 0.0
    %624 = vmatpush.xpose.msra.mxu0 0.0
    %625 = vmatpush.xpose.msra.mxu0 0.0
    %626 = vmatpush.xpose.msra.mxu0 0.0
    %627 = vmatpush.xpose.msra.mxu0 0.0
    %628 = vmatpush.xpose.msra.mxu0 0.0
    %629 = vmatpush.xpose.msra.mxu0 0.0
    %630 = vmatpush.xpose.msra.mxu0 0.0
    %631 = vmatpush.xpose.msra.mxu0 0.0
    %632 = vmatpush.xpose.msra.mxu0 0.0
    %v633 = vand.u32 %v590, 4294901760
    %v634 = vsub.f32 %v590, %v633
    %v635 = vand.u32 %v634, 4294901760
    %v636 = vsub.f32 %v634, %v635
    %v637 = vand.u32 %v636, 4294901760
    %638 = vmatpush.xpose.msra.mxu0 %v637
    %v639 = vand.u32 %v588, 4294901760
    %640 = vmatmul.f32.gmra.mxu0 %v639
    %v641 = vpop.f32.mrf.mxu0
    %v642 = vadd.f32 %v616, %v641
    %643 = vdwg.mxu0
    %644 = vmatpush.xpose.msra.mxu0 0.0
    %645 = vmatpush.xpose.msra.mxu0 0.0
    %646 = vmatpush.xpose.msra.mxu0 0.0
    %647 = vmatpush.xpose.msra.mxu0 0.0
    %648 = vmatpush.xpose.msra.mxu0 0.0
    %649 = vmatpush.xpose.msra.mxu0 0.0
    %650 = vmatpush.xpose.msra.mxu0 0.0
    %651 = vmatpush.xpose.msra.mxu0 0.0
    %652 = vmatpush.xpose.msra.mxu0 0.0
    %653 = vmatpush.xpose.msra.mxu0 0.0
    %654 = vmatpush.xpose.msra.mxu0 0.0
    %655 = vmatpush.xpose.msra.mxu0 0.0
    %656 = vmatpush.xpose.msra.mxu0 0.0
    %657 = vmatpush.xpose.msra.mxu0 0.0
    %658 = vmatpush.xpose.msra.mxu0 0.0
    %v659 = vand.u32 %v590, 4294901760
    %v660 = vsub.f32 %v590, %v659
    %661 = vmatpush.xpose.msra.mxu0 %v660
    %v662 = vand.u32 %v588, 4294901760
    %v663 = vsub.f32 %v588, %v662
    %664 = vmatmul.f32.gmra.mxu0 %v663
    %v665 = vpop.f32.mrf.mxu0
    %v666 = vadd.f32 %v642, %v665
    %667 = vdwg.mxu0
    %668 = vmatpush.xpose.msra.mxu0 0.0
    %669 = vmatpush.xpose.msra.mxu0 0.0
    %670 = vmatpush.xpose.msra.mxu0 0.0
    %671 = vmatpush.xpose.msra.mxu0 0.0
    %672 = vmatpush.xpose.msra.mxu0 0.0
    %673 = vmatpush.xpose.msra.mxu0 0.0
    %674 = vmatpush.xpose.msra.mxu0 0.0
    %675 = vmatpush.xpose.msra.mxu0 0.0
    %676 = vmatpush.xpose.msra.mxu0 0.0
    %677 = vmatpush.xpose.msra.mxu0 0.0
    %678 = vmatpush.xpose.msra.mxu0 0.0
    %679 = vmatpush.xpose.msra.mxu0 0.0
    %680 = vmatpush.xpose.msra.mxu0 0.0
    %681 = vmatpush.xpose.msra.mxu0 0.0
    %682 = vmatpush.xpose.msra.mxu0 0.0
    %v683 = vand.u32 %v590, 4294901760
    %684 = vmatpush.xpose.msra.mxu0 %v683
    %v685 = vand.u32 %v588, 4294901760
    %v686 = vsub.f32 %v588, %v685
    %v687 = vand.u32 %v686, 4294901760
    %688 = vmatmul.f32.gmra.mxu0 %v687
    %v689 = vpop.f32.mrf.mxu0
    %v690 = vadd.f32 %v666, %v689
    %691 = vdwg.mxu0
    %692 = vmatpush.xpose.msra.mxu0 0.0
    %693 = vmatpush.xpose.msra.mxu0 0.0
    %694 = vmatpush.xpose.msra.mxu0 0.0
    %695 = vmatpush.xpose.msra.mxu0 0.0
    %696 = vmatpush.xpose.msra.mxu0 0.0
    %697 = vmatpush.xpose.msra.mxu0 0.0
    %698 = vmatpush.xpose.msra.mxu0 0.0
    %699 = vmatpush.xpose.msra.mxu0 0.0
    %700 = vmatpush.xpose.msra.mxu0 0.0
    %701 = vmatpush.xpose.msra.mxu0 0.0
    %702 = vmatpush.xpose.msra.mxu0 0.0
    %703 = vmatpush.xpose.msra.mxu0 0.0
    %704 = vmatpush.xpose.msra.mxu0 0.0
    %705 = vmatpush.xpose.msra.mxu0 0.0
    %706 = vmatpush.xpose.msra.mxu0 0.0
    %v707 = vand.u32 %v590, 4294901760
    %v708 = vsub.f32 %v590, %v707
    %v709 = vand.u32 %v708, 4294901760
    %710 = vmatpush.xpose.msra.mxu0 %v709
    %v711 = vand.u32 %v588, 4294901760
    %712 = vmatmul.f32.gmra.mxu0 %v711
    %v713 = vpop.f32.mrf.mxu0
    %v714 = vadd.f32 %v690, %v713
    %715 = vdwg.mxu0
    %716 = vmatpush.xpose.msra.mxu0 0.0
    %717 = vmatpush.xpose.msra.mxu0 0.0
    %718 = vmatpush.xpose.msra.mxu0 0.0
    %719 = vmatpush.xpose.msra.mxu0 0.0
    %720 = vmatpush.xpose.msra.mxu0 0.0
    %721 = vmatpush.xpose.msra.mxu0 0.0
    %722 = vmatpush.xpose.msra.mxu0 0.0
    %723 = vmatpush.xpose.msra.mxu0 0.0
    %724 = vmatpush.xpose.msra.mxu0 0.0
    %725 = vmatpush.xpose.msra.mxu0 0.0
    %726 = vmatpush.xpose.msra.mxu0 0.0
    %727 = vmatpush.xpose.msra.mxu0 0.0
    %728 = vmatpush.xpose.msra.mxu0 0.0
    %729 = vmatpush.xpose.msra.mxu0 0.0
    %730 = vmatpush.xpose.msra.mxu0 0.0
    %v731 = vand.u32 %v590, 4294901760
    %732 = vmatpush.xpose.msra.mxu0 %v731
    %v733 = vand.u32 %v588, 4294901760
    %734 = vmatmul.f32.gmra.mxu0 %v733
    %v735 = vpop.f32.mrf.mxu0
    %v736 = vadd.f32 %v714, %v735
    %737 = vdwg.mxu0
    %v738 = vsel %vm587, %v736, -inf
    %739 = vmax.xlane.f32.xlu0 %v738
    %v740 = vpop.xlane.xlu0 %739
    %v741 = vsub.f32 %v736, %v740
    %v742 = vmul.f32 %v741, 1.442695
    %v743 = vpow.pop %v742
    %v744 = vsel %vm587, %v743, 0.0
    %745 = vadd.xlane.f32.xlu0 %v744
    %v746 = vpop.xlane.xlu0 %745
    %v747 = vrcp.pop %v746
    %v748 = vmul.f32 %v746, %v747
    %v749 = vsub.f32 1.0, %v748
    %v750 = vmul.f32 %v747, %v749
    %v751 = vadd.f32 %v747, %v750
    %vm752 = vweird.f32 %v746
    %vm753 = vweird.f32 %v747
    %vm754 = vmor %vm752, %vm753
    %v755 = vsel %vm754, %v747, %v751
    %v756 = vand.u32 2147483647, %v746
    %vm757 = vcmp.eq.f32.partialorder %v756, 8.507059e+37
    %v758 = vand.u32 %v746, 2147483648
    %v759 = vor.u32 1.1754944e-38, %v758
    %v760 = vsel %vm757, %v759, %v755
    %v761 = vmul.f32 %v743, %v760
    %762 = vst.msk [vmem:[#allocation4] sm:$0xff] %vm587, %v761
    %v764 = vsel %vm587, %v761, 0
    %766 = vmatpush.msra.mxu0 0.0
    %767 = vmatpush.msra.mxu0 0.0
    %768 = vmatpush.msra.mxu0 0.0
    %769 = vmatpush.msra.mxu0 0.0
    %770 = vmatpush.msra.mxu0 0.0
    %771 = vmatpush.msra.mxu0 0.0
    %772 = vmatpush.msra.mxu0 0.0
    %773 = vmatpush.msra.mxu0 0.0
    %774 = vmatpush.msra.mxu0 0.0
    %775 = vmatpush.msra.mxu0 0.0
    %776 = vmatpush.msra.mxu0 0.0
    %777 = vmatpush.msra.mxu0 0.0
    %778 = vmatpush.msra.mxu0 0.0
    %779 = vmatpush.msra.mxu0 0.0
    %780 = vmatpush.msra.mxu0 0.0
    %v781 = vand.u32 %v572, 4294901760
    %782 = vmatpush.msra.mxu0 %v781
    %v783 = vand.u32 %v764, 4294901760
    %v784 = vsub.f32 %v764, %v783
    %v785 = vand.u32 %v784, 4294901760
    %v786 = vsub.f32 %v784, %v785
    %v787 = vand.u32 %v786, 4294901760
    %788 = vmatmul.f32.gmra.mxu0 %v787
    %v789 = vpop.f32.mrf.mxu0
    %v790 = vadd.f32 0.0, %v789
    %791 = vdwg.mxu0
    %792 = vmatpush.msra.mxu0 0.0
    %793 = vmatpush.msra.mxu0 0.0
    %794 = vmatpush.msra.mxu0 0.0
    %795 = vmatpush.msra.mxu0 0.0
    %796 = vmatpush.msra.mxu0 0.0
    %797 = vmatpush.msra.mxu0 0.0
    %798 = vmatpush.msra.mxu0 0.0
    %799 = vmatpush.msra.mxu0 0.0
    %800 = vmatpush.msra.mxu0 0.0
    %801 = vmatpush.msra.mxu0 0.0
    %802 = vmatpush.msra.mxu0 0.0
    %803 = vmatpush.msra.mxu0 0.0
    %804 = vmatpush.msra.mxu0 0.0
    %805 = vmatpush.msra.mxu0 0.0
    %806 = vmatpush.msra.mxu0 0.0
    %v807 = vand.u32 %v572, 4294901760
    %v808 = vsub.f32 %v572, %v807
    %v809 = vand.u32 %v808, 4294901760
    %v810 = vsub.f32 %v808, %v809
    %v811 = vand.u32 %v810, 4294901760
    %812 = vmatpush.msra.mxu0 %v811
    %v813 = vand.u32 %v764, 4294901760
    %814 = vmatmul.f32.gmra.mxu0 %v813
    %v815 = vpop.f32.mrf.mxu0
    %v816 = vadd.f32 %v790, %v815
    %817 = vdwg.mxu0
    %818 = vmatpush.msra.mxu0 0.0
    %819 = vmatpush.msra.mxu0 0.0
    %820 = vmatpush.msra.mxu0 0.0
    %821 = vmatpush.msra.mxu0 0.0
    %822 = vmatpush.msra.mxu0 0.0
    %823 = vmatpush.msra.mxu0 0.0
    %824 = vmatpush.msra.mxu0 0.0
    %825 = vmatpush.msra.mxu0 0.0
    %826 = vmatpush.msra.mxu0 0.0
    %827 = vmatpush.msra.mxu0 0.0
    %828 = vmatpush.msra.mxu0 0.0
    %829 = vmatpush.msra.mxu0 0.0
    %830 = vmatpush.msra.mxu0 0.0
    %831 = vmatpush.msra.mxu0 0.0
    %832 = vmatpush.msra.mxu0 0.0
    %v833 = vand.u32 %v572, 4294901760
    %v834 = vsub.f32 %v572, %v833
    %835 = vmatpush.msra.mxu0 %v834
    %v836 = vand.u32 %v764, 4294901760
    %v837 = vsub.f32 %v764, %v836
    %838 = vmatmul.f32.gmra.mxu0 %v837
    %v839 = vpop.f32.mrf.mxu0
    %v840 = vadd.f32 %v816, %v839
    %841 = vdwg.mxu0
    %842 = vmatpush.msra.mxu0 0.0
    %843 = vmatpush.msra.mxu0 0.0
    %844 = vmatpush.msra.mxu0 0.0
    %845 = vmatpush.msra.mxu0 0.0
    %846 = vmatpush.msra.mxu0 0.0
    %847 = vmatpush.msra.mxu0 0.0
    %848 = vmatpush.msra.mxu0 0.0
    %849 = vmatpush.msra.mxu0 0.0
    %850 = vmatpush.msra.mxu0 0.0
    %851 = vmatpush.msra.mxu0 0.0
    %852 = vmatpush.msra.mxu0 0.0
    %853 = vmatpush.msra.mxu0 0.0
    %854 = vmatpush.msra.mxu0 0.0
    %855 = vmatpush.msra.mxu0 0.0
    %856 = vmatpush.msra.mxu0 0.0
    %v857 = vand.u32 %v572, 4294901760
    %858 = vmatpush.msra.mxu0 %v857
    %v859 = vand.u32 %v764, 4294901760
    %v860 = vsub.f32 %v764, %v859
    %v861 = vand.u32 %v860, 4294901760
    %862 = vmatmul.f32.gmra.mxu0 %v861
    %v863 = vpop.f32.mrf.mxu0
    %v864 = vadd.f32 %v840, %v863
    %865 = vdwg.mxu0
    %866 = vmatpush.msra.mxu0 0.0
    %867 = vmatpush.msra.mxu0 0.0
    %868 = vmatpush.msra.mxu0 0.0
    %869 = vmatpush.msra.mxu0 0.0
    %870 = vmatpush.msra.mxu0 0.0
    %871 = vmatpush.msra.mxu0 0.0
    %872 = vmatpush.msra.mxu0 0.0
    %873 = vmatpush.msra.mxu0 0.0
    %874 = vmatpush.msra.mxu0 0.0
    %875 = vmatpush.msra.mxu0 0.0
    %876 = vmatpush.msra.mxu0 0.0
    %877 = vmatpush.msra.mxu0 0.0
    %878 = vmatpush.msra.mxu0 0.0
    %879 = vmatpush.msra.mxu0 0.0
    %880 = vmatpush.msra.mxu0 0.0
    %v881 = vand.u32 %v572, 4294901760
    %v882 = vsub.f32 %v572, %v881
    %v883 = vand.u32 %v882, 4294901760
    %884 = vmatpush.msra.mxu0 %v883
    %v885 = vand.u32 %v764, 4294901760
    %886 = vmatmul.f32.gmra.mxu0 %v885
    %v887 = vpop.f32.mrf.mxu0
    %v888 = vadd.f32 %v864, %v887
    %889 = vdwg.mxu0
    %890 = vmatpush.msra.mxu0 0.0
    %891 = vmatpush.msra.mxu0 0.0
    %892 = vmatpush.msra.mxu0 0.0
    %893 = vmatpush.msra.mxu0 0.0
    %894 = vmatpush.msra.mxu0 0.0
    %895 = vmatpush.msra.mxu0 0.0
    %896 = vmatpush.msra.mxu0 0.0
    %897 = vmatpush.msra.mxu0 0.0
    %898 = vmatpush.msra.mxu0 0.0
    %899 = vmatpush.msra.mxu0 0.0
    %900 = vmatpush.msra.mxu0 0.0
    %901 = vmatpush.msra.mxu0 0.0
    %902 = vmatpush.msra.mxu0 0.0
    %903 = vmatpush.msra.mxu0 0.0
    %904 = vmatpush.msra.mxu0 0.0
    %v905 = vand.u32 %v572, 4294901760
    %906 = vmatpush.msra.mxu0 %v905
    %v907 = vand.u32 %v764, 4294901760
    %908 = vmatmul.f32.gmra.mxu0 %v907
    %v909 = vpop.f32.mrf.mxu0
    %v910 = vadd.f32 %v888, %v909
    %911 = vdwg.mxu0
    %912 = vrot.lane.b32.xlu0 %v346, 120
    %v913 = vpop.permute.xlu0 %912
    %914 = vrot.lane.b32.xlu0 %v346, 88
    %v915 = vpop.permute.xlu0 %914
    %v916 = vsel %vm587, %v913, 0
    %v918 = vsel %vm587, %v915, 0
    %920 = vmatpush.xpose.msra.mxu0 0.0
    %921 = vmatpush.xpose.msra.mxu0 0.0
    %922 = vmatpush.xpose.msra.mxu0 0.0
    %923 = vmatpush.xpose.msra.mxu0 0.0
    %924 = vmatpush.xpose.msra.mxu0 0.0
    %925 = vmatpush.xpose.msra.mxu0 0.0
    %926 = vmatpush.xpose.msra.mxu0 0.0
    %927 = vmatpush.xpose.msra.mxu0 0.0
    %928 = vmatpush.xpose.msra.mxu0 0.0
    %929 = vmatpush.xpose.msra.mxu0 0.0
    %930 = vmatpush.xpose.msra.mxu0 0.0
    %931 = vmatpush.xpose.msra.mxu0 0.0
    %932 = vmatpush.xpose.msra.mxu0 0.0
    %933 = vmatpush.xpose.msra.mxu0 0.0
    %934 = vmatpush.xpose.msra.mxu0 0.0
    %v935 = vand.u32 %v918, 4294901760
    %936 = vmatpush.xpose.msra.mxu0 %v935
    %v937 = vand.u32 %v916, 4294901760
    %v938 = vsub.f32 %v916, %v937
    %v939 = vand.u32 %v938, 4294901760
    %v940 = vsub.f32 %v938, %v939
    %v941 = vand.u32 %v940, 4294901760
    %942 = vmatmul.f32.gmra.mxu0 %v941
    %v943 = vpop.f32.mrf.mxu0
    %v944 = vadd.f32 %v583, %v943
    %945 = vdwg.mxu0
    %946 = vmatpush.xpose.msra.mxu0 0.0
    %947 = vmatpush.xpose.msra.mxu0 0.0
    %948 = vmatpush.xpose.msra.mxu0 0.0
    %949 = vmatpush.xpose.msra.mxu0 0.0
    %950 = vmatpush.xpose.msra.mxu0 0.0
    %951 = vmatpush.xpose.msra.mxu0 0.0
    %952 = vmatpush.xpose.msra.mxu0 0.0
    %953 = vmatpush.xpose.msra.mxu0 0.0
    %954 = vmatpush.xpose.msra.mxu0 0.0
    %955 = vmatpush.xpose.msra.mxu0 0.0
    %956 = vmatpush.xpose.msra.mxu0 0.0
    %957 = vmatpush.xpose.msra.mxu0 0.0
    %958 = vmatpush.xpose.msra.mxu0 0.0
    %959 = vmatpush.xpose.msra.mxu0 0.0
    %960 = vmatpush.xpose.msra.mxu0 0.0
    %v961 = vand.u32 %v918, 4294901760
    %v962 = vsub.f32 %v918, %v961
    %v963 = vand.u32 %v962, 4294901760
    %v964 = vsub.f32 %v962, %v963
    %v965 = vand.u32 %v964, 4294901760
    %966 = vmatpush.xpose.msra.mxu0 %v965
    %v967 = vand.u32 %v916, 4294901760
    %968 = vmatmul.f32.gmra.mxu0 %v967
    %v969 = vpop.f32.mrf.mxu0
    %v970 = vadd.f32 %v944, %v969
    %971 = vdwg.mxu0
    %972 = vmatpush.xpose.msra.mxu0 0.0
    %973 = vmatpush.xpose.msra.mxu0 0.0
    %974 = vmatpush.xpose.msra.mxu0 0.0
    %975 = vmatpush.xpose.msra.mxu0 0.0
    %976 = vmatpush.xpose.msra.mxu0 0.0
    %977 = vmatpush.xpose.msra.mxu0 0.0
    %978 = vmatpush.xpose.msra.mxu0 0.0
    %979 = vmatpush.xpose.msra.mxu0 0.0
    %980 = vmatpush.xpose.msra.mxu0 0.0
    %981 = vmatpush.xpose.msra.mxu0 0.0
    %982 = vmatpush.xpose.msra.mxu0 0.0
    %983 = vmatpush.xpose.msra.mxu0 0.0
    %984 = vmatpush.xpose.msra.mxu0 0.0
    %985 = vmatpush.xpose.msra.mxu0 0.0
    %986 = vmatpush.xpose.msra.mxu0 0.0
    %v987 = vand.u32 %v918, 4294901760
    %v988 = vsub.f32 %v918, %v987
    %989 = vmatpush.xpose.msra.mxu0 %v988
    %v990 = vand.u32 %v916, 4294901760
    %v991 = vsub.f32 %v916, %v990
    %992 = vmatmul.f32.gmra.mxu0 %v991
    %v993 = vpop.f32.mrf.mxu0
    %v994 = vadd.f32 %v970, %v993
    %995 = vdwg.mxu0
    %996 = vmatpush.xpose.msra.mxu0 0.0
    %997 = vmatpush.xpose.msra.mxu0 0.0
    %998 = vmatpush.xpose.msra.mxu0 0.0
    %999 = vmatpush.xpose.msra.mxu0 0.0
    %1000 = vmatpush.xpose.msra.mxu0 0.0
    %1001 = vmatpush.xpose.msra.mxu0 0.0
    %1002 = vmatpush.xpose.msra.mxu0 0.0
    %1003 = vmatpush.xpose.msra.mxu0 0.0
    %1004 = vmatpush.xpose.msra.mxu0 0.0
    %1005 = vmatpush.xpose.msra.mxu0 0.0
    %1006 = vmatpush.xpose.msra.mxu0 0.0
    %1007 = vmatpush.xpose.msra.mxu0 0.0
    %1008 = vmatpush.xpose.msra.mxu0 0.0
    %1009 = vmatpush.xpose.msra.mxu0 0.0
    %1010 = vmatpush.xpose.msra.mxu0 0.0
    %v1011 = vand.u32 %v918, 4294901760
    %1012 = vmatpush.xpose.msra.mxu0 %v1011
    %v1013 = vand.u32 %v916, 4294901760
    %v1014 = vsub.f32 %v916, %v1013
    %v1015 = vand.u32 %v1014, 4294901760
    %1016 = vmatmul.f32.gmra.mxu0 %v1015
    %v1017 = vpop.f32.mrf.mxu0
    %v1018 = vadd.f32 %v994, %v1017
    %1019 = vdwg.mxu0
    %1020 = vmatpush.xpose.msra.mxu0 0.0
    %1021 = vmatpush.xpose.msra.mxu0 0.0
    %1022 = vmatpush.xpose.msra.mxu0 0.0
    %1023 = vmatpush.xpose.msra.mxu0 0.0
    %1024 = vmatpush.xpose.msra.mxu0 0.0
    %1025 = vmatpush.xpose.msra.mxu0 0.0
    %1026 = vmatpush.xpose.msra.mxu0 0.0
    %1027 = vmatpush.xpose.msra.mxu0 0.0
    %1028 = vmatpush.xpose.msra.mxu0 0.0
    %1029 = vmatpush.xpose.msra.mxu0 0.0
    %1030 = vmatpush.xpose.msra.mxu0 0.0
    %1031 = vmatpush.xpose.msra.mxu0 0.0
    %1032 = vmatpush.xpose.msra.mxu0 0.0
    %1033 = vmatpush.xpose.msra.mxu0 0.0
    %1034 = vmatpush.xpose.msra.mxu0 0.0
    %v1035 = vand.u32 %v918, 4294901760
    %v1036 = vsub.f32 %v918, %v1035
    %v1037 = vand.u32 %v1036, 4294901760
    %1038 = vmatpush.xpose.msra.mxu0 %v1037
    %v1039 = vand.u32 %v916, 4294901760
    %1040 = vmatmul.f32.gmra.mxu0 %v1039
    %v1041 = vpop.f32.mrf.mxu0
    %v1042 = vadd.f32 %v1018, %v1041
    %1043 = vdwg.mxu0
    %1044 = vmatpush.xpose.msra.mxu0 0.0
    %1045 = vmatpush.xpose.msra.mxu0 0.0
    %1046 = vmatpush.xpose.msra.mxu0 0.0
    %1047 = vmatpush.xpose.msra.mxu0 0.0
    %1048 = vmatpush.xpose.msra.mxu0 0.0
    %1049 = vmatpush.xpose.msra.mxu0 0.0
    %1050 = vmatpush.xpose.msra.mxu0 0.0
    %1051 = vmatpush.xpose.msra.mxu0 0.0
    %1052 = vmatpush.xpose.msra.mxu0 0.0
    %1053 = vmatpush.xpose.msra.mxu0 0.0
    %1054 = vmatpush.xpose.msra.mxu0 0.0
    %1055 = vmatpush.xpose.msra.mxu0 0.0
    %1056 = vmatpush.xpose.msra.mxu0 0.0
    %1057 = vmatpush.xpose.msra.mxu0 0.0
    %1058 = vmatpush.xpose.msra.mxu0 0.0
    %v1059 = vand.u32 %v918, 4294901760
    %1060 = vmatpush.xpose.msra.mxu0 %v1059
    %v1061 = vand.u32 %v916, 4294901760
    %1062 = vmatmul.f32.gmra.mxu0 %v1061
    %v1063 = vpop.f32.mrf.mxu0
    %v1064 = vadd.f32 %v1042, %v1063
    %1065 = vdwg.mxu0
    %v1066 = vsel %vm587, %v1064, -inf
    %1067 = vmax.xlane.f32.xlu0 %v1066
    %v1068 = vpop.xlane.xlu0 %1067
    %v1069 = vsub.f32 %v1064, %v1068
    %v1070 = vmul.f32 %v1069, 1.442695
    %v1071 = vpow.pop %v1070
    %v1072 = vsel %vm587, %v1071, 0.0
    %1073 = vadd.xlane.f32.xlu0 %v1072
    %v1074 = vpop.xlane.xlu0 %1073
    %v1075 = vrcp.pop %v1074
    %v1076 = vmul.f32 %v1074, %v1075
    %v1077 = vsub.f32 1.0, %v1076
    %v1078 = vmul.f32 %v1075, %v1077
    %v1079 = vadd.f32 %v1075, %v1078
    %vm1080 = vweird.f32 %v1074
    %vm1081 = vweird.f32 %v1075
    %vm1082 = vmor %vm1080, %vm1081
    %v1083 = vsel %vm1082, %v1075, %v1079
    %v1084 = vand.u32 2147483647, %v1074
    %vm1085 = vcmp.eq.f32.partialorder %v1084, 8.507059e+37
    %v1086 = vand.u32 %v1074, 2147483648
    %v1087 = vor.u32 1.1754944e-38, %v1086
    %v1088 = vsel %vm1085, %v1087, %v1083
    %v1089 = vmul.f32 %v1071, %v1088
    %s1090 = scalar_lea.vmem [#allocation4], 8
    %1091 = vst.msk [vmem:[%s1090] sm:$0xff] %vm587, %v1089
    %1093 = vrot.lane.b32.xlu0 %v572, 120
    %v1094 = vpop.permute.xlu0 %1093
    %v1097 = vsel %vm587, %v1089, 0
    %1099 = vmatpush.msra.mxu0 0.0
    %1100 = vmatpush.msra.mxu0 0.0
    %1101 = vmatpush.msra.mxu0 0.0
    %1102 = vmatpush.msra.mxu0 0.0
    %1103 = vmatpush.msra.mxu0 0.0
    %1104 = vmatpush.msra.mxu0 0.0
    %1105 = vmatpush.msra.mxu0 0.0
    %1106 = vmatpush.msra.mxu0 0.0
    %1107 = vmatpush.msra.mxu0 0.0
    %1108 = vmatpush.msra.mxu0 0.0
    %1109 = vmatpush.msra.mxu0 0.0
    %1110 = vmatpush.msra.mxu0 0.0
    %1111 = vmatpush.msra.mxu0 0.0
    %1112 = vmatpush.msra.mxu0 0.0
    %1113 = vmatpush.msra.mxu0 0.0
    %v1114 = vand.u32 %v1094, 4294901760
    %1115 = vmatpush.msra.mxu0 %v1114
    %v1116 = vand.u32 %v1097, 4294901760
    %v1117 = vsub.f32 %v1097, %v1116
    %v1118 = vand.u32 %v1117, 4294901760
    %v1119 = vsub.f32 %v1117, %v1118
    %v1120 = vand.u32 %v1119, 4294901760
    %1121 = vmatmul.f32.gmra.mxu0 %v1120
    %v1122 = vpop.f32.mrf.mxu0
    %v1123 = vadd.f32 0.0, %v1122
    %1124 = vdwg.mxu0
    %1125 = vmatpush.msra.mxu0 0.0
    %1126 = vmatpush.msra.mxu0 0.0
    %1127 = vmatpush.msra.mxu0 0.0
    %1128 = vmatpush.msra.mxu0 0.0
    %1129 = vmatpush.msra.mxu0 0.0
    %1130 = vmatpush.msra.mxu0 0.0
    %1131 = vmatpush.msra.mxu0 0.0
    %1132 = vmatpush.msra.mxu0 0.0
    %1133 = vmatpush.msra.mxu0 0.0
    %1134 = vmatpush.msra.mxu0 0.0
    %1135 = vmatpush.msra.mxu0 0.0
    %1136 = vmatpush.msra.mxu0 0.0
    %1137 = vmatpush.msra.mxu0 0.0
    %1138 = vmatpush.msra.mxu0 0.0
    %1139 = vmatpush.msra.mxu0 0.0
    %v1140 = vand.u32 %v1094, 4294901760
    %v1141 = vsub.f32 %v1094, %v1140
    %v1142 = vand.u32 %v1141, 4294901760
    %v1143 = vsub.f32 %v1141, %v1142
    %v1144 = vand.u32 %v1143, 4294901760
    %1145 = vmatpush.msra.mxu0 %v1144
    %v1146 = vand.u32 %v1097, 4294901760
    %1147 = vmatmul.f32.gmra.mxu0 %v1146
    %v1148 = vpop.f32.mrf.mxu0
    %v1149 = vadd.f32 %v1123, %v1148
    %1150 = vdwg.mxu0
    %1151 = vmatpush.msra.mxu0 0.0
    %1152 = vmatpush.msra.mxu0 0.0
    %1153 = vmatpush.msra.mxu0 0.0
    %1154 = vmatpush.msra.mxu0 0.0
    %1155 = vmatpush.msra.mxu0 0.0
    %1156 = vmatpush.msra.mxu0 0.0
    %1157 = vmatpush.msra.mxu0 0.0
    %1158 = vmatpush.msra.mxu0 0.0
    %1159 = vmatpush.msra.mxu0 0.0
    %1160 = vmatpush.msra.mxu0 0.0
    %1161 = vmatpush.msra.mxu0 0.0
    %1162 = vmatpush.msra.mxu0 0.0
    %1163 = vmatpush.msra.mxu0 0.0
    %1164 = vmatpush.msra.mxu0 0.0
    %1165 = vmatpush.msra.mxu0 0.0
    %v1166 = vand.u32 %v1094, 4294901760
    %v1167 = vsub.f32 %v1094, %v1166
    %1168 = vmatpush.msra.mxu0 %v1167
    %v1169 = vand.u32 %v1097, 4294901760
    %v1170 = vsub.f32 %v1097, %v1169
    %1171 = vmatmul.f32.gmra.mxu0 %v1170
    %v1172 = vpop.f32.mrf.mxu0
    %v1173 = vadd.f32 %v1149, %v1172
    %1174 = vdwg.mxu0
    %1175 = vmatpush.msra.mxu0 0.0
    %1176 = vmatpush.msra.mxu0 0.0
    %1177 = vmatpush.msra.mxu0 0.0
    %1178 = vmatpush.msra.mxu0 0.0
    %1179 = vmatpush.msra.mxu0 0.0
    %1180 = vmatpush.msra.mxu0 0.0
    %1181 = vmatpush.msra.mxu0 0.0
    %1182 = vmatpush.msra.mxu0 0.0
    %1183 = vmatpush.msra.mxu0 0.0
    %1184 = vmatpush.msra.mxu0 0.0
    %1185 = vmatpush.msra.mxu0 0.0
    %1186 = vmatpush.msra.mxu0 0.0
    %1187 = vmatpush.msra.mxu0 0.0
    %1188 = vmatpush.msra.mxu0 0.0
    %1189 = vmatpush.msra.mxu0 0.0
    %v1190 = vand.u32 %v1094, 4294901760
    %1191 = vmatpush.msra.mxu0 %v1190
    %v1192 = vand.u32 %v1097, 4294901760
    %v1193 = vsub.f32 %v1097, %v1192
    %v1194 = vand.u32 %v1193, 4294901760
    %1195 = vmatmul.f32.gmra.mxu0 %v1194
    %v1196 = vpop.f32.mrf.mxu0
    %v1197 = vadd.f32 %v1173, %v1196
    %1198 = vdwg.mxu0
    %1199 = vmatpush.msra.mxu0 0.0
    %1200 = vmatpush.msra.mxu0 0.0
    %1201 = vmatpush.msra.mxu0 0.0
    %1202 = vmatpush.msra.mxu0 0.0
    %1203 = vmatpush.msra.mxu0 0.0
    %1204 = vmatpush.msra.mxu0 0.0
    %1205 = vmatpush.msra.mxu0 0.0
    %1206 = vmatpush.msra.mxu0 0.0
    %1207 = vmatpush.msra.mxu0 0.0
    %1208 = vmatpush.msra.mxu0 0.0
    %1209 = vmatpush.msra.mxu0 0.0
    %1210 = vmatpush.msra.mxu0 0.0
    %1211 = vmatpush.msra.mxu0 0.0
    %1212 = vmatpush.msra.mxu0 0.0
    %1213 = vmatpush.msra.mxu0 0.0
    %v1214 = vand.u32 %v1094, 4294901760
    %v1215 = vsub.f32 %v1094, %v1214
    %v1216 = vand.u32 %v1215, 4294901760
    %1217 = vmatpush.msra.mxu0 %v1216
    %v1218 = vand.u32 %v1097, 4294901760
    %1219 = vmatmul.f32.gmra.mxu0 %v1218
    %v1220 = vpop.f32.mrf.mxu0
    %v1221 = vadd.f32 %v1197, %v1220
    %1222 = vdwg.mxu0
    %1223 = vmatpush.msra.mxu0 0.0
    %1224 = vmatpush.msra.mxu0 0.0
    %1225 = vmatpush.msra.mxu0 0.0
    %1226 = vmatpush.msra.mxu0 0.0
    %1227 = vmatpush.msra.mxu0 0.0
    %1228 = vmatpush.msra.mxu0 0.0
    %1229 = vmatpush.msra.mxu0 0.0
    %1230 = vmatpush.msra.mxu0 0.0
    %1231 = vmatpush.msra.mxu0 0.0
    %1232 = vmatpush.msra.mxu0 0.0
    %1233 = vmatpush.msra.mxu0 0.0
    %1234 = vmatpush.msra.mxu0 0.0
    %1235 = vmatpush.msra.mxu0 0.0
    %1236 = vmatpush.msra.mxu0 0.0
    %1237 = vmatpush.msra.mxu0 0.0
    %v1238 = vand.u32 %v1094, 4294901760
    %1239 = vmatpush.msra.mxu0 %v1238
    %v1240 = vand.u32 %v1097, 4294901760
    %1241 = vmatmul.f32.gmra.mxu0 %v1240
    %v1242 = vpop.f32.mrf.mxu0
    %v1243 = vadd.f32 %v1221, %v1242
    %1244 = vdwg.mxu0
    %1245 = vrot.lane.b32.xlu0 %v346, 112
    %v1246 = vpop.permute.xlu0 %1245
    %1247 = vrot.lane.b32.xlu0 %v346, 80
    %v1248 = vpop.permute.xlu0 %1247
    %v1249 = vsel %vm587, %v1246, 0
    %v1251 = vsel %vm587, %v1248, 0
    %1253 = vmatpush.xpose.msra.mxu0 0.0
    %1254 = vmatpush.xpose.msra.mxu0 0.0
    %1255 = vmatpush.xpose.msra.mxu0 0.0
    %1256 = vmatpush.xpose.msra.mxu0 0.0
    %1257 = vmatpush.xpose.msra.mxu0 0.0
    %1258 = vmatpush.xpose.msra.mxu0 0.0
    %1259 = vmatpush.xpose.msra.mxu0 0.0
    %1260 = vmatpush.xpose.msra.mxu0 0.0
    %1261 = vmatpush.xpose.msra.mxu0 0.0
    %1262 = vmatpush.xpose.msra.mxu0 0.0
    %1263 = vmatpush.xpose.msra.mxu0 0.0
    %1264 = vmatpush.xpose.msra.mxu0 0.0
    %1265 = vmatpush.xpose.msra.mxu0 0.0
    %1266 = vmatpush.xpose.msra.mxu0 0.0
    %1267 = vmatpush.xpose.msra.mxu0 0.0
    %v1268 = vand.u32 %v1251, 4294901760
    %1269 = vmatpush.xpose.msra.mxu0 %v1268
    %v1270 = vand.u32 %v1249, 4294901760
    %v1271 = vsub.f32 %v1249, %v1270
    %v1272 = vand.u32 %v1271, 4294901760
    %v1273 = vsub.f32 %v1271, %v1272
    %v1274 = vand.u32 %v1273, 4294901760
    %1275 = vmatmul.f32.gmra.mxu0 %v1274
    %v1276 = vpop.f32.mrf.mxu0
    %v1277 = vadd.f32 %v583, %v1276
    %1278 = vdwg.mxu0
    %1279 = vmatpush.xpose.msra.mxu0 0.0
    %1280 = vmatpush.xpose.msra.mxu0 0.0
    %1281 = vmatpush.xpose.msra.mxu0 0.0
    %1282 = vmatpush.xpose.msra.mxu0 0.0
    %1283 = vmatpush.xpose.msra.mxu0 0.0
    %1284 = vmatpush.xpose.msra.mxu0 0.0
    %1285 = vmatpush.xpose.msra.mxu0 0.0
    %1286 = vmatpush.xpose.msra.mxu0 0.0
    %1287 = vmatpush.xpose.msra.mxu0 0.0
    %1288 = vmatpush.xpose.msra.mxu0 0.0
    %1289 = vmatpush.xpose.msra.mxu0 0.0
    %1290 = vmatpush.xpose.msra.mxu0 0.0
    %1291 = vmatpush.xpose.msra.mxu0 0.0
    %1292 = vmatpush.xpose.msra.mxu0 0.0
    %1293 = vmatpush.xpose.msra.mxu0 0.0
    %v1294 = vand.u32 %v1251, 4294901760
    %v1295 = vsub.f32 %v1251, %v1294
    %v1296 = vand.u32 %v1295, 4294901760
    %v1297 = vsub.f32 %v1295, %v1296
    %v1298 = vand.u32 %v1297, 4294901760
    %1299 = vmatpush.xpose.msra.mxu0 %v1298
    %v1300 = vand.u32 %v1249, 4294901760
    %1301 = vmatmul.f32.gmra.mxu0 %v1300
    %v1302 = vpop.f32.mrf.mxu0
    %v1303 = vadd.f32 %v1277, %v1302
    %1304 = vdwg.mxu0
    %1305 = vmatpush.xpose.msra.mxu0 0.0
    %1306 = vmatpush.xpose.msra.mxu0 0.0
    %1307 = vmatpush.xpose.msra.mxu0 0.0
    %1308 = vmatpush.xpose.msra.mxu0 0.0
    %1309 = vmatpush.xpose.msra.mxu0 0.0
    %1310 = vmatpush.xpose.msra.mxu0 0.0
    %1311 = vmatpush.xpose.msra.mxu0 0.0
    %1312 = vmatpush.xpose.msra.mxu0 0.0
    %1313 = vmatpush.xpose.msra.mxu0 0.0
    %1314 = vmatpush.xpose.msra.mxu0 0.0
    %1315 = vmatpush.xpose.msra.mxu0 0.0
    %1316 = vmatpush.xpose.msra.mxu0 0.0
    %1317 = vmatpush.xpose.msra.mxu0 0.0
    %1318 = vmatpush.xpose.msra.mxu0 0.0
    %1319 = vmatpush.xpose.msra.mxu0 0.0
    %v1320 = vand.u32 %v1251, 4294901760
    %v1321 = vsub.f32 %v1251, %v1320
    %1322 = vmatpush.xpose.msra.mxu0 %v1321
    %v1323 = vand.u32 %v1249, 4294901760
    %v1324 = vsub.f32 %v1249, %v1323
    %1325 = vmatmul.f32.gmra.mxu0 %v1324
    %v1326 = vpop.f32.mrf.mxu0
    %v1327 = vadd.f32 %v1303, %v1326
    %1328 = vdwg.mxu0
    %1329 = vmatpush.xpose.msra.mxu0 0.0
    %1330 = vmatpush.xpose.msra.mxu0 0.0
    %1331 = vmatpush.xpose.msra.mxu0 0.0
    %1332 = vmatpush.xpose.msra.mxu0 0.0
    %1333 = vmatpush.xpose.msra.mxu0 0.0
    %1334 = vmatpush.xpose.msra.mxu0 0.0
    %1335 = vmatpush.xpose.msra.mxu0 0.0
    %1336 = vmatpush.xpose.msra.mxu0 0.0
    %1337 = vmatpush.xpose.msra.mxu0 0.0
    %1338 = vmatpush.xpose.msra.mxu0 0.0
    %1339 = vmatpush.xpose.msra.mxu0 0.0
    %1340 = vmatpush.xpose.msra.mxu0 0.0
    %1341 = vmatpush.xpose.msra.mxu0 0.0
    %1342 = vmatpush.xpose.msra.mxu0 0.0
    %1343 = vmatpush.xpose.msra.mxu0 0.0
    %v1344 = vand.u32 %v1251, 4294901760
    %1345 = vmatpush.xpose.msra.mxu0 %v1344
    %v1346 = vand.u32 %v1249, 4294901760
    %v1347 = vsub.f32 %v1249, %v1346
    %v1348 = vand.u32 %v1347, 4294901760
    %1349 = vmatmul.f32.gmra.mxu0 %v1348
    %v1350 = vpop.f32.mrf.mxu0
    %v1351 = vadd.f32 %v1327, %v1350
    %1352 = vdwg.mxu0
    %1353 = vmatpush.xpose.msra.mxu0 0.0
    %1354 = vmatpush.xpose.msra.mxu0 0.0
    %1355 = vmatpush.xpose.msra.mxu0 0.0
    %1356 = vmatpush.xpose.msra.mxu0 0.0
    %1357 = vmatpush.xpose.msra.mxu0 0.0
    %1358 = vmatpush.xpose.msra.mxu0 0.0
    %1359 = vmatpush.xpose.msra.mxu0 0.0
    %1360 = vmatpush.xpose.msra.mxu0 0.0
    %1361 = vmatpush.xpose.msra.mxu0 0.0
    %1362 = vmatpush.xpose.msra.mxu0 0.0
    %1363 = vmatpush.xpose.msra.mxu0 0.0
    %1364 = vmatpush.xpose.msra.mxu0 0.0
    %1365 = vmatpush.xpose.msra.mxu0 0.0
    %1366 = vmatpush.xpose.msra.mxu0 0.0
    %1367 = vmatpush.xpose.msra.mxu0 0.0
    %v1368 = vand.u32 %v1251, 4294901760
    %v1369 = vsub.f32 %v1251, %v1368
    %v1370 = vand.u32 %v1369, 4294901760
    %1371 = vmatpush.xpose.msra.mxu0 %v1370
    %v1372 = vand.u32 %v1249, 4294901760
    %1373 = vmatmul.f32.gmra.mxu0 %v1372
    %v1374 = vpop.f32.mrf.mxu0
    %v1375 = vadd.f32 %v1351, %v1374
    %1376 = vdwg.mxu0
    %1377 = vmatpush.xpose.msra.mxu0 0.0
    %1378 = vmatpush.xpose.msra.mxu0 0.0
    %1379 = vmatpush.xpose.msra.mxu0 0.0
    %1380 = vmatpush.xpose.msra.mxu0 0.0
    %1381 = vmatpush.xpose.msra.mxu0 0.0
    %1382 = vmatpush.xpose.msra.mxu0 0.0
    %1383 = vmatpush.xpose.msra.mxu0 0.0
    %1384 = vmatpush.xpose.msra.mxu0 0.0
    %1385 = vmatpush.xpose.msra.mxu0 0.0
    %1386 = vmatpush.xpose.msra.mxu0 0.0
    %1387 = vmatpush.xpose.msra.mxu0 0.0
    %1388 = vmatpush.xpose.msra.mxu0 0.0
    %1389 = vmatpush.xpose.msra.mxu0 0.0
    %1390 = vmatpush.xpose.msra.mxu0 0.0
    %1391 = vmatpush.xpose.msra.mxu0 0.0
    %v1392 = vand.u32 %v1251, 4294901760
    %1393 = vmatpush.xpose.msra.mxu0 %v1392
    %v1394 = vand.u32 %v1249, 4294901760
    %1395 = vmatmul.f32.gmra.mxu0 %v1394
    %v1396 = vpop.f32.mrf.mxu0
    %v1397 = vadd.f32 %v1375, %v1396
    %1398 = vdwg.mxu0
    %v1399 = vsel %vm587, %v1397, -inf
    %1400 = vmax.xlane.f32.xlu0 %v1399
    %v1401 = vpop.xlane.xlu0 %1400
    %v1402 = vsub.f32 %v1397, %v1401
    %v1403 = vmul.f32 %v1402, 1.442695
    %v1404 = vpow.pop %v1403
    %v1405 = vsel %vm587, %v1404, 0.0
    %1406 = vadd.xlane.f32.xlu0 %v1405
    %v1407 = vpop.xlane.xlu0 %1406
    %v1408 = vrcp.pop %v1407
    %v1409 = vmul.f32 %v1407, %v1408
    %v1410 = vsub.f32 1.0, %v1409
    %v1411 = vmul.f32 %v1408, %v1410
    %v1412 = vadd.f32 %v1408, %v1411
    %vm1413 = vweird.f32 %v1407
    %vm1414 = vweird.f32 %v1408
    %vm1415 = vmor %vm1413, %vm1414
    %v1416 = vsel %vm1415, %v1408, %v1412
    %v1417 = vand.u32 2147483647, %v1407
    %vm1418 = vcmp.eq.f32.partialorder %v1417, 8.507059e+37
    %v1419 = vand.u32 %v1407, 2147483648
    %v1420 = vor.u32 1.1754944e-38, %v1419
    %v1421 = vsel %vm1418, %v1420, %v1416
    %v1422 = vmul.f32 %v1404, %v1421
    %s1423 = scalar_lea.vmem [#allocation4], 16
    %1424 = vst.msk [vmem:[%s1423] sm:$0xff] %vm587, %v1422
    %1425 = vrot.lane.b32.xlu0 %v572, 112
    %v1426 = vpop.permute.xlu0 %1425
    %v1429 = vsel %vm587, %v1422, 0
    %1431 = vmatpush.msra.mxu0 0.0
    %1432 = vmatpush.msra.mxu0 0.0
    %1433 = vmatpush.msra.mxu0 0.0
    %1434 = vmatpush.msra.mxu0 0.0
    %1435 = vmatpush.msra.mxu0 0.0
    %1436 = vmatpush.msra.mxu0 0.0
    %1437 = vmatpush.msra.mxu0 0.0
    %1438 = vmatpush.msra.mxu0 0.0
    %1439 = vmatpush.msra.mxu0 0.0
    %1440 = vmatpush.msra.mxu0 0.0
    %1441 = vmatpush.msra.mxu0 0.0
    %1442 = vmatpush.msra.mxu0 0.0
    %1443 = vmatpush.msra.mxu0 0.0
    %1444 = vmatpush.msra.mxu0 0.0
    %1445 = vmatpush.msra.mxu0 0.0
    %v1446 = vand.u32 %v1426, 4294901760
    %1447 = vmatpush.msra.mxu0 %v1446
    %v1448 = vand.u32 %v1429, 4294901760
    %v1449 = vsub.f32 %v1429, %v1448
    %v1450 = vand.u32 %v1449, 4294901760
    %v1451 = vsub.f32 %v1449, %v1450
    %v1452 = vand.u32 %v1451, 4294901760
    %1453 = vmatmul.f32.gmra.mxu0 %v1452
    %v1454 = vpop.f32.mrf.mxu0
    %v1455 = vadd.f32 0.0, %v1454
    %1456 = vdwg.mxu0
    %1457 = vmatpush.msra.mxu0 0.0
    %1458 = vmatpush.msra.mxu0 0.0
    %1459 = vmatpush.msra.mxu0 0.0
    %1460 = vmatpush.msra.mxu0 0.0
    %1461 = vmatpush.msra.mxu0 0.0
    %1462 = vmatpush.msra.mxu0 0.0
    %1463 = vmatpush.msra.mxu0 0.0
    %1464 = vmatpush.msra.mxu0 0.0
    %1465 = vmatpush.msra.mxu0 0.0
    %1466 = vmatpush.msra.mxu0 0.0
    %1467 = vmatpush.msra.mxu0 0.0
    %1468 = vmatpush.msra.mxu0 0.0
    %1469 = vmatpush.msra.mxu0 0.0
    %1470 = vmatpush.msra.mxu0 0.0
    %1471 = vmatpush.msra.mxu0 0.0
    %v1472 = vand.u32 %v1426, 4294901760
    %v1473 = vsub.f32 %v1426, %v1472
    %v1474 = vand.u32 %v1473, 4294901760
    %v1475 = vsub.f32 %v1473, %v1474
    %v1476 = vand.u32 %v1475, 4294901760
    %1477 = vmatpush.msra.mxu0 %v1476
    %v1478 = vand.u32 %v1429, 4294901760
    %1479 = vmatmul.f32.gmra.mxu0 %v1478
    %v1480 = vpop.f32.mrf.mxu0
    %v1481 = vadd.f32 %v1455, %v1480
    %1482 = vdwg.mxu0
    %1483 = vmatpush.msra.mxu0 0.0
    %1484 = vmatpush.msra.mxu0 0.0
    %1485 = vmatpush.msra.mxu0 0.0
    %1486 = vmatpush.msra.mxu0 0.0
    %1487 = vmatpush.msra.mxu0 0.0
    %1488 = vmatpush.msra.mxu0 0.0
    %1489 = vmatpush.msra.mxu0 0.0
    %1490 = vmatpush.msra.mxu0 0.0
    %1491 = vmatpush.msra.mxu0 0.0
    %1492 = vmatpush.msra.mxu0 0.0
    %1493 = vmatpush.msra.mxu0 0.0
    %1494 = vmatpush.msra.mxu0 0.0
    %1495 = vmatpush.msra.mxu0 0.0
    %1496 = vmatpush.msra.mxu0 0.0
    %1497 = vmatpush.msra.mxu0 0.0
    %v1498 = vand.u32 %v1426, 4294901760
    %v1499 = vsub.f32 %v1426, %v1498
    %1500 = vmatpush.msra.mxu0 %v1499
    %v1501 = vand.u32 %v1429, 4294901760
    %v1502 = vsub.f32 %v1429, %v1501
    %1503 = vmatmul.f32.gmra.mxu0 %v1502
    %v1504 = vpop.f32.mrf.mxu0
    %v1505 = vadd.f32 %v1481, %v1504
    %1506 = vdwg.mxu0
    %1507 = vmatpush.msra.mxu0 0.0
    %1508 = vmatpush.msra.mxu0 0.0
    %1509 = vmatpush.msra.mxu0 0.0
    %1510 = vmatpush.msra.mxu0 0.0
    %1511 = vmatpush.msra.mxu0 0.0
    %1512 = vmatpush.msra.mxu0 0.0
    %1513 = vmatpush.msra.mxu0 0.0
    %1514 = vmatpush.msra.mxu0 0.0
    %1515 = vmatpush.msra.mxu0 0.0
    %1516 = vmatpush.msra.mxu0 0.0
    %1517 = vmatpush.msra.mxu0 0.0
    %1518 = vmatpush.msra.mxu0 0.0
    %1519 = vmatpush.msra.mxu0 0.0
    %1520 = vmatpush.msra.mxu0 0.0
    %1521 = vmatpush.msra.mxu0 0.0
    %v1522 = vand.u32 %v1426, 4294901760
    %1523 = vmatpush.msra.mxu0 %v1522
    %v1524 = vand.u32 %v1429, 4294901760
    %v1525 = vsub.f32 %v1429, %v1524
    %v1526 = vand.u32 %v1525, 4294901760
    %1527 = vmatmul.f32.gmra.mxu0 %v1526
    %v1528 = vpop.f32.mrf.mxu0
    %v1529 = vadd.f32 %v1505, %v1528
    %1530 = vdwg.mxu0
    %1531 = vmatpush.msra.mxu0 0.0
    %1532 = vmatpush.msra.mxu0 0.0
    %1533 = vmatpush.msra.mxu0 0.0
    %1534 = vmatpush.msra.mxu0 0.0
    %1535 = vmatpush.msra.mxu0 0.0
    %1536 = vmatpush.msra.mxu0 0.0
    %1537 = vmatpush.msra.mxu0 0.0
    %1538 = vmatpush.msra.mxu0 0.0
    %1539 = vmatpush.msra.mxu0 0.0
    %1540 = vmatpush.msra.mxu0 0.0
    %1541 = vmatpush.msra.mxu0 0.0
    %1542 = vmatpush.msra.mxu0 0.0
    %1543 = vmatpush.msra.mxu0 0.0
    %1544 = vmatpush.msra.mxu0 0.0
    %1545 = vmatpush.msra.mxu0 0.0
    %v1546 = vand.u32 %v1426, 4294901760
    %v1547 = vsub.f32 %v1426, %v1546
    %v1548 = vand.u32 %v1547, 4294901760
    %1549 = vmatpush.msra.mxu0 %v1548
    %v1550 = vand.u32 %v1429, 4294901760
    %1551 = vmatmul.f32.gmra.mxu0 %v1550
    %v1552 = vpop.f32.mrf.mxu0
    %v1553 = vadd.f32 %v1529, %v1552
    %1554 = vdwg.mxu0
    %1555 = vmatpush.msra.mxu0 0.0
    %1556 = vmatpush.msra.mxu0 0.0
    %1557 = vmatpush.msra.mxu0 0.0
    %1558 = vmatpush.msra.mxu0 0.0
    %1559 = vmatpush.msra.mxu0 0.0
    %1560 = vmatpush.msra.mxu0 0.0
    %1561 = vmatpush.msra.mxu0 0.0
    %1562 = vmatpush.msra.mxu0 0.0
    %1563 = vmatpush.msra.mxu0 0.0
    %1564 = vmatpush.msra.mxu0 0.0
    %1565 = vmatpush.msra.mxu0 0.0
    %1566 = vmatpush.msra.mxu0 0.0
    %1567 = vmatpush.msra.mxu0 0.0
    %1568 = vmatpush.msra.mxu0 0.0
    %1569 = vmatpush.msra.mxu0 0.0
    %v1570 = vand.u32 %v1426, 4294901760
    %1571 = vmatpush.msra.mxu0 %v1570
    %v1572 = vand.u32 %v1429, 4294901760
    %1573 = vmatmul.f32.gmra.mxu0 %v1572
    %v1574 = vpop.f32.mrf.mxu0
    %v1575 = vadd.f32 %v1553, %v1574
    %1576 = vdwg.mxu0
    %1577 = vrot.lane.b32.xlu0 %v346, 104
    %v1578 = vpop.permute.xlu0 %1577
    %1579 = vrot.lane.b32.xlu0 %v346, 72
    %v1580 = vpop.permute.xlu0 %1579
    %v1581 = vsel %vm587, %v1578, 0
    %v1583 = vsel %vm587, %v1580, 0
    %1585 = vmatpush.xpose.msra.mxu0 0.0
    %1586 = vmatpush.xpose.msra.mxu0 0.0
    %1587 = vmatpush.xpose.msra.mxu0 0.0
    %1588 = vmatpush.xpose.msra.mxu0 0.0
    %1589 = vmatpush.xpose.msra.mxu0 0.0
    %1590 = vmatpush.xpose.msra.mxu0 0.0
    %1591 = vmatpush.xpose.msra.mxu0 0.0
    %1592 = vmatpush.xpose.msra.mxu0 0.0
    %1593 = vmatpush.xpose.msra.mxu0 0.0
    %1594 = vmatpush.xpose.msra.mxu0 0.0
    %1595 = vmatpush.xpose.msra.mxu0 0.0
    %1596 = vmatpush.xpose.msra.mxu0 0.0
    %1597 = vmatpush.xpose.msra.mxu0 0.0
    %1598 = vmatpush.xpose.msra.mxu0 0.0
    %1599 = vmatpush.xpose.msra.mxu0 0.0
    %v1600 = vand.u32 %v1583, 4294901760
    %1601 = vmatpush.xpose.msra.mxu0 %v1600
    %v1602 = vand.u32 %v1581, 4294901760
    %v1603 = vsub.f32 %v1581, %v1602
    %v1604 = vand.u32 %v1603, 4294901760
    %v1605 = vsub.f32 %v1603, %v1604
    %v1606 = vand.u32 %v1605, 4294901760
    %1607 = vmatmul.f32.gmra.mxu0 %v1606
    %v1608 = vpop.f32.mrf.mxu0
    %v1609 = vadd.f32 %v583, %v1608
    %1610 = vdwg.mxu0
    %1611 = vmatpush.xpose.msra.mxu0 0.0
    %1612 = vmatpush.xpose.msra.mxu0 0.0
    %1613 = vmatpush.xpose.msra.mxu0 0.0
    %1614 = vmatpush.xpose.msra.mxu0 0.0
    %1615 = vmatpush.xpose.msra.mxu0 0.0
    %1616 = vmatpush.xpose.msra.mxu0 0.0
    %1617 = vmatpush.xpose.msra.mxu0 0.0
    %1618 = vmatpush.xpose.msra.mxu0 0.0
    %1619 = vmatpush.xpose.msra.mxu0 0.0
    %1620 = vmatpush.xpose.msra.mxu0 0.0
    %1621 = vmatpush.xpose.msra.mxu0 0.0
    %1622 = vmatpush.xpose.msra.mxu0 0.0
    %1623 = vmatpush.xpose.msra.mxu0 0.0
    %1624 = vmatpush.xpose.msra.mxu0 0.0
    %1625 = vmatpush.xpose.msra.mxu0 0.0
    %v1626 = vand.u32 %v1583, 4294901760
    %v1627 = vsub.f32 %v1583, %v1626
    %v1628 = vand.u32 %v1627, 4294901760
    %v1629 = vsub.f32 %v1627, %v1628
    %v1630 = vand.u32 %v1629, 4294901760
    %1631 = vmatpush.xpose.msra.mxu0 %v1630
    %v1632 = vand.u32 %v1581, 4294901760
    %1633 = vmatmul.f32.gmra.mxu0 %v1632
    %v1634 = vpop.f32.mrf.mxu0
    %v1635 = vadd.f32 %v1609, %v1634
    %1636 = vdwg.mxu0
    %1637 = vmatpush.xpose.msra.mxu0 0.0
    %1638 = vmatpush.xpose.msra.mxu0 0.0
    %1639 = vmatpush.xpose.msra.mxu0 0.0
    %1640 = vmatpush.xpose.msra.mxu0 0.0
    %1641 = vmatpush.xpose.msra.mxu0 0.0
    %1642 = vmatpush.xpose.msra.mxu0 0.0
    %1643 = vmatpush.xpose.msra.mxu0 0.0
    %1644 = vmatpush.xpose.msra.mxu0 0.0
    %1645 = vmatpush.xpose.msra.mxu0 0.0
    %1646 = vmatpush.xpose.msra.mxu0 0.0
    %1647 = vmatpush.xpose.msra.mxu0 0.0
    %1648 = vmatpush.xpose.msra.mxu0 0.0
    %1649 = vmatpush.xpose.msra.mxu0 0.0
    %1650 = vmatpush.xpose.msra.mxu0 0.0
    %1651 = vmatpush.xpose.msra.mxu0 0.0
    %v1652 = vand.u32 %v1583, 4294901760
    %v1653 = vsub.f32 %v1583, %v1652
    %1654 = vmatpush.xpose.msra.mxu0 %v1653
    %v1655 = vand.u32 %v1581, 4294901760
    %v1656 = vsub.f32 %v1581, %v1655
    %1657 = vmatmul.f32.gmra.mxu0 %v1656
    %v1658 = vpop.f32.mrf.mxu0
    %v1659 = vadd.f32 %v1635, %v1658
    %1660 = vdwg.mxu0
    %1661 = vmatpush.xpose.msra.mxu0 0.0
    %1662 = vmatpush.xpose.msra.mxu0 0.0
    %1663 = vmatpush.xpose.msra.mxu0 0.0
    %1664 = vmatpush.xpose.msra.mxu0 0.0
    %1665 = vmatpush.xpose.msra.mxu0 0.0
    %1666 = vmatpush.xpose.msra.mxu0 0.0
    %1667 = vmatpush.xpose.msra.mxu0 0.0
    %1668 = vmatpush.xpose.msra.mxu0 0.0
    %1669 = vmatpush.xpose.msra.mxu0 0.0
    %1670 = vmatpush.xpose.msra.mxu0 0.0
    %1671 = vmatpush.xpose.msra.mxu0 0.0
    %1672 = vmatpush.xpose.msra.mxu0 0.0
    %1673 = vmatpush.xpose.msra.mxu0 0.0
    %1674 = vmatpush.xpose.msra.mxu0 0.0
    %1675 = vmatpush.xpose.msra.mxu0 0.0
    %v1676 = vand.u32 %v1583, 4294901760
    %1677 = vmatpush.xpose.msra.mxu0 %v1676
    %v1678 = vand.u32 %v1581, 4294901760
    %v1679 = vsub.f32 %v1581, %v1678
    %v1680 = vand.u32 %v1679, 4294901760
    %1681 = vmatmul.f32.gmra.mxu0 %v1680
    %v1682 = vpop.f32.mrf.mxu0
    %v1683 = vadd.f32 %v1659, %v1682
    %1684 = vdwg.mxu0
    %1685 = vmatpush.xpose.msra.mxu0 0.0
    %1686 = vmatpush.xpose.msra.mxu0 0.0
    %1687 = vmatpush.xpose.msra.mxu0 0.0
    %1688 = vmatpush.xpose.msra.mxu0 0.0
    %1689 = vmatpush.xpose.msra.mxu0 0.0
    %1690 = vmatpush.xpose.msra.mxu0 0.0
    %1691 = vmatpush.xpose.msra.mxu0 0.0
    %1692 = vmatpush.xpose.msra.mxu0 0.0
    %1693 = vmatpush.xpose.msra.mxu0 0.0
    %1694 = vmatpush.xpose.msra.mxu0 0.0
    %1695 = vmatpush.xpose.msra.mxu0 0.0
    %1696 = vmatpush.xpose.msra.mxu0 0.0
    %1697 = vmatpush.xpose.msra.mxu0 0.0
    %1698 = vmatpush.xpose.msra.mxu0 0.0
    %1699 = vmatpush.xpose.msra.mxu0 0.0
    %v1700 = vand.u32 %v1583, 4294901760
    %v1701 = vsub.f32 %v1583, %v1700
    %v1702 = vand.u32 %v1701, 4294901760
    %1703 = vmatpush.xpose.msra.mxu0 %v1702
    %v1704 = vand.u32 %v1581, 4294901760
    %1705 = vmatmul.f32.gmra.mxu0 %v1704
    %v1706 = vpop.f32.mrf.mxu0
    %v1707 = vadd.f32 %v1683, %v1706
    %1708 = vdwg.mxu0
    %1709 = vmatpush.xpose.msra.mxu0 0.0
    %1710 = vmatpush.xpose.msra.mxu0 0.0
    %1711 = vmatpush.xpose.msra.mxu0 0.0
    %1712 = vmatpush.xpose.msra.mxu0 0.0
    %1713 = vmatpush.xpose.msra.mxu0 0.0
    %1714 = vmatpush.xpose.msra.mxu0 0.0
    %1715 = vmatpush.xpose.msra.mxu0 0.0
    %1716 = vmatpush.xpose.msra.mxu0 0.0
    %1717 = vmatpush.xpose.msra.mxu0 0.0
    %1718 = vmatpush.xpose.msra.mxu0 0.0
    %1719 = vmatpush.xpose.msra.mxu0 0.0
    %1720 = vmatpush.xpose.msra.mxu0 0.0
    %1721 = vmatpush.xpose.msra.mxu0 0.0
    %1722 = vmatpush.xpose.msra.mxu0 0.0
    %1723 = vmatpush.xpose.msra.mxu0 0.0
    %v1724 = vand.u32 %v1583, 4294901760
    %1725 = vmatpush.xpose.msra.mxu0 %v1724
    %v1726 = vand.u32 %v1581, 4294901760
    %1727 = vmatmul.f32.gmra.mxu0 %v1726
    %v1728 = vpop.f32.mrf.mxu0
    %v1729 = vadd.f32 %v1707, %v1728
    %1730 = vdwg.mxu0
    %v1731 = vsel %vm587, %v1729, -inf
    %1732 = vmax.xlane.f32.xlu0 %v1731
    %v1733 = vpop.xlane.xlu0 %1732
    %v1734 = vsub.f32 %v1729, %v1733
    %v1735 = vmul.f32 %v1734, 1.442695
    %v1736 = vpow.pop %v1735
    %v1737 = vsel %vm587, %v1736, 0.0
    %1738 = vadd.xlane.f32.xlu0 %v1737
    %v1739 = vpop.xlane.xlu0 %1738
    %v1740 = vrcp.pop %v1739
    %v1741 = vmul.f32 %v1739, %v1740
    %v1742 = vsub.f32 1.0, %v1741
    %v1743 = vmul.f32 %v1740, %v1742
    %v1744 = vadd.f32 %v1740, %v1743
    %vm1745 = vweird.f32 %v1739
    %vm1746 = vweird.f32 %v1740
    %vm1747 = vmor %vm1745, %vm1746
    %v1748 = vsel %vm1747, %v1740, %v1744
    %v1749 = vand.u32 2147483647, %v1739
    %vm1750 = vcmp.eq.f32.partialorder %v1749, 8.507059e+37
    %v1751 = vand.u32 %v1739, 2147483648
    %v1752 = vor.u32 1.1754944e-38, %v1751
    %v1753 = vsel %vm1750, %v1752, %v1748
    %v1754 = vmul.f32 %v1736, %v1753
    %s1755 = scalar_lea.vmem [#allocation4], 24
    %1756 = vst.msk [vmem:[%s1755] sm:$0xff] %vm587, %v1754
    %1757 = vrot.lane.b32.xlu0 %v572, 104
    %v1758 = vpop.permute.xlu0 %1757
    %v1761 = vsel %vm587, %v1754, 0
    %1763 = vmatpush.msra.mxu0 0.0
    %1764 = vmatpush.msra.mxu0 0.0
    %1765 = vmatpush.msra.mxu0 0.0
    %1766 = vmatpush.msra.mxu0 0.0
    %1767 = vmatpush.msra.mxu0 0.0
    %1768 = vmatpush.msra.mxu0 0.0
    %1769 = vmatpush.msra.mxu0 0.0
    %1770 = vmatpush.msra.mxu0 0.0
    %1771 = vmatpush.msra.mxu0 0.0
    %1772 = vmatpush.msra.mxu0 0.0
    %1773 = vmatpush.msra.mxu0 0.0
    %1774 = vmatpush.msra.mxu0 0.0
    %1775 = vmatpush.msra.mxu0 0.0
    %1776 = vmatpush.msra.mxu0 0.0
    %1777 = vmatpush.msra.mxu0 0.0
    %v1778 = vand.u32 %v1758, 4294901760
    %1779 = vmatpush.msra.mxu0 %v1778
    %v1780 = vand.u32 %v1761, 4294901760
    %v1781 = vsub.f32 %v1761, %v1780
    %v1782 = vand.u32 %v1781, 4294901760
    %v1783 = vsub.f32 %v1781, %v1782
    %v1784 = vand.u32 %v1783, 4294901760
    %1785 = vmatmul.f32.gmra.mxu0 %v1784
    %v1786 = vpop.f32.mrf.mxu0
    %v1787 = vadd.f32 0.0, %v1786
    %1788 = vdwg.mxu0
    %1789 = vmatpush.msra.mxu0 0.0
    %1790 = vmatpush.msra.mxu0 0.0
    %1791 = vmatpush.msra.mxu0 0.0
    %1792 = vmatpush.msra.mxu0 0.0
    %1793 = vmatpush.msra.mxu0 0.0
    %1794 = vmatpush.msra.mxu0 0.0
    %1795 = vmatpush.msra.mxu0 0.0
    %1796 = vmatpush.msra.mxu0 0.0
    %1797 = vmatpush.msra.mxu0 0.0
    %1798 = vmatpush.msra.mxu0 0.0
    %1799 = vmatpush.msra.mxu0 0.0
    %1800 = vmatpush.msra.mxu0 0.0
    %1801 = vmatpush.msra.mxu0 0.0
    %1802 = vmatpush.msra.mxu0 0.0
    %1803 = vmatpush.msra.mxu0 0.0
    %v1804 = vand.u32 %v1758, 4294901760
    %v1805 = vsub.f32 %v1758, %v1804
    %v1806 = vand.u32 %v1805, 4294901760
    %v1807 = vsub.f32 %v1805, %v1806
    %v1808 = vand.u32 %v1807, 4294901760
    %1809 = vmatpush.msra.mxu0 %v1808
    %v1810 = vand.u32 %v1761, 4294901760
    %1811 = vmatmul.f32.gmra.mxu0 %v1810
    %v1812 = vpop.f32.mrf.mxu0
    %v1813 = vadd.f32 %v1787, %v1812
    %1814 = vdwg.mxu0
    %1815 = vmatpush.msra.mxu0 0.0
    %1816 = vmatpush.msra.mxu0 0.0
    %1817 = vmatpush.msra.mxu0 0.0
    %1818 = vmatpush.msra.mxu0 0.0
    %1819 = vmatpush.msra.mxu0 0.0
    %1820 = vmatpush.msra.mxu0 0.0
    %1821 = vmatpush.msra.mxu0 0.0
    %1822 = vmatpush.msra.mxu0 0.0
    %1823 = vmatpush.msra.mxu0 0.0
    %1824 = vmatpush.msra.mxu0 0.0
    %1825 = vmatpush.msra.mxu0 0.0
    %1826 = vmatpush.msra.mxu0 0.0
    %1827 = vmatpush.msra.mxu0 0.0
    %1828 = vmatpush.msra.mxu0 0.0
    %1829 = vmatpush.msra.mxu0 0.0
    %v1830 = vand.u32 %v1758, 4294901760
    %v1831 = vsub.f32 %v1758, %v1830
    %1832 = vmatpush.msra.mxu0 %v1831
    %v1833 = vand.u32 %v1761, 4294901760
    %v1834 = vsub.f32 %v1761, %v1833
    %1835 = vmatmul.f32.gmra.mxu0 %v1834
    %v1836 = vpop.f32.mrf.mxu0
    %v1837 = vadd.f32 %v1813, %v1836
    %1838 = vdwg.mxu0
    %1839 = vmatpush.msra.mxu0 0.0
    %1840 = vmatpush.msra.mxu0 0.0
    %1841 = vmatpush.msra.mxu0 0.0
    %1842 = vmatpush.msra.mxu0 0.0
    %1843 = vmatpush.msra.mxu0 0.0
    %1844 = vmatpush.msra.mxu0 0.0
    %1845 = vmatpush.msra.mxu0 0.0
    %1846 = vmatpush.msra.mxu0 0.0
    %1847 = vmatpush.msra.mxu0 0.0
    %1848 = vmatpush.msra.mxu0 0.0
    %1849 = vmatpush.msra.mxu0 0.0
    %1850 = vmatpush.msra.mxu0 0.0
    %1851 = vmatpush.msra.mxu0 0.0
    %1852 = vmatpush.msra.mxu0 0.0
    %1853 = vmatpush.msra.mxu0 0.0
    %v1854 = vand.u32 %v1758, 4294901760
    %1855 = vmatpush.msra.mxu0 %v1854
    %v1856 = vand.u32 %v1761, 4294901760
    %v1857 = vsub.f32 %v1761, %v1856
    %v1858 = vand.u32 %v1857, 4294901760
    %1859 = vmatmul.f32.gmra.mxu0 %v1858
    %v1860 = vpop.f32.mrf.mxu0
    %v1861 = vadd.f32 %v1837, %v1860
    %1862 = vdwg.mxu0
    %1863 = vmatpush.msra.mxu0 0.0
    %1864 = vmatpush.msra.mxu0 0.0
    %1865 = vmatpush.msra.mxu0 0.0
    %1866 = vmatpush.msra.mxu0 0.0
    %1867 = vmatpush.msra.mxu0 0.0
    %1868 = vmatpush.msra.mxu0 0.0
    %1869 = vmatpush.msra.mxu0 0.0
    %1870 = vmatpush.msra.mxu0 0.0
    %1871 = vmatpush.msra.mxu0 0.0
    %1872 = vmatpush.msra.mxu0 0.0
    %1873 = vmatpush.msra.mxu0 0.0
    %1874 = vmatpush.msra.mxu0 0.0
    %1875 = vmatpush.msra.mxu0 0.0
    %1876 = vmatpush.msra.mxu0 0.0
    %1877 = vmatpush.msra.mxu0 0.0
    %v1878 = vand.u32 %v1758, 4294901760
    %v1879 = vsub.f32 %v1758, %v1878
    %v1880 = vand.u32 %v1879, 4294901760
    %1881 = vmatpush.msra.mxu0 %v1880
    %v1882 = vand.u32 %v1761, 4294901760
    %1883 = vmatmul.f32.gmra.mxu0 %v1882
    %v1884 = vpop.f32.mrf.mxu0
    %v1885 = vadd.f32 %v1861, %v1884
    %1886 = vdwg.mxu0
    %1887 = vmatpush.msra.mxu0 0.0
    %1888 = vmatpush.msra.mxu0 0.0
    %1889 = vmatpush.msra.mxu0 0.0
    %1890 = vmatpush.msra.mxu0 0.0
    %1891 = vmatpush.msra.mxu0 0.0
    %1892 = vmatpush.msra.mxu0 0.0
    %1893 = vmatpush.msra.mxu0 0.0
    %1894 = vmatpush.msra.mxu0 0.0
    %1895 = vmatpush.msra.mxu0 0.0
    %1896 = vmatpush.msra.mxu0 0.0
    %1897 = vmatpush.msra.mxu0 0.0
    %1898 = vmatpush.msra.mxu0 0.0
    %1899 = vmatpush.msra.mxu0 0.0
    %1900 = vmatpush.msra.mxu0 0.0
    %1901 = vmatpush.msra.mxu0 0.0
    %v1902 = vand.u32 %v1758, 4294901760
    %1903 = vmatpush.msra.mxu0 %v1902
    %v1904 = vand.u32 %v1761, 4294901760
    %1905 = vmatmul.f32.gmra.mxu0 %v1904
    %v1906 = vpop.f32.mrf.mxu0
    %v1907 = vadd.f32 %v1885, %v1906
    %1908 = vdwg.mxu0
    %1910 = vrot.lane.b32.xlu0 %v1243, 8
    %v1911 = vpop.permute.xlu0 %1910
    %1914 = vrot.lane.b32.xlu0 %v1575, 16
    %v1915 = vpop.permute.xlu0 %1914
    %1918 = vrot.lane.b32.xlu0 %v1907, 24
    %v1919 = vpop.permute.xlu0 %1918
    %v1921 = vsel %vm587, %v910, %v1911
    %vm1922 = vcmask 130048
    %v1923 = vsel %vm1922, %v1921, %v1915
    %vm1924 = vcmask 195584
    %v1925 = vsel %vm1924, %v1923, %v1919
    %1927 = vrot.lane.b32.xlu0 %v350, 96
    %v1928 = vpop.permute.xlu0 %1927
    %v1929 = vsel %vm587, %v350, 0
    %v1931 = vsel %vm587, %v1928, 0
    %1933 = vmatpush.xpose.msra.mxu0 0.0
    %1934 = vmatpush.xpose.msra.mxu0 0.0
    %1935 = vmatpush.xpose.msra.mxu0 0.0
    %1936 = vmatpush.xpose.msra.mxu0 0.0
    %1937 = vmatpush.xpose.msra.mxu0 0.0
    %1938 = vmatpush.xpose.msra.mxu0 0.0
    %1939 = vmatpush.xpose.msra.mxu0 0.0
    %1940 = vmatpush.xpose.msra.mxu0 0.0
    %1941 = vmatpush.xpose.msra.mxu0 0.0
    %1942 = vmatpush.xpose.msra.mxu0 0.0
    %1943 = vmatpush.xpose.msra.mxu0 0.0
    %1944 = vmatpush.xpose.msra.mxu0 0.0
    %1945 = vmatpush.xpose.msra.mxu0 0.0
    %1946 = vmatpush.xpose.msra.mxu0 0.0
    %1947 = vmatpush.xpose.msra.mxu0 0.0
    %v1948 = vand.u32 %v1931, 4294901760
    %1949 = vmatpush.xpose.msra.mxu0 %v1948
    %v1950 = vand.u32 %v1929, 4294901760
    %v1951 = vsub.f32 %v1929, %v1950
    %v1952 = vand.u32 %v1951, 4294901760
    %v1953 = vsub.f32 %v1951, %v1952
    %v1954 = vand.u32 %v1953, 4294901760
    %1955 = vmatmul.f32.gmra.mxu0 %v1954
    %v1956 = vpop.f32.mrf.mxu0
    %v1957 = vadd.f32 %v583, %v1956
    %1958 = vdwg.mxu0
    %1959 = vmatpush.xpose.msra.mxu0 0.0
    %1960 = vmatpush.xpose.msra.mxu0 0.0
    %1961 = vmatpush.xpose.msra.mxu0 0.0
    %1962 = vmatpush.xpose.msra.mxu0 0.0
    %1963 = vmatpush.xpose.msra.mxu0 0.0
    %1964 = vmatpush.xpose.msra.mxu0 0.0
    %1965 = vmatpush.xpose.msra.mxu0 0.0
    %1966 = vmatpush.xpose.msra.mxu0 0.0
    %1967 = vmatpush.xpose.msra.mxu0 0.0
    %1968 = vmatpush.xpose.msra.mxu0 0.0
    %1969 = vmatpush.xpose.msra.mxu0 0.0
    %1970 = vmatpush.xpose.msra.mxu0 0.0
    %1971 = vmatpush.xpose.msra.mxu0 0.0
    %1972 = vmatpush.xpose.msra.mxu0 0.0
    %1973 = vmatpush.xpose.msra.mxu0 0.0
    %v1974 = vand.u32 %v1931, 4294901760
    %v1975 = vsub.f32 %v1931, %v1974
    %v1976 = vand.u32 %v1975, 4294901760
    %v1977 = vsub.f32 %v1975, %v1976
    %v1978 = vand.u32 %v1977, 4294901760
    %1979 = vmatpush.xpose.msra.mxu0 %v1978
    %v1980 = vand.u32 %v1929, 4294901760
    %1981 = vmatmul.f32.gmra.mxu0 %v1980
    %v1982 = vpop.f32.mrf.mxu0
    %v1983 = vadd.f32 %v1957, %v1982
    %1984 = vdwg.mxu0
    %1985 = vmatpush.xpose.msra.mxu0 0.0
    %1986 = vmatpush.xpose.msra.mxu0 0.0
    %1987 = vmatpush.xpose.msra.mxu0 0.0
    %1988 = vmatpush.xpose.msra.mxu0 0.0
    %1989 = vmatpush.xpose.msra.mxu0 0.0
    %1990 = vmatpush.xpose.msra.mxu0 0.0
    %1991 = vmatpush.xpose.msra.mxu0 0.0
    %1992 = vmatpush.xpose.msra.mxu0 0.0
    %1993 = vmatpush.xpose.msra.mxu0 0.0
    %1994 = vmatpush.xpose.msra.mxu0 0.0
    %1995 = vmatpush.xpose.msra.mxu0 0.0
    %1996 = vmatpush.xpose.msra.mxu0 0.0
    %1997 = vmatpush.xpose.msra.mxu0 0.0
    %1998 = vmatpush.xpose.msra.mxu0 0.0
    %1999 = vmatpush.xpose.msra.mxu0 0.0
    %v2000 = vand.u32 %v1931, 4294901760
    %v2001 = vsub.f32 %v1931, %v2000
    %2002 = vmatpush.xpose.msra.mxu0 %v2001
    %v2003 = vand.u32 %v1929, 4294901760
    %v2004 = vsub.f32 %v1929, %v2003
    %2005 = vmatmul.f32.gmra.mxu0 %v2004
    %v2006 = vpop.f32.mrf.mxu0
    %v2007 = vadd.f32 %v1983, %v2006
    %2008 = vdwg.mxu0
    %2009 = vmatpush.xpose.msra.mxu0 0.0
    %2010 = vmatpush.xpose.msra.mxu0 0.0
    %2011 = vmatpush.xpose.msra.mxu0 0.0
    %2012 = vmatpush.xpose.msra.mxu0 0.0
    %2013 = vmatpush.xpose.msra.mxu0 0.0
    %2014 = vmatpush.xpose.msra.mxu0 0.0
    %2015 = vmatpush.xpose.msra.mxu0 0.0
    %2016 = vmatpush.xpose.msra.mxu0 0.0
    %2017 = vmatpush.xpose.msra.mxu0 0.0
    %2018 = vmatpush.xpose.msra.mxu0 0.0
    %2019 = vmatpush.xpose.msra.mxu0 0.0
    %2020 = vmatpush.xpose.msra.mxu0 0.0
    %2021 = vmatpush.xpose.msra.mxu0 0.0
    %2022 = vmatpush.xpose.msra.mxu0 0.0
    %2023 = vmatpush.xpose.msra.mxu0 0.0
    %v2024 = vand.u32 %v1931, 4294901760
    %2025 = vmatpush.xpose.msra.mxu0 %v2024
    %v2026 = vand.u32 %v1929, 4294901760
    %v2027 = vsub.f32 %v1929, %v2026
    %v2028 = vand.u32 %v2027, 4294901760
    %2029 = vmatmul.f32.gmra.mxu0 %v2028
    %v2030 = vpop.f32.mrf.mxu0
    %v2031 = vadd.f32 %v2007, %v2030
    %2032 = vdwg.mxu0
    %2033 = vmatpush.xpose.msra.mxu0 0.0
    %2034 = vmatpush.xpose.msra.mxu0 0.0
    %2035 = vmatpush.xpose.msra.mxu0 0.0
    %2036 = vmatpush.xpose.msra.mxu0 0.0
    %2037 = vmatpush.xpose.msra.mxu0 0.0
    %2038 = vmatpush.xpose.msra.mxu0 0.0
    %2039 = vmatpush.xpose.msra.mxu0 0.0
    %2040 = vmatpush.xpose.msra.mxu0 0.0
    %2041 = vmatpush.xpose.msra.mxu0 0.0
    %2042 = vmatpush.xpose.msra.mxu0 0.0
    %2043 = vmatpush.xpose.msra.mxu0 0.0
    %2044 = vmatpush.xpose.msra.mxu0 0.0
    %2045 = vmatpush.xpose.msra.mxu0 0.0
    %2046 = vmatpush.xpose.msra.mxu0 0.0
    %2047 = vmatpush.xpose.msra.mxu0 0.0
    %v2048 = vand.u32 %v1931, 4294901760
    %v2049 = vsub.f32 %v1931, %v2048
    %v2050 = vand.u32 %v2049, 4294901760
    %2051 = vmatpush.xpose.msra.mxu0 %v2050
    %v2052 = vand.u32 %v1929, 4294901760
    %2053 = vmatmul.f32.gmra.mxu0 %v2052
    %v2054 = vpop.f32.mrf.mxu0
    %v2055 = vadd.f32 %v2031, %v2054
    %2056 = vdwg.mxu0
    %2057 = vmatpush.xpose.msra.mxu0 0.0
    %2058 = vmatpush.xpose.msra.mxu0 0.0
    %2059 = vmatpush.xpose.msra.mxu0 0.0
    %2060 = vmatpush.xpose.msra.mxu0 0.0
    %2061 = vmatpush.xpose.msra.mxu0 0.0
    %2062 = vmatpush.xpose.msra.mxu0 0.0
    %2063 = vmatpush.xpose.msra.mxu0 0.0
    %2064 = vmatpush.xpose.msra.mxu0 0.0
    %2065 = vmatpush.xpose.msra.mxu0 0.0
    %2066 = vmatpush.xpose.msra.mxu0 0.0
    %2067 = vmatpush.xpose.msra.mxu0 0.0
    %2068 = vmatpush.xpose.msra.mxu0 0.0
    %2069 = vmatpush.xpose.msra.mxu0 0.0
    %2070 = vmatpush.xpose.msra.mxu0 0.0
    %2071 = vmatpush.xpose.msra.mxu0 0.0
    %v2072 = vand.u32 %v1931, 4294901760
    %2073 = vmatpush.xpose.msra.mxu0 %v2072
    %v2074 = vand.u32 %v1929, 4294901760
    %2075 = vmatmul.f32.gmra.mxu0 %v2074
    %v2076 = vpop.f32.mrf.mxu0
    %v2077 = vadd.f32 %v2055, %v2076
    %2078 = vdwg.mxu0
    %v2079 = vsel %vm587, %v2077, -inf
    %2080 = vmax.xlane.f32.xlu0 %v2079
    %v2081 = vpop.xlane.xlu0 %2080
    %v2082 = vsub.f32 %v2077, %v2081
    %v2083 = vmul.f32 %v2082, 1.442695
    %v2084 = vpow.pop %v2083
    %v2085 = vsel %vm587, %v2084, 0.0
    %2086 = vadd.xlane.f32.xlu0 %v2085
    %v2087 = vpop.xlane.xlu0 %2086
    %v2088 = vrcp.pop %v2087
    %v2089 = vmul.f32 %v2087, %v2088
    %v2090 = vsub.f32 1.0, %v2089
    %v2091 = vmul.f32 %v2088, %v2090
    %v2092 = vadd.f32 %v2088, %v2091
    %vm2093 = vweird.f32 %v2087
    %vm2094 = vweird.f32 %v2088
    %vm2095 = vmor %vm2093, %vm2094
    %v2096 = vsel %vm2095, %v2088, %v2092
    %v2097 = vand.u32 2147483647, %v2087
    %vm2098 = vcmp.eq.f32.partialorder %v2097, 8.507059e+37
    %v2099 = vand.u32 %v2087, 2147483648
    %v2100 = vor.u32 1.1754944e-38, %v2099
    %v2101 = vsel %vm2098, %v2100, %v2096
    %v2102 = vmul.f32 %v2084, %v2101
    %s2103 = scalar_lea.vmem [#allocation4], 32
    %2104 = vst.msk [vmem:[%s2103] sm:$0xff] %vm587, %v2102
    %v2106 = vsel %vm587, %v2102, 0
    %2108 = vmatpush.msra.mxu0 0.0
    %2109 = vmatpush.msra.mxu0 0.0
    %2110 = vmatpush.msra.mxu0 0.0
    %2111 = vmatpush.msra.mxu0 0.0
    %2112 = vmatpush.msra.mxu0 0.0
    %2113 = vmatpush.msra.mxu0 0.0
    %2114 = vmatpush.msra.mxu0 0.0
    %2115 = vmatpush.msra.mxu0 0.0
    %2116 = vmatpush.msra.mxu0 0.0
    %2117 = vmatpush.msra.mxu0 0.0
    %2118 = vmatpush.msra.mxu0 0.0
    %2119 = vmatpush.msra.mxu0 0.0
    %2120 = vmatpush.msra.mxu0 0.0
    %2121 = vmatpush.msra.mxu0 0.0
    %2122 = vmatpush.msra.mxu0 0.0
    %v2123 = vand.u32 %v576, 4294901760
    %2124 = vmatpush.msra.mxu0 %v2123
    %v2125 = vand.u32 %v2106, 4294901760
    %v2126 = vsub.f32 %v2106, %v2125
    %v2127 = vand.u32 %v2126, 4294901760
    %v2128 = vsub.f32 %v2126, %v2127
    %v2129 = vand.u32 %v2128, 4294901760
    %2130 = vmatmul.f32.gmra.mxu0 %v2129
    %v2131 = vpop.f32.mrf.mxu0
    %v2132 = vadd.f32 0.0, %v2131
    %2133 = vdwg.mxu0
    %2134 = vmatpush.msra.mxu0 0.0
    %2135 = vmatpush.msra.mxu0 0.0
    %2136 = vmatpush.msra.mxu0 0.0
    %2137 = vmatpush.msra.mxu0 0.0
    %2138 = vmatpush.msra.mxu0 0.0
    %2139 = vmatpush.msra.mxu0 0.0
    %2140 = vmatpush.msra.mxu0 0.0
    %2141 = vmatpush.msra.mxu0 0.0
    %2142 = vmatpush.msra.mxu0 0.0
    %2143 = vmatpush.msra.mxu0 0.0
    %2144 = vmatpush.msra.mxu0 0.0
    %2145 = vmatpush.msra.mxu0 0.0
    %2146 = vmatpush.msra.mxu0 0.0
    %2147 = vmatpush.msra.mxu0 0.0
    %2148 = vmatpush.msra.mxu0 0.0
    %v2149 = vand.u32 %v576, 4294901760
    %v2150 = vsub.f32 %v576, %v2149
    %v2151 = vand.u32 %v2150, 4294901760
    %v2152 = vsub.f32 %v2150, %v2151
    %v2153 = vand.u32 %v2152, 4294901760
    %2154 = vmatpush.msra.mxu0 %v2153
    %v2155 = vand.u32 %v2106, 4294901760
    %2156 = vmatmul.f32.gmra.mxu0 %v2155
    %v2157 = vpop.f32.mrf.mxu0
    %v2158 = vadd.f32 %v2132, %v2157
    %2159 = vdwg.mxu0
    %2160 = vmatpush.msra.mxu0 0.0
    %2161 = vmatpush.msra.mxu0 0.0
    %2162 = vmatpush.msra.mxu0 0.0
    %2163 = vmatpush.msra.mxu0 0.0
    %2164 = vmatpush.msra.mxu0 0.0
    %2165 = vmatpush.msra.mxu0 0.0
    %2166 = vmatpush.msra.mxu0 0.0
    %2167 = vmatpush.msra.mxu0 0.0
    %2168 = vmatpush.msra.mxu0 0.0
    %2169 = vmatpush.msra.mxu0 0.0
    %2170 = vmatpush.msra.mxu0 0.0
    %2171 = vmatpush.msra.mxu0 0.0
    %2172 = vmatpush.msra.mxu0 0.0
    %2173 = vmatpush.msra.mxu0 0.0
    %2174 = vmatpush.msra.mxu0 0.0
    %v2175 = vand.u32 %v576, 4294901760
    %v2176 = vsub.f32 %v576, %v2175
    %2177 = vmatpush.msra.mxu0 %v2176
    %v2178 = vand.u32 %v2106, 4294901760
    %v2179 = vsub.f32 %v2106, %v2178
    %2180 = vmatmul.f32.gmra.mxu0 %v2179
    %v2181 = vpop.f32.mrf.mxu0
    %v2182 = vadd.f32 %v2158, %v2181
    %2183 = vdwg.mxu0
    %2184 = vmatpush.msra.mxu0 0.0
    %2185 = vmatpush.msra.mxu0 0.0
    %2186 = vmatpush.msra.mxu0 0.0
    %2187 = vmatpush.msra.mxu0 0.0
    %2188 = vmatpush.msra.mxu0 0.0
    %2189 = vmatpush.msra.mxu0 0.0
    %2190 = vmatpush.msra.mxu0 0.0
    %2191 = vmatpush.msra.mxu0 0.0
    %2192 = vmatpush.msra.mxu0 0.0
    %2193 = vmatpush.msra.mxu0 0.0
    %2194 = vmatpush.msra.mxu0 0.0
    %2195 = vmatpush.msra.mxu0 0.0
    %2196 = vmatpush.msra.mxu0 0.0
    %2197 = vmatpush.msra.mxu0 0.0
    %2198 = vmatpush.msra.mxu0 0.0
    %v2199 = vand.u32 %v576, 4294901760
    %2200 = vmatpush.msra.mxu0 %v2199
    %v2201 = vand.u32 %v2106, 4294901760
    %v2202 = vsub.f32 %v2106, %v2201
    %v2203 = vand.u32 %v2202, 4294901760
    %2204 = vmatmul.f32.gmra.mxu0 %v2203
    %v2205 = vpop.f32.mrf.mxu0
    %v2206 = vadd.f32 %v2182, %v2205
    %2207 = vdwg.mxu0
    %2208 = vmatpush.msra.mxu0 0.0
    %2209 = vmatpush.msra.mxu0 0.0
    %2210 = vmatpush.msra.mxu0 0.0
    %2211 = vmatpush.msra.mxu0 0.0
    %2212 = vmatpush.msra.mxu0 0.0
    %2213 = vmatpush.msra.mxu0 0.0
    %2214 = vmatpush.msra.mxu0 0.0
    %2215 = vmatpush.msra.mxu0 0.0
    %2216 = vmatpush.msra.mxu0 0.0
    %2217 = vmatpush.msra.mxu0 0.0
    %2218 = vmatpush.msra.mxu0 0.0
    %2219 = vmatpush.msra.mxu0 0.0
    %2220 = vmatpush.msra.mxu0 0.0
    %2221 = vmatpush.msra.mxu0 0.0
    %2222 = vmatpush.msra.mxu0 0.0
    %v2223 = vand.u32 %v576, 4294901760
    %v2224 = vsub.f32 %v576, %v2223
    %v2225 = vand.u32 %v2224, 4294901760
    %2226 = vmatpush.msra.mxu0 %v2225
    %v2227 = vand.u32 %v2106, 4294901760
    %2228 = vmatmul.f32.gmra.mxu0 %v2227
    %v2229 = vpop.f32.mrf.mxu0
    %v2230 = vadd.f32 %v2206, %v2229
    %2231 = vdwg.mxu0
    %2232 = vmatpush.msra.mxu0 0.0
    %2233 = vmatpush.msra.mxu0 0.0
    %2234 = vmatpush.msra.mxu0 0.0
    %2235 = vmatpush.msra.mxu0 0.0
    %2236 = vmatpush.msra.mxu0 0.0
    %2237 = vmatpush.msra.mxu0 0.0
    %2238 = vmatpush.msra.mxu0 0.0
    %2239 = vmatpush.msra.mxu0 0.0
    %2240 = vmatpush.msra.mxu0 0.0
    %2241 = vmatpush.msra.mxu0 0.0
    %2242 = vmatpush.msra.mxu0 0.0
    %2243 = vmatpush.msra.mxu0 0.0
    %2244 = vmatpush.msra.mxu0 0.0
    %2245 = vmatpush.msra.mxu0 0.0
    %2246 = vmatpush.msra.mxu0 0.0
    %v2247 = vand.u32 %v576, 4294901760
    %2248 = vmatpush.msra.mxu0 %v2247
    %v2249 = vand.u32 %v2106, 4294901760
    %2250 = vmatmul.f32.gmra.mxu0 %v2249
    %v2251 = vpop.f32.mrf.mxu0
    %v2252 = vadd.f32 %v2230, %v2251
    %2253 = vdwg.mxu0
    %2254 = vrot.lane.b32.xlu0 %v350, 120
    %v2255 = vpop.permute.xlu0 %2254
    %2256 = vrot.lane.b32.xlu0 %v350, 88
    %v2257 = vpop.permute.xlu0 %2256
    %v2258 = vsel %vm587, %v2255, 0
    %v2260 = vsel %vm587, %v2257, 0
    %2262 = vmatpush.xpose.msra.mxu0 0.0
    %2263 = vmatpush.xpose.msra.mxu0 0.0
    %2264 = vmatpush.xpose.msra.mxu0 0.0
    %2265 = vmatpush.xpose.msra.mxu0 0.0
    %2266 = vmatpush.xpose.msra.mxu0 0.0
    %2267 = vmatpush.xpose.msra.mxu0 0.0
    %2268 = vmatpush.xpose.msra.mxu0 0.0
    %2269 = vmatpush.xpose.msra.mxu0 0.0
    %2270 = vmatpush.xpose.msra.mxu0 0.0
    %2271 = vmatpush.xpose.msra.mxu0 0.0
    %2272 = vmatpush.xpose.msra.mxu0 0.0
    %2273 = vmatpush.xpose.msra.mxu0 0.0
    %2274 = vmatpush.xpose.msra.mxu0 0.0
    %2275 = vmatpush.xpose.msra.mxu0 0.0
    %2276 = vmatpush.xpose.msra.mxu0 0.0
    %v2277 = vand.u32 %v2260, 4294901760
    %2278 = vmatpush.xpose.msra.mxu0 %v2277
    %v2279 = vand.u32 %v2258, 4294901760
    %v2280 = vsub.f32 %v2258, %v2279
    %v2281 = vand.u32 %v2280, 4294901760
    %v2282 = vsub.f32 %v2280, %v2281
    %v2283 = vand.u32 %v2282, 4294901760
    %2284 = vmatmul.f32.gmra.mxu0 %v2283
    %v2285 = vpop.f32.mrf.mxu0
    %v2286 = vadd.f32 %v583, %v2285
    %2287 = vdwg.mxu0
    %2288 = vmatpush.xpose.msra.mxu0 0.0
    %2289 = vmatpush.xpose.msra.mxu0 0.0
    %2290 = vmatpush.xpose.msra.mxu0 0.0
    %2291 = vmatpush.xpose.msra.mxu0 0.0
    %2292 = vmatpush.xpose.msra.mxu0 0.0
    %2293 = vmatpush.xpose.msra.mxu0 0.0
    %2294 = vmatpush.xpose.msra.mxu0 0.0
    %2295 = vmatpush.xpose.msra.mxu0 0.0
    %2296 = vmatpush.xpose.msra.mxu0 0.0
    %2297 = vmatpush.xpose.msra.mxu0 0.0
    %2298 = vmatpush.xpose.msra.mxu0 0.0
    %2299 = vmatpush.xpose.msra.mxu0 0.0
    %2300 = vmatpush.xpose.msra.mxu0 0.0
    %2301 = vmatpush.xpose.msra.mxu0 0.0
    %2302 = vmatpush.xpose.msra.mxu0 0.0
    %v2303 = vand.u32 %v2260, 4294901760
    %v2304 = vsub.f32 %v2260, %v2303
    %v2305 = vand.u32 %v2304, 4294901760
    %v2306 = vsub.f32 %v2304, %v2305
    %v2307 = vand.u32 %v2306, 4294901760
    %2308 = vmatpush.xpose.msra.mxu0 %v2307
    %v2309 = vand.u32 %v2258, 4294901760
    %2310 = vmatmul.f32.gmra.mxu0 %v2309
    %v2311 = vpop.f32.mrf.mxu0
    %v2312 = vadd.f32 %v2286, %v2311
    %2313 = vdwg.mxu0
    %2314 = vmatpush.xpose.msra.mxu0 0.0
    %2315 = vmatpush.xpose.msra.mxu0 0.0
    %2316 = vmatpush.xpose.msra.mxu0 0.0
    %2317 = vmatpush.xpose.msra.mxu0 0.0
    %2318 = vmatpush.xpose.msra.mxu0 0.0
    %2319 = vmatpush.xpose.msra.mxu0 0.0
    %2320 = vmatpush.xpose.msra.mxu0 0.0
    %2321 = vmatpush.xpose.msra.mxu0 0.0
    %2322 = vmatpush.xpose.msra.mxu0 0.0
    %2323 = vmatpush.xpose.msra.mxu0 0.0
    %2324 = vmatpush.xpose.msra.mxu0 0.0
    %2325 = vmatpush.xpose.msra.mxu0 0.0
    %2326 = vmatpush.xpose.msra.mxu0 0.0
    %2327 = vmatpush.xpose.msra.mxu0 0.0
    %2328 = vmatpush.xpose.msra.mxu0 0.0
    %v2329 = vand.u32 %v2260, 4294901760
    %v2330 = vsub.f32 %v2260, %v2329
    %2331 = vmatpush.xpose.msra.mxu0 %v2330
    %v2332 = vand.u32 %v2258, 4294901760
    %v2333 = vsub.f32 %v2258, %v2332
    %2334 = vmatmul.f32.gmra.mxu0 %v2333
    %v2335 = vpop.f32.mrf.mxu0
    %v2336 = vadd.f32 %v2312, %v2335
    %2337 = vdwg.mxu0
    %2338 = vmatpush.xpose.msra.mxu0 0.0
    %2339 = vmatpush.xpose.msra.mxu0 0.0
    %2340 = vmatpush.xpose.msra.mxu0 0.0
    %2341 = vmatpush.xpose.msra.mxu0 0.0
    %2342 = vmatpush.xpose.msra.mxu0 0.0
    %2343 = vmatpush.xpose.msra.mxu0 0.0
    %2344 = vmatpush.xpose.msra.mxu0 0.0
    %2345 = vmatpush.xpose.msra.mxu0 0.0
    %2346 = vmatpush.xpose.msra.mxu0 0.0
    %2347 = vmatpush.xpose.msra.mxu0 0.0
    %2348 = vmatpush.xpose.msra.mxu0 0.0
    %2349 = vmatpush.xpose.msra.mxu0 0.0
    %2350 = vmatpush.xpose.msra.mxu0 0.0
    %2351 = vmatpush.xpose.msra.mxu0 0.0
    %2352 = vmatpush.xpose.msra.mxu0 0.0
    %v2353 = vand.u32 %v2260, 4294901760
    %2354 = vmatpush.xpose.msra.mxu0 %v2353
    %v2355 = vand.u32 %v2258, 4294901760
    %v2356 = vsub.f32 %v2258, %v2355
    %v2357 = vand.u32 %v2356, 4294901760
    %2358 = vmatmul.f32.gmra.mxu0 %v2357
    %v2359 = vpop.f32.mrf.mxu0
    %v2360 = vadd.f32 %v2336, %v2359
    %2361 = vdwg.mxu0
    %2362 = vmatpush.xpose.msra.mxu0 0.0
    %2363 = vmatpush.xpose.msra.mxu0 0.0
    %2364 = vmatpush.xpose.msra.mxu0 0.0
    %2365 = vmatpush.xpose.msra.mxu0 0.0
    %2366 = vmatpush.xpose.msra.mxu0 0.0
    %2367 = vmatpush.xpose.msra.mxu0 0.0
    %2368 = vmatpush.xpose.msra.mxu0 0.0
    %2369 = vmatpush.xpose.msra.mxu0 0.0
    %2370 = vmatpush.xpose.msra.mxu0 0.0
    %2371 = vmatpush.xpose.msra.mxu0 0.0
    %2372 = vmatpush.xpose.msra.mxu0 0.0
    %2373 = vmatpush.xpose.msra.mxu0 0.0
    %2374 = vmatpush.xpose.msra.mxu0 0.0
    %2375 = vmatpush.xpose.msra.mxu0 0.0
    %2376 = vmatpush.xpose.msra.mxu0 0.0
    %v2377 = vand.u32 %v2260, 4294901760
    %v2378 = vsub.f32 %v2260, %v2377
    %v2379 = vand.u32 %v2378, 4294901760
    %2380 = vmatpush.xpose.msra.mxu0 %v2379
    %v2381 = vand.u32 %v2258, 4294901760
    %2382 = vmatmul.f32.gmra.mxu0 %v2381
    %v2383 = vpop.f32.mrf.mxu0
    %v2384 = vadd.f32 %v2360, %v2383
    %2385 = vdwg.mxu0
    %2386 = vmatpush.xpose.msra.mxu0 0.0
    %2387 = vmatpush.xpose.msra.mxu0 0.0
    %2388 = vmatpush.xpose.msra.mxu0 0.0
    %2389 = vmatpush.xpose.msra.mxu0 0.0
    %2390 = vmatpush.xpose.msra.mxu0 0.0
    %2391 = vmatpush.xpose.msra.mxu0 0.0
    %2392 = vmatpush.xpose.msra.mxu0 0.0
    %2393 = vmatpush.xpose.msra.mxu0 0.0
    %2394 = vmatpush.xpose.msra.mxu0 0.0
    %2395 = vmatpush.xpose.msra.mxu0 0.0
    %2396 = vmatpush.xpose.msra.mxu0 0.0
    %2397 = vmatpush.xpose.msra.mxu0 0.0
    %2398 = vmatpush.xpose.msra.mxu0 0.0
    %2399 = vmatpush.xpose.msra.mxu0 0.0
    %2400 = vmatpush.xpose.msra.mxu0 0.0
    %v2401 = vand.u32 %v2260, 4294901760
    %2402 = vmatpush.xpose.msra.mxu0 %v2401
    %v2403 = vand.u32 %v2258, 4294901760
    %2404 = vmatmul.f32.gmra.mxu0 %v2403
    %v2405 = vpop.f32.mrf.mxu0
    %v2406 = vadd.f32 %v2384, %v2405
    %2407 = vdwg.mxu0
    %v2408 = vsel %vm587, %v2406, -inf
    %2409 = vmax.xlane.f32.xlu0 %v2408
    %v2410 = vpop.xlane.xlu0 %2409
    %v2411 = vsub.f32 %v2406, %v2410
    %v2412 = vmul.f32 %v2411, 1.442695
    %v2413 = vpow.pop %v2412
    %v2414 = vsel %vm587, %v2413, 0.0
    %2415 = vadd.xlane.f32.xlu0 %v2414
    %v2416 = vpop.xlane.xlu0 %2415
    %v2417 = vrcp.pop %v2416
    %v2418 = vmul.f32 %v2416, %v2417
    %v2419 = vsub.f32 1.0, %v2418
    %v2420 = vmul.f32 %v2417, %v2419
    %v2421 = vadd.f32 %v2417, %v2420
    %vm2422 = vweird.f32 %v2416
    %vm2423 = vweird.f32 %v2417
    %vm2424 = vmor %vm2422, %vm2423
    %v2425 = vsel %vm2424, %v2417, %v2421
    %v2426 = vand.u32 2147483647, %v2416
    %vm2427 = vcmp.eq.f32.partialorder %v2426, 8.507059e+37
    %v2428 = vand.u32 %v2416, 2147483648
    %v2429 = vor.u32 1.1754944e-38, %v2428
    %v2430 = vsel %vm2427, %v2429, %v2425
    %v2431 = vmul.f32 %v2413, %v2430
    %s2432 = scalar_lea.vmem [#allocation4], 40
    %2433 = vst.msk [vmem:[%s2432] sm:$0xff] %vm587, %v2431
    %2435 = vrot.lane.b32.xlu0 %v576, 120
    %v2436 = vpop.permute.xlu0 %2435
    %v2439 = vsel %vm587, %v2431, 0
    %2441 = vmatpush.msra.mxu0 0.0
    %2442 = vmatpush.msra.mxu0 0.0
    %2443 = vmatpush.msra.mxu0 0.0
    %2444 = vmatpush.msra.mxu0 0.0
    %2445 = vmatpush.msra.mxu0 0.0
    %2446 = vmatpush.msra.mxu0 0.0
    %2447 = vmatpush.msra.mxu0 0.0
    %2448 = vmatpush.msra.mxu0 0.0
    %2449 = vmatpush.msra.mxu0 0.0
    %2450 = vmatpush.msra.mxu0 0.0
    %2451 = vmatpush.msra.mxu0 0.0
    %2452 = vmatpush.msra.mxu0 0.0
    %2453 = vmatpush.msra.mxu0 0.0
    %2454 = vmatpush.msra.mxu0 0.0
    %2455 = vmatpush.msra.mxu0 0.0
    %v2456 = vand.u32 %v2436, 4294901760
    %2457 = vmatpush.msra.mxu0 %v2456
    %v2458 = vand.u32 %v2439, 4294901760
    %v2459 = vsub.f32 %v2439, %v2458
    %v2460 = vand.u32 %v2459, 4294901760
    %v2461 = vsub.f32 %v2459, %v2460
    %v2462 = vand.u32 %v2461, 4294901760
    %2463 = vmatmul.f32.gmra.mxu0 %v2462
    %v2464 = vpop.f32.mrf.mxu0
    %v2465 = vadd.f32 0.0, %v2464
    %2466 = vdwg.mxu0
    %2467 = vmatpush.msra.mxu0 0.0
    %2468 = vmatpush.msra.mxu0 0.0
    %2469 = vmatpush.msra.mxu0 0.0
    %2470 = vmatpush.msra.mxu0 0.0
    %2471 = vmatpush.msra.mxu0 0.0
    %2472 = vmatpush.msra.mxu0 0.0
    %2473 = vmatpush.msra.mxu0 0.0
    %2474 = vmatpush.msra.mxu0 0.0
    %2475 = vmatpush.msra.mxu0 0.0
    %2476 = vmatpush.msra.mxu0 0.0
    %2477 = vmatpush.msra.mxu0 0.0
    %2478 = vmatpush.msra.mxu0 0.0
    %2479 = vmatpush.msra.mxu0 0.0
    %2480 = vmatpush.msra.mxu0 0.0
    %2481 = vmatpush.msra.mxu0 0.0
    %v2482 = vand.u32 %v2436, 4294901760
    %v2483 = vsub.f32 %v2436, %v2482
    %v2484 = vand.u32 %v2483, 4294901760
    %v2485 = vsub.f32 %v2483, %v2484
    %v2486 = vand.u32 %v2485, 4294901760
    %2487 = vmatpush.msra.mxu0 %v2486
    %v2488 = vand.u32 %v2439, 4294901760
    %2489 = vmatmul.f32.gmra.mxu0 %v2488
    %v2490 = vpop.f32.mrf.mxu0
    %v2491 = vadd.f32 %v2465, %v2490
    %2492 = vdwg.mxu0
    %2493 = vmatpush.msra.mxu0 0.0
    %2494 = vmatpush.msra.mxu0 0.0
    %2495 = vmatpush.msra.mxu0 0.0
    %2496 = vmatpush.msra.mxu0 0.0
    %2497 = vmatpush.msra.mxu0 0.0
    %2498 = vmatpush.msra.mxu0 0.0
    %2499 = vmatpush.msra.mxu0 0.0
    %2500 = vmatpush.msra.mxu0 0.0
    %2501 = vmatpush.msra.mxu0 0.0
    %2502 = vmatpush.msra.mxu0 0.0
    %2503 = vmatpush.msra.mxu0 0.0
    %2504 = vmatpush.msra.mxu0 0.0
    %2505 = vmatpush.msra.mxu0 0.0
    %2506 = vmatpush.msra.mxu0 0.0
    %2507 = vmatpush.msra.mxu0 0.0
    %v2508 = vand.u32 %v2436, 4294901760
    %v2509 = vsub.f32 %v2436, %v2508
    %2510 = vmatpush.msra.mxu0 %v2509
    %v2511 = vand.u32 %v2439, 4294901760
    %v2512 = vsub.f32 %v2439, %v2511
    %2513 = vmatmul.f32.gmra.mxu0 %v2512
    %v2514 = vpop.f32.mrf.mxu0
    %v2515 = vadd.f32 %v2491, %v2514
    %2516 = vdwg.mxu0
    %2517 = vmatpush.msra.mxu0 0.0
    %2518 = vmatpush.msra.mxu0 0.0
    %2519 = vmatpush.msra.mxu0 0.0
    %2520 = vmatpush.msra.mxu0 0.0
    %2521 = vmatpush.msra.mxu0 0.0
    %2522 = vmatpush.msra.mxu0 0.0
    %2523 = vmatpush.msra.mxu0 0.0
    %2524 = vmatpush.msra.mxu0 0.0
    %2525 = vmatpush.msra.mxu0 0.0
    %2526 = vmatpush.msra.mxu0 0.0
    %2527 = vmatpush.msra.mxu0 0.0
    %2528 = vmatpush.msra.mxu0 0.0
    %2529 = vmatpush.msra.mxu0 0.0
    %2530 = vmatpush.msra.mxu0 0.0
    %2531 = vmatpush.msra.mxu0 0.0
    %v2532 = vand.u32 %v2436, 4294901760
    %2533 = vmatpush.msra.mxu0 %v2532
    %v2534 = vand.u32 %v2439, 4294901760
    %v2535 = vsub.f32 %v2439, %v2534
    %v2536 = vand.u32 %v2535, 4294901760
    %2537 = vmatmul.f32.gmra.mxu0 %v2536
    %v2538 = vpop.f32.mrf.mxu0
    %v2539 = vadd.f32 %v2515, %v2538
    %2540 = vdwg.mxu0
    %2541 = vmatpush.msra.mxu0 0.0
    %2542 = vmatpush.msra.mxu0 0.0
    %2543 = vmatpush.msra.mxu0 0.0
    %2544 = vmatpush.msra.mxu0 0.0
    %2545 = vmatpush.msra.mxu0 0.0
    %2546 = vmatpush.msra.mxu0 0.0
    %2547 = vmatpush.msra.mxu0 0.0
    %2548 = vmatpush.msra.mxu0 0.0
    %2549 = vmatpush.msra.mxu0 0.0
    %2550 = vmatpush.msra.mxu0 0.0
    %2551 = vmatpush.msra.mxu0 0.0
    %2552 = vmatpush.msra.mxu0 0.0
    %2553 = vmatpush.msra.mxu0 0.0
    %2554 = vmatpush.msra.mxu0 0.0
    %2555 = vmatpush.msra.mxu0 0.0
    %v2556 = vand.u32 %v2436, 4294901760
    %v2557 = vsub.f32 %v2436, %v2556
    %v2558 = vand.u32 %v2557, 4294901760
    %2559 = vmatpush.msra.mxu0 %v2558
    %v2560 = vand.u32 %v2439, 4294901760
    %2561 = vmatmul.f32.gmra.mxu0 %v2560
    %v2562 = vpop.f32.mrf.mxu0
    %v2563 = vadd.f32 %v2539, %v2562
    %2564 = vdwg.mxu0
    %2565 = vmatpush.msra.mxu0 0.0
    %2566 = vmatpush.msra.mxu0 0.0
    %2567 = vmatpush.msra.mxu0 0.0
    %2568 = vmatpush.msra.mxu0 0.0
    %2569 = vmatpush.msra.mxu0 0.0
    %2570 = vmatpush.msra.mxu0 0.0
    %2571 = vmatpush.msra.mxu0 0.0
    %2572 = vmatpush.msra.mxu0 0.0
    %2573 = vmatpush.msra.mxu0 0.0
    %2574 = vmatpush.msra.mxu0 0.0
    %2575 = vmatpush.msra.mxu0 0.0
    %2576 = vmatpush.msra.mxu0 0.0
    %2577 = vmatpush.msra.mxu0 0.0
    %2578 = vmatpush.msra.mxu0 0.0
    %2579 = vmatpush.msra.mxu0 0.0
    %v2580 = vand.u32 %v2436, 4294901760
    %2581 = vmatpush.msra.mxu0 %v2580
    %v2582 = vand.u32 %v2439, 4294901760
    %2583 = vmatmul.f32.gmra.mxu0 %v2582
    %v2584 = vpop.f32.mrf.mxu0
    %v2585 = vadd.f32 %v2563, %v2584
    %2586 = vdwg.mxu0
    %2587 = vrot.lane.b32.xlu0 %v350, 112
    %v2588 = vpop.permute.xlu0 %2587
    %2589 = vrot.lane.b32.xlu0 %v350, 80
    %v2590 = vpop.permute.xlu0 %2589
    %v2591 = vsel %vm587, %v2588, 0
    %v2593 = vsel %vm587, %v2590, 0
    %2595 = vmatpush.xpose.msra.mxu0 0.0
    %2596 = vmatpush.xpose.msra.mxu0 0.0
    %2597 = vmatpush.xpose.msra.mxu0 0.0
    %2598 = vmatpush.xpose.msra.mxu0 0.0
    %2599 = vmatpush.xpose.msra.mxu0 0.0
    %2600 = vmatpush.xpose.msra.mxu0 0.0
    %2601 = vmatpush.xpose.msra.mxu0 0.0
    %2602 = vmatpush.xpose.msra.mxu0 0.0
    %2603 = vmatpush.xpose.msra.mxu0 0.0
    %2604 = vmatpush.xpose.msra.mxu0 0.0
    %2605 = vmatpush.xpose.msra.mxu0 0.0
    %2606 = vmatpush.xpose.msra.mxu0 0.0
    %2607 = vmatpush.xpose.msra.mxu0 0.0
    %2608 = vmatpush.xpose.msra.mxu0 0.0
    %2609 = vmatpush.xpose.msra.mxu0 0.0
    %v2610 = vand.u32 %v2593, 4294901760
    %2611 = vmatpush.xpose.msra.mxu0 %v2610
    %v2612 = vand.u32 %v2591, 4294901760
    %v2613 = vsub.f32 %v2591, %v2612
    %v2614 = vand.u32 %v2613, 4294901760
    %v2615 = vsub.f32 %v2613, %v2614
    %v2616 = vand.u32 %v2615, 4294901760
    %2617 = vmatmul.f32.gmra.mxu0 %v2616
    %v2618 = vpop.f32.mrf.mxu0
    %v2619 = vadd.f32 %v583, %v2618
    %2620 = vdwg.mxu0
    %2621 = vmatpush.xpose.msra.mxu0 0.0
    %2622 = vmatpush.xpose.msra.mxu0 0.0
    %2623 = vmatpush.xpose.msra.mxu0 0.0
    %2624 = vmatpush.xpose.msra.mxu0 0.0
    %2625 = vmatpush.xpose.msra.mxu0 0.0
    %2626 = vmatpush.xpose.msra.mxu0 0.0
    %2627 = vmatpush.xpose.msra.mxu0 0.0
    %2628 = vmatpush.xpose.msra.mxu0 0.0
    %2629 = vmatpush.xpose.msra.mxu0 0.0
    %2630 = vmatpush.xpose.msra.mxu0 0.0
    %2631 = vmatpush.xpose.msra.mxu0 0.0
    %2632 = vmatpush.xpose.msra.mxu0 0.0
    %2633 = vmatpush.xpose.msra.mxu0 0.0
    %2634 = vmatpush.xpose.msra.mxu0 0.0
    %2635 = vmatpush.xpose.msra.mxu0 0.0
    %v2636 = vand.u32 %v2593, 4294901760
    %v2637 = vsub.f32 %v2593, %v2636
    %v2638 = vand.u32 %v2637, 4294901760
    %v2639 = vsub.f32 %v2637, %v2638
    %v2640 = vand.u32 %v2639, 4294901760
    %2641 = vmatpush.xpose.msra.mxu0 %v2640
    %v2642 = vand.u32 %v2591, 4294901760
    %2643 = vmatmul.f32.gmra.mxu0 %v2642
    %v2644 = vpop.f32.mrf.mxu0
    %v2645 = vadd.f32 %v2619, %v2644
    %2646 = vdwg.mxu0
    %2647 = vmatpush.xpose.msra.mxu0 0.0
    %2648 = vmatpush.xpose.msra.mxu0 0.0
    %2649 = vmatpush.xpose.msra.mxu0 0.0
    %2650 = vmatpush.xpose.msra.mxu0 0.0
    %2651 = vmatpush.xpose.msra.mxu0 0.0
    %2652 = vmatpush.xpose.msra.mxu0 0.0
    %2653 = vmatpush.xpose.msra.mxu0 0.0
    %2654 = vmatpush.xpose.msra.mxu0 0.0
    %2655 = vmatpush.xpose.msra.mxu0 0.0
    %2656 = vmatpush.xpose.msra.mxu0 0.0
    %2657 = vmatpush.xpose.msra.mxu0 0.0
    %2658 = vmatpush.xpose.msra.mxu0 0.0
    %2659 = vmatpush.xpose.msra.mxu0 0.0
    %2660 = vmatpush.xpose.msra.mxu0 0.0
    %2661 = vmatpush.xpose.msra.mxu0 0.0
    %v2662 = vand.u32 %v2593, 4294901760
    %v2663 = vsub.f32 %v2593, %v2662
    %2664 = vmatpush.xpose.msra.mxu0 %v2663
    %v2665 = vand.u32 %v2591, 4294901760
    %v2666 = vsub.f32 %v2591, %v2665
    %2667 = vmatmul.f32.gmra.mxu0 %v2666
    %v2668 = vpop.f32.mrf.mxu0
    %v2669 = vadd.f32 %v2645, %v2668
    %2670 = vdwg.mxu0
    %2671 = vmatpush.xpose.msra.mxu0 0.0
    %2672 = vmatpush.xpose.msra.mxu0 0.0
    %2673 = vmatpush.xpose.msra.mxu0 0.0
    %2674 = vmatpush.xpose.msra.mxu0 0.0
    %2675 = vmatpush.xpose.msra.mxu0 0.0
    %2676 = vmatpush.xpose.msra.mxu0 0.0
    %2677 = vmatpush.xpose.msra.mxu0 0.0
    %2678 = vmatpush.xpose.msra.mxu0 0.0
    %2679 = vmatpush.xpose.msra.mxu0 0.0
    %2680 = vmatpush.xpose.msra.mxu0 0.0
    %2681 = vmatpush.xpose.msra.mxu0 0.0
    %2682 = vmatpush.xpose.msra.mxu0 0.0
    %2683 = vmatpush.xpose.msra.mxu0 0.0
    %2684 = vmatpush.xpose.msra.mxu0 0.0
    %2685 = vmatpush.xpose.msra.mxu0 0.0
    %v2686 = vand.u32 %v2593, 4294901760
    %2687 = vmatpush.xpose.msra.mxu0 %v2686
    %v2688 = vand.u32 %v2591, 4294901760
    %v2689 = vsub.f32 %v2591, %v2688
    %v2690 = vand.u32 %v2689, 4294901760
    %2691 = vmatmul.f32.gmra.mxu0 %v2690
    %v2692 = vpop.f32.mrf.mxu0
    %v2693 = vadd.f32 %v2669, %v2692
    %2694 = vdwg.mxu0
    %2695 = vmatpush.xpose.msra.mxu0 0.0
    %2696 = vmatpush.xpose.msra.mxu0 0.0
    %2697 = vmatpush.xpose.msra.mxu0 0.0
    %2698 = vmatpush.xpose.msra.mxu0 0.0
    %2699 = vmatpush.xpose.msra.mxu0 0.0
    %2700 = vmatpush.xpose.msra.mxu0 0.0
    %2701 = vmatpush.xpose.msra.mxu0 0.0
    %2702 = vmatpush.xpose.msra.mxu0 0.0
    %2703 = vmatpush.xpose.msra.mxu0 0.0
    %2704 = vmatpush.xpose.msra.mxu0 0.0
    %2705 = vmatpush.xpose.msra.mxu0 0.0
    %2706 = vmatpush.xpose.msra.mxu0 0.0
    %2707 = vmatpush.xpose.msra.mxu0 0.0
    %2708 = vmatpush.xpose.msra.mxu0 0.0
    %2709 = vmatpush.xpose.msra.mxu0 0.0
    %v2710 = vand.u32 %v2593, 4294901760
    %v2711 = vsub.f32 %v2593, %v2710
    %v2712 = vand.u32 %v2711, 4294901760
    %2713 = vmatpush.xpose.msra.mxu0 %v2712
    %v2714 = vand.u32 %v2591, 4294901760
    %2715 = vmatmul.f32.gmra.mxu0 %v2714
    %v2716 = vpop.f32.mrf.mxu0
    %v2717 = vadd.f32 %v2693, %v2716
    %2718 = vdwg.mxu0
    %2719 = vmatpush.xpose.msra.mxu0 0.0
    %2720 = vmatpush.xpose.msra.mxu0 0.0
    %2721 = vmatpush.xpose.msra.mxu0 0.0
    %2722 = vmatpush.xpose.msra.mxu0 0.0
    %2723 = vmatpush.xpose.msra.mxu0 0.0
    %2724 = vmatpush.xpose.msra.mxu0 0.0
    %2725 = vmatpush.xpose.msra.mxu0 0.0
    %2726 = vmatpush.xpose.msra.mxu0 0.0
    %2727 = vmatpush.xpose.msra.mxu0 0.0
    %2728 = vmatpush.xpose.msra.mxu0 0.0
    %2729 = vmatpush.xpose.msra.mxu0 0.0
    %2730 = vmatpush.xpose.msra.mxu0 0.0
    %2731 = vmatpush.xpose.msra.mxu0 0.0
    %2732 = vmatpush.xpose.msra.mxu0 0.0
    %2733 = vmatpush.xpose.msra.mxu0 0.0
    %v2734 = vand.u32 %v2593, 4294901760
    %2735 = vmatpush.xpose.msra.mxu0 %v2734
    %v2736 = vand.u32 %v2591, 4294901760
    %2737 = vmatmul.f32.gmra.mxu0 %v2736
    %v2738 = vpop.f32.mrf.mxu0
    %v2739 = vadd.f32 %v2717, %v2738
    %2740 = vdwg.mxu0
    %v2741 = vsel %vm587, %v2739, -inf
    %2742 = vmax.xlane.f32.xlu0 %v2741
    %v2743 = vpop.xlane.xlu0 %2742
    %v2744 = vsub.f32 %v2739, %v2743
    %v2745 = vmul.f32 %v2744, 1.442695
    %v2746 = vpow.pop %v2745
    %v2747 = vsel %vm587, %v2746, 0.0
    %2748 = vadd.xlane.f32.xlu0 %v2747
    %v2749 = vpop.xlane.xlu0 %2748
    %v2750 = vrcp.pop %v2749
    %v2751 = vmul.f32 %v2749, %v2750
    %v2752 = vsub.f32 1.0, %v2751
    %v2753 = vmul.f32 %v2750, %v2752
    %v2754 = vadd.f32 %v2750, %v2753
    %vm2755 = vweird.f32 %v2749
    %vm2756 = vweird.f32 %v2750
    %vm2757 = vmor %vm2755, %vm2756
    %v2758 = vsel %vm2757, %v2750, %v2754
    %v2759 = vand.u32 2147483647, %v2749
    %vm2760 = vcmp.eq.f32.partialorder %v2759, 8.507059e+37
    %v2761 = vand.u32 %v2749, 2147483648
    %v2762 = vor.u32 1.1754944e-38, %v2761
    %v2763 = vsel %vm2760, %v2762, %v2758
    %v2764 = vmul.f32 %v2746, %v2763
    %s2765 = scalar_lea.vmem [#allocation4], 48
    %2766 = vst.msk [vmem:[%s2765] sm:$0xff] %vm587, %v2764
    %2767 = vrot.lane.b32.xlu0 %v576, 112
    %v2768 = vpop.permute.xlu0 %2767
    %v2771 = vsel %vm587, %v2764, 0
    %2773 = vmatpush.msra.mxu0 0.0
    %2774 = vmatpush.msra.mxu0 0.0
    %2775 = vmatpush.msra.mxu0 0.0
    %2776 = vmatpush.msra.mxu0 0.0
    %2777 = vmatpush.msra.mxu0 0.0
    %2778 = vmatpush.msra.mxu0 0.0
    %2779 = vmatpush.msra.mxu0 0.0
    %2780 = vmatpush.msra.mxu0 0.0
    %2781 = vmatpush.msra.mxu0 0.0
    %2782 = vmatpush.msra.mxu0 0.0
    %2783 = vmatpush.msra.mxu0 0.0
    %2784 = vmatpush.msra.mxu0 0.0
    %2785 = vmatpush.msra.mxu0 0.0
    %2786 = vmatpush.msra.mxu0 0.0
    %2787 = vmatpush.msra.mxu0 0.0
    %v2788 = vand.u32 %v2768, 4294901760
    %2789 = vmatpush.msra.mxu0 %v2788
    %v2790 = vand.u32 %v2771, 4294901760
    %v2791 = vsub.f32 %v2771, %v2790
    %v2792 = vand.u32 %v2791, 4294901760
    %v2793 = vsub.f32 %v2791, %v2792
    %v2794 = vand.u32 %v2793, 4294901760
    %2795 = vmatmul.f32.gmra.mxu0 %v2794
    %v2796 = vpop.f32.mrf.mxu0
    %v2797 = vadd.f32 0.0, %v2796
    %2798 = vdwg.mxu0
    %2799 = vmatpush.msra.mxu0 0.0
    %2800 = vmatpush.msra.mxu0 0.0
    %2801 = vmatpush.msra.mxu0 0.0
    %2802 = vmatpush.msra.mxu0 0.0
    %2803 = vmatpush.msra.mxu0 0.0
    %2804 = vmatpush.msra.mxu0 0.0
    %2805 = vmatpush.msra.mxu0 0.0
    %2806 = vmatpush.msra.mxu0 0.0
    %2807 = vmatpush.msra.mxu0 0.0
    %2808 = vmatpush.msra.mxu0 0.0
    %2809 = vmatpush.msra.mxu0 0.0
    %2810 = vmatpush.msra.mxu0 0.0
    %2811 = vmatpush.msra.mxu0 0.0
    %2812 = vmatpush.msra.mxu0 0.0
    %2813 = vmatpush.msra.mxu0 0.0
    %v2814 = vand.u32 %v2768, 4294901760
    %v2815 = vsub.f32 %v2768, %v2814
    %v2816 = vand.u32 %v2815, 4294901760
    %v2817 = vsub.f32 %v2815, %v2816
    %v2818 = vand.u32 %v2817, 4294901760
    %2819 = vmatpush.msra.mxu0 %v2818
    %v2820 = vand.u32 %v2771, 4294901760
    %2821 = vmatmul.f32.gmra.mxu0 %v2820
    %v2822 = vpop.f32.mrf.mxu0
    %v2823 = vadd.f32 %v2797, %v2822
    %2824 = vdwg.mxu0
    %2825 = vmatpush.msra.mxu0 0.0
    %2826 = vmatpush.msra.mxu0 0.0
    %2827 = vmatpush.msra.mxu0 0.0
    %2828 = vmatpush.msra.mxu0 0.0
    %2829 = vmatpush.msra.mxu0 0.0
    %2830 = vmatpush.msra.mxu0 0.0
    %2831 = vmatpush.msra.mxu0 0.0
    %2832 = vmatpush.msra.mxu0 0.0
    %2833 = vmatpush.msra.mxu0 0.0
    %2834 = vmatpush.msra.mxu0 0.0
    %2835 = vmatpush.msra.mxu0 0.0
    %2836 = vmatpush.msra.mxu0 0.0
    %2837 = vmatpush.msra.mxu0 0.0
    %2838 = vmatpush.msra.mxu0 0.0
    %2839 = vmatpush.msra.mxu0 0.0
    %v2840 = vand.u32 %v2768, 4294901760
    %v2841 = vsub.f32 %v2768, %v2840
    %2842 = vmatpush.msra.mxu0 %v2841
    %v2843 = vand.u32 %v2771, 4294901760
    %v2844 = vsub.f32 %v2771, %v2843
    %2845 = vmatmul.f32.gmra.mxu0 %v2844
    %v2846 = vpop.f32.mrf.mxu0
    %v2847 = vadd.f32 %v2823, %v2846
    %2848 = vdwg.mxu0
    %2849 = vmatpush.msra.mxu0 0.0
    %2850 = vmatpush.msra.mxu0 0.0
    %2851 = vmatpush.msra.mxu0 0.0
    %2852 = vmatpush.msra.mxu0 0.0
    %2853 = vmatpush.msra.mxu0 0.0
    %2854 = vmatpush.msra.mxu0 0.0
    %2855 = vmatpush.msra.mxu0 0.0
    %2856 = vmatpush.msra.mxu0 0.0
    %2857 = vmatpush.msra.mxu0 0.0
    %2858 = vmatpush.msra.mxu0 0.0
    %2859 = vmatpush.msra.mxu0 0.0
    %2860 = vmatpush.msra.mxu0 0.0
    %2861 = vmatpush.msra.mxu0 0.0
    %2862 = vmatpush.msra.mxu0 0.0
    %2863 = vmatpush.msra.mxu0 0.0
    %v2864 = vand.u32 %v2768, 4294901760
    %2865 = vmatpush.msra.mxu0 %v2864
    %v2866 = vand.u32 %v2771, 4294901760
    %v2867 = vsub.f32 %v2771, %v2866
    %v2868 = vand.u32 %v2867, 4294901760
    %2869 = vmatmul.f32.gmra.mxu0 %v2868
    %v2870 = vpop.f32.mrf.mxu0
    %v2871 = vadd.f32 %v2847, %v2870
    %2872 = vdwg.mxu0
    %2873 = vmatpush.msra.mxu0 0.0
    %2874 = vmatpush.msra.mxu0 0.0
    %2875 = vmatpush.msra.mxu0 0.0
    %2876 = vmatpush.msra.mxu0 0.0
    %2877 = vmatpush.msra.mxu0 0.0
    %2878 = vmatpush.msra.mxu0 0.0
    %2879 = vmatpush.msra.mxu0 0.0
    %2880 = vmatpush.msra.mxu0 0.0
    %2881 = vmatpush.msra.mxu0 0.0
    %2882 = vmatpush.msra.mxu0 0.0
    %2883 = vmatpush.msra.mxu0 0.0
    %2884 = vmatpush.msra.mxu0 0.0
    %2885 = vmatpush.msra.mxu0 0.0
    %2886 = vmatpush.msra.mxu0 0.0
    %2887 = vmatpush.msra.mxu0 0.0
    %v2888 = vand.u32 %v2768, 4294901760
    %v2889 = vsub.f32 %v2768, %v2888
    %v2890 = vand.u32 %v2889, 4294901760
    %2891 = vmatpush.msra.mxu0 %v2890
    %v2892 = vand.u32 %v2771, 4294901760
    %2893 = vmatmul.f32.gmra.mxu0 %v2892
    %v2894 = vpop.f32.mrf.mxu0
    %v2895 = vadd.f32 %v2871, %v2894
    %2896 = vdwg.mxu0
    %2897 = vmatpush.msra.mxu0 0.0
    %2898 = vmatpush.msra.mxu0 0.0
    %2899 = vmatpush.msra.mxu0 0.0
    %2900 = vmatpush.msra.mxu0 0.0
    %2901 = vmatpush.msra.mxu0 0.0
    %2902 = vmatpush.msra.mxu0 0.0
    %2903 = vmatpush.msra.mxu0 0.0
    %2904 = vmatpush.msra.mxu0 0.0
    %2905 = vmatpush.msra.mxu0 0.0
    %2906 = vmatpush.msra.mxu0 0.0
    %2907 = vmatpush.msra.mxu0 0.0
    %2908 = vmatpush.msra.mxu0 0.0
    %2909 = vmatpush.msra.mxu0 0.0
    %2910 = vmatpush.msra.mxu0 0.0
    %2911 = vmatpush.msra.mxu0 0.0
    %v2912 = vand.u32 %v2768, 4294901760
    %2913 = vmatpush.msra.mxu0 %v2912
    %v2914 = vand.u32 %v2771, 4294901760
    %2915 = vmatmul.f32.gmra.mxu0 %v2914
    %v2916 = vpop.f32.mrf.mxu0
    %v2917 = vadd.f32 %v2895, %v2916
    %2918 = vdwg.mxu0
    %2919 = vrot.lane.b32.xlu0 %v350, 104
    %v2920 = vpop.permute.xlu0 %2919
    %2921 = vrot.lane.b32.xlu0 %v350, 72
    %v2922 = vpop.permute.xlu0 %2921
    %v2923 = vsel %vm587, %v2920, 0
    %v2925 = vsel %vm587, %v2922, 0
    %2927 = vmatpush.xpose.msra.mxu0 0.0
    %2928 = vmatpush.xpose.msra.mxu0 0.0
    %2929 = vmatpush.xpose.msra.mxu0 0.0
    %2930 = vmatpush.xpose.msra.mxu0 0.0
    %2931 = vmatpush.xpose.msra.mxu0 0.0
    %2932 = vmatpush.xpose.msra.mxu0 0.0
    %2933 = vmatpush.xpose.msra.mxu0 0.0
    %2934 = vmatpush.xpose.msra.mxu0 0.0
    %2935 = vmatpush.xpose.msra.mxu0 0.0
    %2936 = vmatpush.xpose.msra.mxu0 0.0
    %2937 = vmatpush.xpose.msra.mxu0 0.0
    %2938 = vmatpush.xpose.msra.mxu0 0.0
    %2939 = vmatpush.xpose.msra.mxu0 0.0
    %2940 = vmatpush.xpose.msra.mxu0 0.0
    %2941 = vmatpush.xpose.msra.mxu0 0.0
    %v2942 = vand.u32 %v2925, 4294901760
    %2943 = vmatpush.xpose.msra.mxu0 %v2942
    %v2944 = vand.u32 %v2923, 4294901760
    %v2945 = vsub.f32 %v2923, %v2944
    %v2946 = vand.u32 %v2945, 4294901760
    %v2947 = vsub.f32 %v2945, %v2946
    %v2948 = vand.u32 %v2947, 4294901760
    %2949 = vmatmul.f32.gmra.mxu0 %v2948
    %v2950 = vpop.f32.mrf.mxu0
    %v2951 = vadd.f32 %v583, %v2950
    %2952 = vdwg.mxu0
    %2953 = vmatpush.xpose.msra.mxu0 0.0
    %2954 = vmatpush.xpose.msra.mxu0 0.0
    %2955 = vmatpush.xpose.msra.mxu0 0.0
    %2956 = vmatpush.xpose.msra.mxu0 0.0
    %2957 = vmatpush.xpose.msra.mxu0 0.0
    %2958 = vmatpush.xpose.msra.mxu0 0.0
    %2959 = vmatpush.xpose.msra.mxu0 0.0
    %2960 = vmatpush.xpose.msra.mxu0 0.0
    %2961 = vmatpush.xpose.msra.mxu0 0.0
    %2962 = vmatpush.xpose.msra.mxu0 0.0
    %2963 = vmatpush.xpose.msra.mxu0 0.0
    %2964 = vmatpush.xpose.msra.mxu0 0.0
    %2965 = vmatpush.xpose.msra.mxu0 0.0
    %2966 = vmatpush.xpose.msra.mxu0 0.0
    %2967 = vmatpush.xpose.msra.mxu0 0.0
    %v2968 = vand.u32 %v2925, 4294901760
    %v2969 = vsub.f32 %v2925, %v2968
    %v2970 = vand.u32 %v2969, 4294901760
    %v2971 = vsub.f32 %v2969, %v2970
    %v2972 = vand.u32 %v2971, 4294901760
    %2973 = vmatpush.xpose.msra.mxu0 %v2972
    %v2974 = vand.u32 %v2923, 4294901760
    %2975 = vmatmul.f32.gmra.mxu0 %v2974
    %v2976 = vpop.f32.mrf.mxu0
    %v2977 = vadd.f32 %v2951, %v2976
    %2978 = vdwg.mxu0
    %2979 = vmatpush.xpose.msra.mxu0 0.0
    %2980 = vmatpush.xpose.msra.mxu0 0.0
    %2981 = vmatpush.xpose.msra.mxu0 0.0
    %2982 = vmatpush.xpose.msra.mxu0 0.0
    %2983 = vmatpush.xpose.msra.mxu0 0.0
    %2984 = vmatpush.xpose.msra.mxu0 0.0
    %2985 = vmatpush.xpose.msra.mxu0 0.0
    %2986 = vmatpush.xpose.msra.mxu0 0.0
    %2987 = vmatpush.xpose.msra.mxu0 0.0
    %2988 = vmatpush.xpose.msra.mxu0 0.0
    %2989 = vmatpush.xpose.msra.mxu0 0.0
    %2990 = vmatpush.xpose.msra.mxu0 0.0
    %2991 = vmatpush.xpose.msra.mxu0 0.0
    %2992 = vmatpush.xpose.msra.mxu0 0.0
    %2993 = vmatpush.xpose.msra.mxu0 0.0
    %v2994 = vand.u32 %v2925, 4294901760
    %v2995 = vsub.f32 %v2925, %v2994
    %2996 = vmatpush.xpose.msra.mxu0 %v2995
    %v2997 = vand.u32 %v2923, 4294901760
    %v2998 = vsub.f32 %v2923, %v2997
    %2999 = vmatmul.f32.gmra.mxu0 %v2998
    %v3000 = vpop.f32.mrf.mxu0
    %v3001 = vadd.f32 %v2977, %v3000
    %3002 = vdwg.mxu0
    %3003 = vmatpush.xpose.msra.mxu0 0.0
    %3004 = vmatpush.xpose.msra.mxu0 0.0
    %3005 = vmatpush.xpose.msra.mxu0 0.0
    %3006 = vmatpush.xpose.msra.mxu0 0.0
    %3007 = vmatpush.xpose.msra.mxu0 0.0
    %3008 = vmatpush.xpose.msra.mxu0 0.0
    %3009 = vmatpush.xpose.msra.mxu0 0.0
    %3010 = vmatpush.xpose.msra.mxu0 0.0
    %3011 = vmatpush.xpose.msra.mxu0 0.0
    %3012 = vmatpush.xpose.msra.mxu0 0.0
    %3013 = vmatpush.xpose.msra.mxu0 0.0
    %3014 = vmatpush.xpose.msra.mxu0 0.0
    %3015 = vmatpush.xpose.msra.mxu0 0.0
    %3016 = vmatpush.xpose.msra.mxu0 0.0
    %3017 = vmatpush.xpose.msra.mxu0 0.0
    %v3018 = vand.u32 %v2925, 4294901760
    %3019 = vmatpush.xpose.msra.mxu0 %v3018
    %v3020 = vand.u32 %v2923, 4294901760
    %v3021 = vsub.f32 %v2923, %v3020
    %v3022 = vand.u32 %v3021, 4294901760
    %3023 = vmatmul.f32.gmra.mxu0 %v3022
    %v3024 = vpop.f32.mrf.mxu0
    %v3025 = vadd.f32 %v3001, %v3024
    %3026 = vdwg.mxu0
    %3027 = vmatpush.xpose.msra.mxu0 0.0
    %3028 = vmatpush.xpose.msra.mxu0 0.0
    %3029 = vmatpush.xpose.msra.mxu0 0.0
    %3030 = vmatpush.xpose.msra.mxu0 0.0
    %3031 = vmatpush.xpose.msra.mxu0 0.0
    %3032 = vmatpush.xpose.msra.mxu0 0.0
    %3033 = vmatpush.xpose.msra.mxu0 0.0
    %3034 = vmatpush.xpose.msra.mxu0 0.0
    %3035 = vmatpush.xpose.msra.mxu0 0.0
    %3036 = vmatpush.xpose.msra.mxu0 0.0
    %3037 = vmatpush.xpose.msra.mxu0 0.0
    %3038 = vmatpush.xpose.msra.mxu0 0.0
    %3039 = vmatpush.xpose.msra.mxu0 0.0
    %3040 = vmatpush.xpose.msra.mxu0 0.0
    %3041 = vmatpush.xpose.msra.mxu0 0.0
    %v3042 = vand.u32 %v2925, 4294901760
    %v3043 = vsub.f32 %v2925, %v3042
    %v3044 = vand.u32 %v3043, 4294901760
    %3045 = vmatpush.xpose.msra.mxu0 %v3044
    %v3046 = vand.u32 %v2923, 4294901760
    %3047 = vmatmul.f32.gmra.mxu0 %v3046
    %v3048 = vpop.f32.mrf.mxu0
    %v3049 = vadd.f32 %v3025, %v3048
    %3050 = vdwg.mxu0
    %3051 = vmatpush.xpose.msra.mxu0 0.0
    %3052 = vmatpush.xpose.msra.mxu0 0.0
    %3053 = vmatpush.xpose.msra.mxu0 0.0
    %3054 = vmatpush.xpose.msra.mxu0 0.0
    %3055 = vmatpush.xpose.msra.mxu0 0.0
    %3056 = vmatpush.xpose.msra.mxu0 0.0
    %3057 = vmatpush.xpose.msra.mxu0 0.0
    %3058 = vmatpush.xpose.msra.mxu0 0.0
    %3059 = vmatpush.xpose.msra.mxu0 0.0
    %3060 = vmatpush.xpose.msra.mxu0 0.0
    %3061 = vmatpush.xpose.msra.mxu0 0.0
    %3062 = vmatpush.xpose.msra.mxu0 0.0
    %3063 = vmatpush.xpose.msra.mxu0 0.0
    %3064 = vmatpush.xpose.msra.mxu0 0.0
    %3065 = vmatpush.xpose.msra.mxu0 0.0
    %v3066 = vand.u32 %v2925, 4294901760
    %3067 = vmatpush.xpose.msra.mxu0 %v3066
    %v3068 = vand.u32 %v2923, 4294901760
    %3069 = vmatmul.f32.gmra.mxu0 %v3068
    %v3070 = vpop.f32.mrf.mxu0
    %v3071 = vadd.f32 %v3049, %v3070
    %3072 = vdwg.mxu0
    %v3073 = vsel %vm587, %v3071, -inf
    %3074 = vmax.xlane.f32.xlu0 %v3073
    %v3075 = vpop.xlane.xlu0 %3074
    %v3076 = vsub.f32 %v3071, %v3075
    %v3077 = vmul.f32 %v3076, 1.442695
    %v3078 = vpow.pop %v3077
    %v3079 = vsel %vm587, %v3078, 0.0
    %3080 = vadd.xlane.f32.xlu0 %v3079
    %v3081 = vpop.xlane.xlu0 %3080
    %v3082 = vrcp.pop %v3081
    %v3083 = vmul.f32 %v3081, %v3082
    %v3084 = vsub.f32 1.0, %v3083
    %v3085 = vmul.f32 %v3082, %v3084
    %v3086 = vadd.f32 %v3082, %v3085
    %vm3087 = vweird.f32 %v3081
    %vm3088 = vweird.f32 %v3082
    %vm3089 = vmor %vm3087, %vm3088
    %v3090 = vsel %vm3089, %v3082, %v3086
    %v3091 = vand.u32 2147483647, %v3081
    %vm3092 = vcmp.eq.f32.partialorder %v3091, 8.507059e+37
    %v3093 = vand.u32 %v3081, 2147483648
    %v3094 = vor.u32 1.1754944e-38, %v3093
    %v3095 = vsel %vm3092, %v3094, %v3090
    %v3096 = vmul.f32 %v3078, %v3095
    %s3097 = scalar_lea.vmem [#allocation4], 56
    %3098 = vst.msk [vmem:[%s3097] sm:$0xff] %vm587, %v3096
    %3099 = vrot.lane.b32.xlu0 %v576, 104
    %v3100 = vpop.permute.xlu0 %3099
    %v3103 = vsel %vm587, %v3096, 0
    %3105 = vmatpush.msra.mxu0 0.0
    %3106 = vmatpush.msra.mxu0 0.0
    %3107 = vmatpush.msra.mxu0 0.0
    %3108 = vmatpush.msra.mxu0 0.0
    %3109 = vmatpush.msra.mxu0 0.0
    %3110 = vmatpush.msra.mxu0 0.0
    %3111 = vmatpush.msra.mxu0 0.0
    %3112 = vmatpush.msra.mxu0 0.0
    %3113 = vmatpush.msra.mxu0 0.0
    %3114 = vmatpush.msra.mxu0 0.0
    %3115 = vmatpush.msra.mxu0 0.0
    %3116 = vmatpush.msra.mxu0 0.0
    %3117 = vmatpush.msra.mxu0 0.0
    %3118 = vmatpush.msra.mxu0 0.0
    %3119 = vmatpush.msra.mxu0 0.0
    %v3120 = vand.u32 %v3100, 4294901760
    %3121 = vmatpush.msra.mxu0 %v3120
    %v3122 = vand.u32 %v3103, 4294901760
    %v3123 = vsub.f32 %v3103, %v3122
    %v3124 = vand.u32 %v3123, 4294901760
    %v3125 = vsub.f32 %v3123, %v3124
    %v3126 = vand.u32 %v3125, 4294901760
    %3127 = vmatmul.f32.gmra.mxu0 %v3126
    %v3128 = vpop.f32.mrf.mxu0
    %v3129 = vadd.f32 0.0, %v3128
    %3130 = vdwg.mxu0
    %3131 = vmatpush.msra.mxu0 0.0
    %3132 = vmatpush.msra.mxu0 0.0
    %3133 = vmatpush.msra.mxu0 0.0
    %3134 = vmatpush.msra.mxu0 0.0
    %3135 = vmatpush.msra.mxu0 0.0
    %3136 = vmatpush.msra.mxu0 0.0
    %3137 = vmatpush.msra.mxu0 0.0
    %3138 = vmatpush.msra.mxu0 0.0
    %3139 = vmatpush.msra.mxu0 0.0
    %3140 = vmatpush.msra.mxu0 0.0
    %3141 = vmatpush.msra.mxu0 0.0
    %3142 = vmatpush.msra.mxu0 0.0
    %3143 = vmatpush.msra.mxu0 0.0
    %3144 = vmatpush.msra.mxu0 0.0
    %3145 = vmatpush.msra.mxu0 0.0
    %v3146 = vand.u32 %v3100, 4294901760
    %v3147 = vsub.f32 %v3100, %v3146
    %v3148 = vand.u32 %v3147, 4294901760
    %v3149 = vsub.f32 %v3147, %v3148
    %v3150 = vand.u32 %v3149, 4294901760
    %3151 = vmatpush.msra.mxu0 %v3150
    %v3152 = vand.u32 %v3103, 4294901760
    %3153 = vmatmul.f32.gmra.mxu0 %v3152
    %v3154 = vpop.f32.mrf.mxu0
    %v3155 = vadd.f32 %v3129, %v3154
    %3156 = vdwg.mxu0
    %3157 = vmatpush.msra.mxu0 0.0
    %3158 = vmatpush.msra.mxu0 0.0
    %3159 = vmatpush.msra.mxu0 0.0
    %3160 = vmatpush.msra.mxu0 0.0
    %3161 = vmatpush.msra.mxu0 0.0
    %3162 = vmatpush.msra.mxu0 0.0
    %3163 = vmatpush.msra.mxu0 0.0
    %3164 = vmatpush.msra.mxu0 0.0
    %3165 = vmatpush.msra.mxu0 0.0
    %3166 = vmatpush.msra.mxu0 0.0
    %3167 = vmatpush.msra.mxu0 0.0
    %3168 = vmatpush.msra.mxu0 0.0
    %3169 = vmatpush.msra.mxu0 0.0
    %3170 = vmatpush.msra.mxu0 0.0
    %3171 = vmatpush.msra.mxu0 0.0
    %v3172 = vand.u32 %v3100, 4294901760
    %v3173 = vsub.f32 %v3100, %v3172
    %3174 = vmatpush.msra.mxu0 %v3173
    %v3175 = vand.u32 %v3103, 4294901760
    %v3176 = vsub.f32 %v3103, %v3175
    %3177 = vmatmul.f32.gmra.mxu0 %v3176
    %v3178 = vpop.f32.mrf.mxu0
    %v3179 = vadd.f32 %v3155, %v3178
    %3180 = vdwg.mxu0
    %3181 = vmatpush.msra.mxu0 0.0
    %3182 = vmatpush.msra.mxu0 0.0
    %3183 = vmatpush.msra.mxu0 0.0
    %3184 = vmatpush.msra.mxu0 0.0
    %3185 = vmatpush.msra.mxu0 0.0
    %3186 = vmatpush.msra.mxu0 0.0
    %3187 = vmatpush.msra.mxu0 0.0
    %3188 = vmatpush.msra.mxu0 0.0
    %3189 = vmatpush.msra.mxu0 0.0
    %3190 = vmatpush.msra.mxu0 0.0
    %3191 = vmatpush.msra.mxu0 0.0
    %3192 = vmatpush.msra.mxu0 0.0
    %3193 = vmatpush.msra.mxu0 0.0
    %3194 = vmatpush.msra.mxu0 0.0
    %3195 = vmatpush.msra.mxu0 0.0
    %v3196 = vand.u32 %v3100, 4294901760
    %3197 = vmatpush.msra.mxu0 %v3196
    %v3198 = vand.u32 %v3103, 4294901760
    %v3199 = vsub.f32 %v3103, %v3198
    %v3200 = vand.u32 %v3199, 4294901760
    %3201 = vmatmul.f32.gmra.mxu0 %v3200
    %v3202 = vpop.f32.mrf.mxu0
    %v3203 = vadd.f32 %v3179, %v3202
    %3204 = vdwg.mxu0
    %3205 = vmatpush.msra.mxu0 0.0
    %3206 = vmatpush.msra.mxu0 0.0
    %3207 = vmatpush.msra.mxu0 0.0
    %3208 = vmatpush.msra.mxu0 0.0
    %3209 = vmatpush.msra.mxu0 0.0
    %3210 = vmatpush.msra.mxu0 0.0
    %3211 = vmatpush.msra.mxu0 0.0
    %3212 = vmatpush.msra.mxu0 0.0
    %3213 = vmatpush.msra.mxu0 0.0
    %3214 = vmatpush.msra.mxu0 0.0
    %3215 = vmatpush.msra.mxu0 0.0
    %3216 = vmatpush.msra.mxu0 0.0
    %3217 = vmatpush.msra.mxu0 0.0
    %3218 = vmatpush.msra.mxu0 0.0
    %3219 = vmatpush.msra.mxu0 0.0
    %v3220 = vand.u32 %v3100, 4294901760
    %v3221 = vsub.f32 %v3100, %v3220
    %v3222 = vand.u32 %v3221, 4294901760
    %3223 = vmatpush.msra.mxu0 %v3222
    %v3224 = vand.u32 %v3103, 4294901760
    %3225 = vmatmul.f32.gmra.mxu0 %v3224
    %v3226 = vpop.f32.mrf.mxu0
    %v3227 = vadd.f32 %v3203, %v3226
    %3228 = vdwg.mxu0
    %3229 = vmatpush.msra.mxu0 0.0
    %3230 = vmatpush.msra.mxu0 0.0
    %3231 = vmatpush.msra.mxu0 0.0
    %3232 = vmatpush.msra.mxu0 0.0
    %3233 = vmatpush.msra.mxu0 0.0
    %3234 = vmatpush.msra.mxu0 0.0
    %3235 = vmatpush.msra.mxu0 0.0
    %3236 = vmatpush.msra.mxu0 0.0
    %3237 = vmatpush.msra.mxu0 0.0
    %3238 = vmatpush.msra.mxu0 0.0
    %3239 = vmatpush.msra.mxu0 0.0
    %3240 = vmatpush.msra.mxu0 0.0
    %3241 = vmatpush.msra.mxu0 0.0
    %3242 = vmatpush.msra.mxu0 0.0
    %3243 = vmatpush.msra.mxu0 0.0
    %v3244 = vand.u32 %v3100, 4294901760
    %3245 = vmatpush.msra.mxu0 %v3244
    %v3246 = vand.u32 %v3103, 4294901760
    %3247 = vmatmul.f32.gmra.mxu0 %v3246
    %v3248 = vpop.f32.mrf.mxu0
    %v3249 = vadd.f32 %v3227, %v3248
    %3250 = vdwg.mxu0
    %3252 = vrot.lane.b32.xlu0 %v2585, 8
    %v3253 = vpop.permute.xlu0 %3252
    %3256 = vrot.lane.b32.xlu0 %v2917, 16
    %v3257 = vpop.permute.xlu0 %3256
    %3260 = vrot.lane.b32.xlu0 %v3249, 24
    %v3261 = vpop.permute.xlu0 %3260
    %v3263 = vsel %vm587, %v2252, %v3253
    %v3264 = vsel %vm1922, %v3263, %v3257
    %v3265 = vsel %vm1924, %v3264, %v3261
    %v3266 = vld [vmem:[%s6] sm:$0xff]
    %v3267 = vld [vmem:[%s6 + $0x8] sm:$0xff]
    %v3268 = vld [vmem:[%s6 + $0x10] sm:$0xff]
    %v3269 = vld [vmem:[%s6 + $0x18] sm:$0xff]
    %v3270 = vld [vmem:[%s7] sm:$0x1]
    %v3272 = vperm.slane %v3270, 0
    %v3275 = vsel %vm60, %v1925, 0
    %v3278 = vsel %vm60, %v3265, 0
    %3280 = vmatpush.msra.mxu0 0.0
    %3281 = vmatpush.msra.mxu0 0.0
    %3282 = vmatpush.msra.mxu0 0.0
    %3283 = vmatpush.msra.mxu0 0.0
    %3284 = vmatpush.msra.mxu0 0.0
    %3285 = vmatpush.msra.mxu0 0.0
    %3286 = vmatpush.msra.mxu0 0.0
    %3287 = vmatpush.msra.mxu0 0.0
    %3288 = vmatpush.msra.mxu0 0.0
    %3289 = vmatpush.msra.mxu0 0.0
    %3290 = vmatpush.msra.mxu0 0.0
    %3291 = vmatpush.msra.mxu0 0.0
    %v3292 = vand.u32 %v3269, 4294901760
    %3293 = vmatpush.msra.mxu0 %v3292
    %v3294 = vand.u32 %v3268, 4294901760
    %3295 = vmatpush.msra.mxu0 %v3294
    %v3296 = vand.u32 %v3267, 4294901760
    %3297 = vmatpush.msra.mxu0 %v3296
    %v3298 = vand.u32 %v3266, 4294901760
    %3299 = vmatpush.msra.mxu0 %v3298
    %v3300 = vand.u32 %v3275, 4294901760
    %v3301 = vsub.f32 %v3275, %v3300
    %v3302 = vand.u32 %v3301, 4294901760
    %v3303 = vsub.f32 %v3301, %v3302
    %v3304 = vand.u32 %v3303, 4294901760
    %3305 = vmatmul.f32.gmra.mxu0 %v3304
    %v3306 = vpop.f32.mrf.mxu0
    %v3307 = vadd.f32 %v3272, %v3306
    %v3308 = vand.u32 %v3278, 4294901760
    %v3309 = vsub.f32 %v3278, %v3308
    %v3310 = vand.u32 %v3309, 4294901760
    %v3311 = vsub.f32 %v3309, %v3310
    %v3312 = vand.u32 %v3311, 4294901760
    %3313 = vmatmul.f32.gmra.mxu0 %v3312
    %v3314 = vpop.f32.mrf.mxu0
    %v3315 = vadd.f32 %v3272, %v3314
    %3316 = vdwg.mxu0
    %3317 = vmatpush.msra.mxu0 0.0
    %3318 = vmatpush.msra.mxu0 0.0
    %3319 = vmatpush.msra.mxu0 0.0
    %3320 = vmatpush.msra.mxu0 0.0
    %3321 = vmatpush.msra.mxu0 0.0
    %3322 = vmatpush.msra.mxu0 0.0
    %3323 = vmatpush.msra.mxu0 0.0
    %3324 = vmatpush.msra.mxu0 0.0
    %3325 = vmatpush.msra.mxu0 0.0
    %3326 = vmatpush.msra.mxu0 0.0
    %3327 = vmatpush.msra.mxu0 0.0
    %3328 = vmatpush.msra.mxu0 0.0
    %v3329 = vand.u32 %v3269, 4294901760
    %v3330 = vsub.f32 %v3269, %v3329
    %v3331 = vand.u32 %v3330, 4294901760
    %v3332 = vsub.f32 %v3330, %v3331
    %v3333 = vand.u32 %v3332, 4294901760
    %3334 = vmatpush.msra.mxu0 %v3333
    %v3335 = vand.u32 %v3268, 4294901760
    %v3336 = vsub.f32 %v3268, %v3335
    %v3337 = vand.u32 %v3336, 4294901760
    %v3338 = vsub.f32 %v3336, %v3337
    %v3339 = vand.u32 %v3338, 4294901760
    %3340 = vmatpush.msra.mxu0 %v3339
    %v3341 = vand.u32 %v3267, 4294901760
    %v3342 = vsub.f32 %v3267, %v3341
    %v3343 = vand.u32 %v3342, 4294901760
    %v3344 = vsub.f32 %v3342, %v3343
    %v3345 = vand.u32 %v3344, 4294901760
    %3346 = vmatpush.msra.mxu0 %v3345
    %v3347 = vand.u32 %v3266, 4294901760
    %v3348 = vsub.f32 %v3266, %v3347
    %v3349 = vand.u32 %v3348, 4294901760
    %v3350 = vsub.f32 %v3348, %v3349
    %v3351 = vand.u32 %v3350, 4294901760
    %3352 = vmatpush.msra.mxu0 %v3351
    %v3353 = vand.u32 %v3275, 4294901760
    %3354 = vmatmul.f32.gmra.mxu0 %v3353
    %v3355 = vpop.f32.mrf.mxu0
    %v3356 = vadd.f32 %v3307, %v3355
    %v3357 = vand.u32 %v3278, 4294901760
    %3358 = vmatmul.f32.gmra.mxu0 %v3357
    %v3359 = vpop.f32.mrf.mxu0
    %v3360 = vadd.f32 %v3315, %v3359
    %3361 = vdwg.mxu0
    %3362 = vmatpush.msra.mxu0 0.0
    %3363 = vmatpush.msra.mxu0 0.0
    %3364 = vmatpush.msra.mxu0 0.0
    %3365 = vmatpush.msra.mxu0 0.0
    %3366 = vmatpush.msra.mxu0 0.0
    %3367 = vmatpush.msra.mxu0 0.0
    %3368 = vmatpush.msra.mxu0 0.0
    %3369 = vmatpush.msra.mxu0 0.0
    %3370 = vmatpush.msra.mxu0 0.0
    %3371 = vmatpush.msra.mxu0 0.0
    %3372 = vmatpush.msra.mxu0 0.0
    %3373 = vmatpush.msra.mxu0 0.0
    %v3374 = vand.u32 %v3269, 4294901760
    %v3375 = vsub.f32 %v3269, %v3374
    %3376 = vmatpush.msra.mxu0 %v3375
    %v3377 = vand.u32 %v3268, 4294901760
    %v3378 = vsub.f32 %v3268, %v3377
    %3379 = vmatpush.msra.mxu0 %v3378
    %v3380 = vand.u32 %v3267, 4294901760
    %v3381 = vsub.f32 %v3267, %v3380
    %3382 = vmatpush.msra.mxu0 %v3381
    %v3383 = vand.u32 %v3266, 4294901760
    %v3384 = vsub.f32 %v3266, %v3383
    %3385 = vmatpush.msra.mxu0 %v3384
    %v3386 = vand.u32 %v3275, 4294901760
    %v3387 = vsub.f32 %v3275, %v3386
    %3388 = vmatmul.f32.gmra.mxu0 %v3387
    %v3389 = vpop.f32.mrf.mxu0
    %v3390 = vadd.f32 %v3356, %v3389
    %v3391 = vand.u32 %v3278, 4294901760
    %v3392 = vsub.f32 %v3278, %v3391
    %3393 = vmatmul.f32.gmra.mxu0 %v3392
    %v3394 = vpop.f32.mrf.mxu0
    %v3395 = vadd.f32 %v3360, %v3394
    %3396 = vdwg.mxu0
    %3397 = vmatpush.msra.mxu0 0.0
    %3398 = vmatpush.msra.mxu0 0.0
    %3399 = vmatpush.msra.mxu0 0.0
    %3400 = vmatpush.msra.mxu0 0.0
    %3401 = vmatpush.msra.mxu0 0.0
    %3402 = vmatpush.msra.mxu0 0.0
    %3403 = vmatpush.msra.mxu0 0.0
    %3404 = vmatpush.msra.mxu0 0.0
    %3405 = vmatpush.msra.mxu0 0.0
    %3406 = vmatpush.msra.mxu0 0.0
    %3407 = vmatpush.msra.mxu0 0.0
    %3408 = vmatpush.msra.mxu0 0.0
    %v3409 = vand.u32 %v3269, 4294901760
    %3410 = vmatpush.msra.mxu0 %v3409
    %v3411 = vand.u32 %v3268, 4294901760
    %3412 = vmatpush.msra.mxu0 %v3411
    %v3413 = vand.u32 %v3267, 4294901760
    %3414 = vmatpush.msra.mxu0 %v3413
    %v3415 = vand.u32 %v3266, 4294901760
    %3416 = vmatpush.msra.mxu0 %v3415
    %v3417 = vand.u32 %v3275, 4294901760
    %v3418 = vsub.f32 %v3275, %v3417
    %v3419 = vand.u32 %v3418, 4294901760
    %3420 = vmatmul.f32.gmra.mxu0 %v3419
    %v3421 = vpop.f32.mrf.mxu0
    %v3422 = vadd.f32 %v3390, %v3421
    %v3423 = vand.u32 %v3278, 4294901760
    %v3424 = vsub.f32 %v3278, %v3423
    %v3425 = vand.u32 %v3424, 4294901760
    %3426 = vmatmul.f32.gmra.mxu0 %v3425
    %v3427 = vpop.f32.mrf.mxu0
    %v3428 = vadd.f32 %v3395, %v3427
    %3429 = vdwg.mxu0
    %3430 = vmatpush.msra.mxu0 0.0
    %3431 = vmatpush.msra.mxu0 0.0
    %3432 = vmatpush.msra.mxu0 0.0
    %3433 = vmatpush.msra.mxu0 0.0
    %3434 = vmatpush.msra.mxu0 0.0
    %3435 = vmatpush.msra.mxu0 0.0
    %3436 = vmatpush.msra.mxu0 0.0
    %3437 = vmatpush.msra.mxu0 0.0
    %3438 = vmatpush.msra.mxu0 0.0
    %3439 = vmatpush.msra.mxu0 0.0
    %3440 = vmatpush.msra.mxu0 0.0
    %3441 = vmatpush.msra.mxu0 0.0
    %v3442 = vand.u32 %v3269, 4294901760
    %v3443 = vsub.f32 %v3269, %v3442
    %v3444 = vand.u32 %v3443, 4294901760
    %3445 = vmatpush.msra.mxu0 %v3444
    %v3446 = vand.u32 %v3268, 4294901760
    %v3447 = vsub.f32 %v3268, %v3446
    %v3448 = vand.u32 %v3447, 4294901760
    %3449 = vmatpush.msra.mxu0 %v3448
    %v3450 = vand.u32 %v3267, 4294901760
    %v3451 = vsub.f32 %v3267, %v3450
    %v3452 = vand.u32 %v3451, 4294901760
    %3453 = vmatpush.msra.mxu0 %v3452
    %v3454 = vand.u32 %v3266, 4294901760
    %v3455 = vsub.f32 %v3266, %v3454
    %v3456 = vand.u32 %v3455, 4294901760
    %3457 = vmatpush.msra.mxu0 %v3456
    %v3458 = vand.u32 %v3275, 4294901760
    %3459 = vmatmul.f32.gmra.mxu0 %v3458
    %v3460 = vpop.f32.mrf.mxu0
    %v3461 = vadd.f32 %v3422, %v3460
    %v3462 = vand.u32 %v3278, 4294901760
    %3463 = vmatmul.f32.gmra.mxu0 %v3462
    %v3464 = vpop.f32.mrf.mxu0
    %v3465 = vadd.f32 %v3428, %v3464
    %3466 = vdwg.mxu0
    %3467 = vmatpush.msra.mxu0 0.0
    %3468 = vmatpush.msra.mxu0 0.0
    %3469 = vmatpush.msra.mxu0 0.0
    %3470 = vmatpush.msra.mxu0 0.0
    %3471 = vmatpush.msra.mxu0 0.0
    %3472 = vmatpush.msra.mxu0 0.0
    %3473 = vmatpush.msra.mxu0 0.0
    %3474 = vmatpush.msra.mxu0 0.0
    %3475 = vmatpush.msra.mxu0 0.0
    %3476 = vmatpush.msra.mxu0 0.0
    %3477 = vmatpush.msra.mxu0 0.0
    %3478 = vmatpush.msra.mxu0 0.0
    %v3479 = vand.u32 %v3269, 4294901760
    %3480 = vmatpush.msra.mxu0 %v3479
    %v3481 = vand.u32 %v3268, 4294901760
    %3482 = vmatpush.msra.mxu0 %v3481
    %v3483 = vand.u32 %v3267, 4294901760
    %3484 = vmatpush.msra.mxu0 %v3483
    %v3485 = vand.u32 %v3266, 4294901760
    %3486 = vmatpush.msra.mxu0 %v3485
    %v3487 = vand.u32 %v3275, 4294901760
    %3488 = vmatmul.f32.gmra.mxu0 %v3487
    %v3489 = vpop.f32.mrf.mxu0
    %v3490 = vadd.f32 %v3461, %v3489
    %v3491 = vand.u32 %v3278, 4294901760
    %3492 = vmatmul.f32.gmra.mxu0 %v3491
    %v3493 = vpop.f32.mrf.mxu0
    %v3494 = vadd.f32 %v3465, %v3493
    %3495 = vdwg.mxu0
    %v3496 = vadd.f32 %v57, %v3490
    %v3497 = vadd.f32 %v58, %v3494
    %v3498 = vsel %vm60, %v3496, 0.0
    %3499 = vadd.xlane.f32.xlu0 %v3498
    %v3500 = vpop.xlane.xlu0 %3499
    %v3501 = vsel %vm60, %v3497, 0.0
    %3502 = vadd.xlane.f32.xlu0 %v3501
    %v3503 = vpop.xlane.xlu0 %3502
    %v3504 = vmul.f32 %v3500, %v73
    %v3505 = vmul.f32 %v3503, %v73
    %v3506 = vsub.f32 %v3496, %v3504
    %v3507 = vsub.f32 %v3497, %v3505
    %v3508 = vmul.f32 %v3506, %v3506
    %v3509 = vmul.f32 %v3507, %v3507
    %v3510 = vsel %vm60, %v3508, 0.0
    %3511 = vadd.xlane.f32.xlu0 %v3510
    %v3512 = vpop.xlane.xlu0 %3511
    %v3513 = vsel %vm60, %v3509, 0.0
    %3514 = vadd.xlane.f32.xlu0 %v3513
    %v3515 = vpop.xlane.xlu0 %3514
    %v3516 = vmul.f32 %v3512, %v73
    %v3517 = vmul.f32 %v3515, %v73
    %v3518 = vadd.f32 %v3516, 1e-05
    %v3519 = vadd.f32 %v3517, 1e-05
    %v3520 = vrsqrt.pop %v3518
    %v3521 = vmul.f32 %v3520, %v3518
    %v3522 = vmul.f32 %v3521, %v3520
    %v3523 = vmul.f32 0.5, %v3522
    %v3524 = vsub.f32 1.5, %v3523
    %v3525 = vmul.f32 %v3520, %v3524
    %vm3526 = vweird.f32 %v3518
    %vm3527 = vweird.f32 %v3520
    %vm3528 = vmor %vm3526, %vm3527
    %v3529 = vsel %vm3528, %v3520, %v3525
    %v3530 = vrsqrt.pop %v3519
    %v3531 = vmul.f32 %v3530, %v3519
    %v3532 = vmul.f32 %v3531, %v3530
    %v3533 = vmul.f32 0.5, %v3532
    %v3534 = vsub.f32 1.5, %v3533
    %v3535 = vmul.f32 %v3530, %v3534
    %vm3536 = vweird.f32 %v3519
    %vm3537 = vweird.f32 %v3530
    %vm3538 = vmor %vm3536, %vm3537
    %v3539 = vsel %vm3538, %v3530, %v3535
    %v3540 = vmul.f32 %v3506, %v3529
    %v3541 = vmul.f32 %v3507, %v3539
    %v3542 = vld [vmem:[%s8] sm:$0x1]
    %v3544 = vperm.slane %v3542, 0
    %v3546 = vmul.f32 %v3540, %v3544
    %v3547 = vmul.f32 %v3541, %v3544
    %v3548 = vld [vmem:[%s9] sm:$0x1]
    %v3550 = vperm.slane %v3548, 0
    %v3552 = vadd.f32 %v3546, %v3550
    %v3553 = vadd.f32 %v3547, %v3550
    %v3554 = vld [vmem:[%s10] sm:$0xff]
    %v3555 = vld [vmem:[%s10 + $0x8] sm:$0xff]
    %v3556 = vld [vmem:[%s10 + $0x10] sm:$0xff]
    %v3557 = vld [vmem:[%s10 + $0x18] sm:$0xff]
    %v3558 = vld [vmem:[%s11] sm:$0x1]
    %v3560 = vperm.slane %v3558, 0
    %v3563 = vsel %vm60, %v3552, 0
    %v3566 = vsel %vm60, %v3553, 0
    %3568 = vmatpush.msra.mxu0 0.0
    %3569 = vmatpush.msra.mxu0 0.0
    %3570 = vmatpush.msra.mxu0 0.0
    %3571 = vmatpush.msra.mxu0 0.0
    %3572 = vmatpush.msra.mxu0 0.0
    %3573 = vmatpush.msra.mxu0 0.0
    %3574 = vmatpush.msra.mxu0 0.0
    %3575 = vmatpush.msra.mxu0 0.0
    %3576 = vmatpush.msra.mxu0 0.0
    %3577 = vmatpush.msra.mxu0 0.0
    %3578 = vmatpush.msra.mxu0 0.0
    %3579 = vmatpush.msra.mxu0 0.0
    %v3580 = vand.u32 %v3557, 4294901760
    %3581 = vmatpush.msra.mxu0 %v3580
    %v3582 = vand.u32 %v3556, 4294901760
    %3583 = vmatpush.msra.mxu0 %v3582
    %v3584 = vand.u32 %v3555, 4294901760
    %3585 = vmatpush.msra.mxu0 %v3584
    %v3586 = vand.u32 %v3554, 4294901760
    %3587 = vmatpush.msra.mxu0 %v3586
    %v3588 = vand.u32 %v3563, 4294901760
    %v3589 = vsub.f32 %v3563, %v3588
    %v3590 = vand.u32 %v3589, 4294901760
    %v3591 = vsub.f32 %v3589, %v3590
    %v3592 = vand.u32 %v3591, 4294901760
    %3593 = vmatmul.f32.gmra.mxu0 %v3592
    %v3594 = vpop.f32.mrf.mxu0
    %v3595 = vadd.f32 %v3560, %v3594
    %v3596 = vand.u32 %v3566, 4294901760
    %v3597 = vsub.f32 %v3566, %v3596
    %v3598 = vand.u32 %v3597, 4294901760
    %v3599 = vsub.f32 %v3597, %v3598
    %v3600 = vand.u32 %v3599, 4294901760
    %3601 = vmatmul.f32.gmra.mxu0 %v3600
    %v3602 = vpop.f32.mrf.mxu0
    %v3603 = vadd.f32 %v3560, %v3602
    %3604 = vdwg.mxu0
    %3605 = vmatpush.msra.mxu0 0.0
    %3606 = vmatpush.msra.mxu0 0.0
    %3607 = vmatpush.msra.mxu0 0.0
    %3608 = vmatpush.msra.mxu0 0.0
    %3609 = vmatpush.msra.mxu0 0.0
    %3610 = vmatpush.msra.mxu0 0.0
    %3611 = vmatpush.msra.mxu0 0.0
    %3612 = vmatpush.msra.mxu0 0.0
    %3613 = vmatpush.msra.mxu0 0.0
    %3614 = vmatpush.msra.mxu0 0.0
    %3615 = vmatpush.msra.mxu0 0.0
    %3616 = vmatpush.msra.mxu0 0.0
    %v3617 = vand.u32 %v3557, 4294901760
    %v3618 = vsub.f32 %v3557, %v3617
    %v3619 = vand.u32 %v3618, 4294901760
    %v3620 = vsub.f32 %v3618, %v3619
    %v3621 = vand.u32 %v3620, 4294901760
    %3622 = vmatpush.msra.mxu0 %v3621
    %v3623 = vand.u32 %v3556, 4294901760
    %v3624 = vsub.f32 %v3556, %v3623
    %v3625 = vand.u32 %v3624, 4294901760
    %v3626 = vsub.f32 %v3624, %v3625
    %v3627 = vand.u32 %v3626, 4294901760
    %3628 = vmatpush.msra.mxu0 %v3627
    %v3629 = vand.u32 %v3555, 4294901760
    %v3630 = vsub.f32 %v3555, %v3629
    %v3631 = vand.u32 %v3630, 4294901760
    %v3632 = vsub.f32 %v3630, %v3631
    %v3633 = vand.u32 %v3632, 4294901760
    %3634 = vmatpush.msra.mxu0 %v3633
    %v3635 = vand.u32 %v3554, 4294901760
    %v3636 = vsub.f32 %v3554, %v3635
    %v3637 = vand.u32 %v3636, 4294901760
    %v3638 = vsub.f32 %v3636, %v3637
    %v3639 = vand.u32 %v3638, 4294901760
    %3640 = vmatpush.msra.mxu0 %v3639
    %v3641 = vand.u32 %v3563, 4294901760
    %3642 = vmatmul.f32.gmra.mxu0 %v3641
    %v3643 = vpop.f32.mrf.mxu0
    %v3644 = vadd.f32 %v3595, %v3643
    %v3645 = vand.u32 %v3566, 4294901760
    %3646 = vmatmul.f32.gmra.mxu0 %v3645
    %v3647 = vpop.f32.mrf.mxu0
    %v3648 = vadd.f32 %v3603, %v3647
    %3649 = vdwg.mxu0
    %3650 = vmatpush.msra.mxu0 0.0
    %3651 = vmatpush.msra.mxu0 0.0
    %3652 = vmatpush.msra.mxu0 0.0
    %3653 = vmatpush.msra.mxu0 0.0
    %3654 = vmatpush.msra.mxu0 0.0
    %3655 = vmatpush.msra.mxu0 0.0
    %3656 = vmatpush.msra.mxu0 0.0
    %3657 = vmatpush.msra.mxu0 0.0
    %3658 = vmatpush.msra.mxu0 0.0
    %3659 = vmatpush.msra.mxu0 0.0
    %3660 = vmatpush.msra.mxu0 0.0
    %3661 = vmatpush.msra.mxu0 0.0
    %v3662 = vand.u32 %v3557, 4294901760
    %v3663 = vsub.f32 %v3557, %v3662
    %3664 = vmatpush.msra.mxu0 %v3663
    %v3665 = vand.u32 %v3556, 4294901760
    %v3666 = vsub.f32 %v3556, %v3665
    %3667 = vmatpush.msra.mxu0 %v3666
    %v3668 = vand.u32 %v3555, 4294901760
    %v3669 = vsub.f32 %v3555, %v3668
    %3670 = vmatpush.msra.mxu0 %v3669
    %v3671 = vand.u32 %v3554, 4294901760
    %v3672 = vsub.f32 %v3554, %v3671
    %3673 = vmatpush.msra.mxu0 %v3672
    %v3674 = vand.u32 %v3563, 4294901760
    %v3675 = vsub.f32 %v3563, %v3674
    %3676 = vmatmul.f32.gmra.mxu0 %v3675
    %v3677 = vpop.f32.mrf.mxu0
    %v3678 = vadd.f32 %v3644, %v3677
    %v3679 = vand.u32 %v3566, 4294901760
    %v3680 = vsub.f32 %v3566, %v3679
    %3681 = vmatmul.f32.gmra.mxu0 %v3680
    %v3682 = vpop.f32.mrf.mxu0
    %v3683 = vadd.f32 %v3648, %v3682
    %3684 = vdwg.mxu0
    %3685 = vmatpush.msra.mxu0 0.0
    %3686 = vmatpush.msra.mxu0 0.0
    %3687 = vmatpush.msra.mxu0 0.0
    %3688 = vmatpush.msra.mxu0 0.0
    %3689 = vmatpush.msra.mxu0 0.0
    %3690 = vmatpush.msra.mxu0 0.0
    %3691 = vmatpush.msra.mxu0 0.0
    %3692 = vmatpush.msra.mxu0 0.0
    %3693 = vmatpush.msra.mxu0 0.0
    %3694 = vmatpush.msra.mxu0 0.0
    %3695 = vmatpush.msra.mxu0 0.0
    %3696 = vmatpush.msra.mxu0 0.0
    %v3697 = vand.u32 %v3557, 4294901760
    %3698 = vmatpush.msra.mxu0 %v3697
    %v3699 = vand.u32 %v3556, 4294901760
    %3700 = vmatpush.msra.mxu0 %v3699
    %v3701 = vand.u32 %v3555, 4294901760
    %3702 = vmatpush.msra.mxu0 %v3701
    %v3703 = vand.u32 %v3554, 4294901760
    %3704 = vmatpush.msra.mxu0 %v3703
    %v3705 = vand.u32 %v3563, 4294901760
    %v3706 = vsub.f32 %v3563, %v3705
    %v3707 = vand.u32 %v3706, 4294901760
    %3708 = vmatmul.f32.gmra.mxu0 %v3707
    %v3709 = vpop.f32.mrf.mxu0
    %v3710 = vadd.f32 %v3678, %v3709
    %v3711 = vand.u32 %v3566, 4294901760
    %v3712 = vsub.f32 %v3566, %v3711
    %v3713 = vand.u32 %v3712, 4294901760
    %3714 = vmatmul.f32.gmra.mxu0 %v3713
    %v3715 = vpop.f32.mrf.mxu0
    %v3716 = vadd.f32 %v3683, %v3715
    %3717 = vdwg.mxu0
    %3718 = vmatpush.msra.mxu0 0.0
    %3719 = vmatpush.msra.mxu0 0.0
    %3720 = vmatpush.msra.mxu0 0.0
    %3721 = vmatpush.msra.mxu0 0.0
    %3722 = vmatpush.msra.mxu0 0.0
    %3723 = vmatpush.msra.mxu0 0.0
    %3724 = vmatpush.msra.mxu0 0.0
    %3725 = vmatpush.msra.mxu0 0.0
    %3726 = vmatpush.msra.mxu0 0.0
    %3727 = vmatpush.msra.mxu0 0.0
    %3728 = vmatpush.msra.mxu0 0.0
    %3729 = vmatpush.msra.mxu0 0.0
    %v3730 = vand.u32 %v3557, 4294901760
    %v3731 = vsub.f32 %v3557, %v3730
    %v3732 = vand.u32 %v3731, 4294901760
    %3733 = vmatpush.msra.mxu0 %v3732
    %v3734 = vand.u32 %v3556, 4294901760
    %v3735 = vsub.f32 %v3556, %v3734
    %v3736 = vand.u32 %v3735, 4294901760
    %3737 = vmatpush.msra.mxu0 %v3736
    %v3738 = vand.u32 %v3555, 4294901760
    %v3739 = vsub.f32 %v3555, %v3738
    %v3740 = vand.u32 %v3739, 4294901760
    %3741 = vmatpush.msra.mxu0 %v3740
    %v3742 = vand.u32 %v3554, 4294901760
    %v3743 = vsub.f32 %v3554, %v3742
    %v3744 = vand.u32 %v3743, 4294901760
    %3745 = vmatpush.msra.mxu0 %v3744
    %v3746 = vand.u32 %v3563, 4294901760
    %3747 = vmatmul.f32.gmra.mxu0 %v3746
    %v3748 = vpop.f32.mrf.mxu0
    %v3749 = vadd.f32 %v3710, %v3748
    %v3750 = vand.u32 %v3566, 4294901760
    %3751 = vmatmul.f32.gmra.mxu0 %v3750
    %v3752 = vpop.f32.mrf.mxu0
    %v3753 = vadd.f32 %v3716, %v3752
    %3754 = vdwg.mxu0
    %3755 = vmatpush.msra.mxu0 0.0
    %3756 = vmatpush.msra.mxu0 0.0
    %3757 = vmatpush.msra.mxu0 0.0
    %3758 = vmatpush.msra.mxu0 0.0
    %3759 = vmatpush.msra.mxu0 0.0
    %3760 = vmatpush.msra.mxu0 0.0
    %3761 = vmatpush.msra.mxu0 0.0
    %3762 = vmatpush.msra.mxu0 0.0
    %3763 = vmatpush.msra.mxu0 0.0
    %3764 = vmatpush.msra.mxu0 0.0
    %3765 = vmatpush.msra.mxu0 0.0
    %3766 = vmatpush.msra.mxu0 0.0
    %v3767 = vand.u32 %v3557, 4294901760
    %3768 = vmatpush.msra.mxu0 %v3767
    %v3769 = vand.u32 %v3556, 4294901760
    %3770 = vmatpush.msra.mxu0 %v3769
    %v3771 = vand.u32 %v3555, 4294901760
    %3772 = vmatpush.msra.mxu0 %v3771
    %v3773 = vand.u32 %v3554, 4294901760
    %3774 = vmatpush.msra.mxu0 %v3773
    %v3775 = vand.u32 %v3563, 4294901760
    %3776 = vmatmul.f32.gmra.mxu0 %v3775
    %v3777 = vpop.f32.mrf.mxu0
    %v3778 = vadd.f32 %v3749, %v3777
    %v3779 = vand.u32 %v3566, 4294901760
    %3780 = vmatmul.f32.gmra.mxu0 %v3779
    %v3781 = vpop.f32.mrf.mxu0
    %v3782 = vadd.f32 %v3753, %v3781
    %3783 = vdwg.mxu0
    %v3784 = vmul.f32 %v3778, 0.5
    %v3785 = vmul.f32 %v3782, 0.5
    %v3786 = vmul.f32 %v3778, 0.044715
    %v3787 = vmul.f32 %v3782, 0.044715
    %v3788 = vmul.f32 %v3786, %v3778
    %v3789 = vmul.f32 %v3787, %v3782
    %v3790 = vmul.f32 %v3788, %v3778
    %v3791 = vmul.f32 %v3789, %v3782
    %v3792 = vadd.f32 %v3778, %v3790
    %v3793 = vadd.f32 %v3782, %v3791
    %v3794 = vmul.f32 %v3792, 0.7978846
    %v3795 = vmul.f32 %v3793, 0.7978846
    %v3796 = vtanh.pop %v3794
    %v3797 = vtanh.pop %v3795
    %v3798 = vadd.f32 %v3796, 1.0
    %v3799 = vadd.f32 %v3797, 1.0
    %v3800 = vmul.f32 %v3784, %v3798
    %v3801 = vmul.f32 %v3785, %v3799
    %v3802 = vld [vmem:[%s12] sm:$0xff]
    %v3803 = vld [vmem:[%s12 + $0x8] sm:$0xff]
    %v3804 = vld [vmem:[%s12 + $0x10] sm:$0xff]
    %v3805 = vld [vmem:[%s12 + $0x18] sm:$0xff]
    %v3806 = vld [vmem:[%s12 + $0x20] sm:$0xff]
    %v3807 = vld [vmem:[%s12 + $0x28] sm:$0xff]
    %v3808 = vld [vmem:[%s12 + $0x30] sm:$0xff]
    %v3809 = vld [vmem:[%s12 + $0x38] sm:$0xff]
    %v3810 = vld [vmem:[%s12 + $0x40] sm:$0xff]
    %v3811 = vld [vmem:[%s12 + $0x48] sm:$0xff]
    %v3812 = vld [vmem:[%s12 + $0x50] sm:$0xff]
    %v3813 = vld [vmem:[%s12 + $0x58] sm:$0xff]
    %v3814 = vld [vmem:[%s12 + $0x60] sm:$0xff]
    %v3815 = vld [vmem:[%s12 + $0x68] sm:$0xff]
    %v3816 = vld [vmem:[%s12 + $0x70] sm:$0xff]
    %v3817 = vld [vmem:[%s12 + $0x78] sm:$0xff]
    %v3818 = vld [vmem:[%s13] sm:$0x1]
    %v3820 = vperm.slane %v3818, 0
    %v3822 = vand.u32 %v3817, 4294901760
    %3823 = vmatpush.msra.mxu0 %v3822
    %v3824 = vand.u32 %v3816, 4294901760
    %3825 = vmatpush.msra.mxu0 %v3824
    %v3826 = vand.u32 %v3815, 4294901760
    %3827 = vmatpush.msra.mxu0 %v3826
    %v3828 = vand.u32 %v3814, 4294901760
    %3829 = vmatpush.msra.mxu0 %v3828
    %v3830 = vand.u32 %v3813, 4294901760
    %3831 = vmatpush.msra.mxu0 %v3830
    %v3832 = vand.u32 %v3812, 4294901760
    %3833 = vmatpush.msra.mxu0 %v3832
    %v3834 = vand.u32 %v3811, 4294901760
    %3835 = vmatpush.msra.mxu0 %v3834
    %v3836 = vand.u32 %v3810, 4294901760
    %3837 = vmatpush.msra.mxu0 %v3836
    %v3838 = vand.u32 %v3809, 4294901760
    %3839 = vmatpush.msra.mxu0 %v3838
    %v3840 = vand.u32 %v3808, 4294901760
    %3841 = vmatpush.msra.mxu0 %v3840
    %v3842 = vand.u32 %v3807, 4294901760
    %3843 = vmatpush.msra.mxu0 %v3842
    %v3844 = vand.u32 %v3806, 4294901760
    %3845 = vmatpush.msra.mxu0 %v3844
    %v3846 = vand.u32 %v3805, 4294901760
    %3847 = vmatpush.msra.mxu0 %v3846
    %v3848 = vand.u32 %v3804, 4294901760
    %3849 = vmatpush.msra.mxu0 %v3848
    %v3850 = vand.u32 %v3803, 4294901760
    %3851 = vmatpush.msra.mxu0 %v3850
    %v3852 = vand.u32 %v3802, 4294901760
    %3853 = vmatpush.msra.mxu0 %v3852
    %v3854 = vand.u32 %v3800, 4294901760
    %v3855 = vsub.f32 %v3800, %v3854
    %v3856 = vand.u32 %v3855, 4294901760
    %v3857 = vsub.f32 %v3855, %v3856
    %v3858 = vand.u32 %v3857, 4294901760
    %3859 = vmatmul.f32.gmra.mxu0 %v3858
    %v3860 = vpop.f32.mrf.mxu0
    %v3861 = vadd.f32 %v3820, %v3860
    %v3862 = vand.u32 %v3801, 4294901760
    %v3863 = vsub.f32 %v3801, %v3862
    %v3864 = vand.u32 %v3863, 4294901760
    %v3865 = vsub.f32 %v3863, %v3864
    %v3866 = vand.u32 %v3865, 4294901760
    %3867 = vmatmul.f32.gmra.mxu0 %v3866
    %v3868 = vpop.f32.mrf.mxu0
    %v3869 = vadd.f32 %v3820, %v3868
    %3870 = vdwg.mxu0
    %v3871 = vand.u32 %v3817, 4294901760
    %v3872 = vsub.f32 %v3817, %v3871
    %v3873 = vand.u32 %v3872, 4294901760
    %v3874 = vsub.f32 %v3872, %v3873
    %v3875 = vand.u32 %v3874, 4294901760
    %3876 = vmatpush.msra.mxu0 %v3875
    %v3877 = vand.u32 %v3816, 4294901760
    %v3878 = vsub.f32 %v3816, %v3877
    %v3879 = vand.u32 %v3878, 4294901760
    %v3880 = vsub.f32 %v3878, %v3879
    %v3881 = vand.u32 %v3880, 4294901760
    %3882 = vmatpush.msra.mxu0 %v3881
    %v3883 = vand.u32 %v3815, 4294901760
    %v3884 = vsub.f32 %v3815, %v3883
    %v3885 = vand.u32 %v3884, 4294901760
    %v3886 = vsub.f32 %v3884, %v3885
    %v3887 = vand.u32 %v3886, 4294901760
    %3888 = vmatpush.msra.mxu0 %v3887
    %v3889 = vand.u32 %v3814, 4294901760
    %v3890 = vsub.f32 %v3814, %v3889
    %v3891 = vand.u32 %v3890, 4294901760
    %v3892 = vsub.f32 %v3890, %v3891
    %v3893 = vand.u32 %v3892, 4294901760
    %3894 = vmatpush.msra.mxu0 %v3893
    %v3895 = vand.u32 %v3813, 4294901760
    %v3896 = vsub.f32 %v3813, %v3895
    %v3897 = vand.u32 %v3896, 4294901760
    %v3898 = vsub.f32 %v3896, %v3897
    %v3899 = vand.u32 %v3898, 4294901760
    %3900 = vmatpush.msra.mxu0 %v3899
    %v3901 = vand.u32 %v3812, 4294901760
    %v3902 = vsub.f32 %v3812, %v3901
    %v3903 = vand.u32 %v3902, 4294901760
    %v3904 = vsub.f32 %v3902, %v3903
    %v3905 = vand.u32 %v3904, 4294901760
    %3906 = vmatpush.msra.mxu0 %v3905
    %v3907 = vand.u32 %v3811, 4294901760
    %v3908 = vsub.f32 %v3811, %v3907
    %v3909 = vand.u32 %v3908, 4294901760
    %v3910 = vsub.f32 %v3908, %v3909
    %v3911 = vand.u32 %v3910, 4294901760
    %3912 = vmatpush.msra.mxu0 %v3911
    %v3913 = vand.u32 %v3810, 4294901760
    %v3914 = vsub.f32 %v3810, %v3913
    %v3915 = vand.u32 %v3914, 4294901760
    %v3916 = vsub.f32 %v3914, %v3915
    %v3917 = vand.u32 %v3916, 4294901760
    %3918 = vmatpush.msra.mxu0 %v3917
    %v3919 = vand.u32 %v3809, 4294901760
    %v3920 = vsub.f32 %v3809, %v3919
    %v3921 = vand.u32 %v3920, 4294901760
    %v3922 = vsub.f32 %v3920, %v3921
    %v3923 = vand.u32 %v3922, 4294901760
    %3924 = vmatpush.msra.mxu0 %v3923
    %v3925 = vand.u32 %v3808, 4294901760
    %v3926 = vsub.f32 %v3808, %v3925
    %v3927 = vand.u32 %v3926, 4294901760
    %v3928 = vsub.f32 %v3926, %v3927
    %v3929 = vand.u32 %v3928, 4294901760
    %3930 = vmatpush.msra.mxu0 %v3929
    %v3931 = vand.u32 %v3807, 4294901760
    %v3932 = vsub.f32 %v3807, %v3931
    %v3933 = vand.u32 %v3932, 4294901760
    %v3934 = vsub.f32 %v3932, %v3933
    %v3935 = vand.u32 %v3934, 4294901760
    %3936 = vmatpush.msra.mxu0 %v3935
    %v3937 = vand.u32 %v3806, 4294901760
    %v3938 = vsub.f32 %v3806, %v3937
    %v3939 = vand.u32 %v3938, 4294901760
    %v3940 = vsub.f32 %v3938, %v3939
    %v3941 = vand.u32 %v3940, 4294901760
    %3942 = vmatpush.msra.mxu0 %v3941
    %v3943 = vand.u32 %v3805, 4294901760
    %v3944 = vsub.f32 %v3805, %v3943
    %v3945 = vand.u32 %v3944, 4294901760
    %v3946 = vsub.f32 %v3944, %v3945
    %v3947 = vand.u32 %v3946, 4294901760
    %3948 = vmatpush.msra.mxu0 %v3947
    %v3949 = vand.u32 %v3804, 4294901760
    %v3950 = vsub.f32 %v3804, %v3949
    %v3951 = vand.u32 %v3950, 4294901760
    %v3952 = vsub.f32 %v3950, %v3951
    %v3953 = vand.u32 %v3952, 4294901760
    %3954 = vmatpush.msra.mxu0 %v3953
    %v3955 = vand.u32 %v3803, 4294901760
    %v3956 = vsub.f32 %v3803, %v3955
    %v3957 = vand.u32 %v3956, 4294901760
    %v3958 = vsub.f32 %v3956, %v3957
    %v3959 = vand.u32 %v3958, 4294901760
    %3960 = vmatpush.msra.mxu0 %v3959
    %v3961 = vand.u32 %v3802, 4294901760
    %v3962 = vsub.f32 %v3802, %v3961
    %v3963 = vand.u32 %v3962, 4294901760
    %v3964 = vsub.f32 %v3962, %v3963
    %v3965 = vand.u32 %v3964, 4294901760
    %3966 = vmatpush.msra.mxu0 %v3965
    %v3967 = vand.u32 %v3800, 4294901760
    %3968 = vmatmul.f32.gmra.mxu0 %v3967
    %v3969 = vpop.f32.mrf.mxu0
    %v3970 = vadd.f32 %v3861, %v3969
    %v3971 = vand.u32 %v3801, 4294901760
    %3972 = vmatmul.f32.gmra.mxu0 %v3971
    %v3973 = vpop.f32.mrf.mxu0
    %v3974 = vadd.f32 %v3869, %v3973
    %3975 = vdwg.mxu0
    %v3976 = vand.u32 %v3817, 4294901760
    %v3977 = vsub.f32 %v3817, %v3976
    %3978 = vmatpush.msra.mxu0 %v3977
    %v3979 = vand.u32 %v3816, 4294901760
    %v3980 = vsub.f32 %v3816, %v3979
    %3981 = vmatpush.msra.mxu0 %v3980
    %v3982 = vand.u32 %v3815, 4294901760
    %v3983 = vsub.f32 %v3815, %v3982
    %3984 = vmatpush.msra.mxu0 %v3983
    %v3985 = vand.u32 %v3814, 4294901760
    %v3986 = vsub.f32 %v3814, %v3985
    %3987 = vmatpush.msra.mxu0 %v3986
    %v3988 = vand.u32 %v3813, 4294901760
    %v3989 = vsub.f32 %v3813, %v3988
    %3990 = vmatpush.msra.mxu0 %v3989
    %v3991 = vand.u32 %v3812, 4294901760
    %v3992 = vsub.f32 %v3812, %v3991
    %3993 = vmatpush.msra.mxu0 %v3992
    %v3994 = vand.u32 %v3811, 4294901760
    %v3995 = vsub.f32 %v3811, %v3994
    %3996 = vmatpush.msra.mxu0 %v3995
    %v3997 = vand.u32 %v3810, 4294901760
    %v3998 = vsub.f32 %v3810, %v3997
    %3999 = vmatpush.msra.mxu0 %v3998
    %v4000 = vand.u32 %v3809, 4294901760
    %v4001 = vsub.f32 %v3809, %v4000
    %4002 = vmatpush.msra.mxu0 %v4001
    %v4003 = vand.u32 %v3808, 4294901760
    %v4004 = vsub.f32 %v3808, %v4003
    %4005 = vmatpush.msra.mxu0 %v4004
    %v4006 = vand.u32 %v3807, 4294901760
    %v4007 = vsub.f32 %v3807, %v4006
    %4008 = vmatpush.msra.mxu0 %v4007
    %v4009 = vand.u32 %v3806, 4294901760
    %v4010 = vsub.f32 %v3806, %v4009
    %4011 = vmatpush.msra.mxu0 %v4010
    %v4012 = vand.u32 %v3805, 4294901760
    %v4013 = vsub.f32 %v3805, %v4012
    %4014 = vmatpush.msra.mxu0 %v4013
    %v4015 = vand.u32 %v3804, 4294901760
    %v4016 = vsub.f32 %v3804, %v4015
    %4017 = vmatpush.msra.mxu0 %v4016
    %v4018 = vand.u32 %v3803, 4294901760
    %v4019 = vsub.f32 %v3803, %v4018
    %4020 = vmatpush.msra.mxu0 %v4019
    %v4021 = vand.u32 %v3802, 4294901760
    %v4022 = vsub.f32 %v3802, %v4021
    %4023 = vmatpush.msra.mxu0 %v4022
    %v4024 = vand.u32 %v3800, 4294901760
    %v4025 = vsub.f32 %v3800, %v4024
    %4026 = vmatmul.f32.gmra.mxu0 %v4025
    %v4027 = vpop.f32.mrf.mxu0
    %v4028 = vadd.f32 %v3970, %v4027
    %v4029 = vand.u32 %v3801, 4294901760
    %v4030 = vsub.f32 %v3801, %v4029
    %4031 = vmatmul.f32.gmra.mxu0 %v4030
    %v4032 = vpop.f32.mrf.mxu0
    %v4033 = vadd.f32 %v3974, %v4032
    %4034 = vdwg.mxu0
    %v4035 = vand.u32 %v3817, 4294901760
    %4036 = vmatpush.msra.mxu0 %v4035
    %v4037 = vand.u32 %v3816, 4294901760
    %4038 = vmatpush.msra.mxu0 %v4037
    %v4039 = vand.u32 %v3815, 4294901760
    %4040 = vmatpush.msra.mxu0 %v4039
    %v4041 = vand.u32 %v3814, 4294901760
    %4042 = vmatpush.msra.mxu0 %v4041
    %v4043 = vand.u32 %v3813, 4294901760
    %4044 = vmatpush.msra.mxu0 %v4043
    %v4045 = vand.u32 %v3812, 4294901760
    %4046 = vmatpush.msra.mxu0 %v4045
    %v4047 = vand.u32 %v3811, 4294901760
    %4048 = vmatpush.msra.mxu0 %v4047
    %v4049 = vand.u32 %v3810, 4294901760
    %4050 = vmatpush.msra.mxu0 %v4049
    %v4051 = vand.u32 %v3809, 4294901760
    %4052 = vmatpush.msra.mxu0 %v4051
    %v4053 = vand.u32 %v3808, 4294901760
    %4054 = vmatpush.msra.mxu0 %v4053
    %v4055 = vand.u32 %v3807, 4294901760
    %4056 = vmatpush.msra.mxu0 %v4055
    %v4057 = vand.u32 %v3806, 4294901760
    %4058 = vmatpush.msra.mxu0 %v4057
    %v4059 = vand.u32 %v3805, 4294901760
    %4060 = vmatpush.msra.mxu0 %v4059
    %v4061 = vand.u32 %v3804, 4294901760
    %4062 = vmatpush.msra.mxu0 %v4061
    %v4063 = vand.u32 %v3803, 4294901760
    %4064 = vmatpush.msra.mxu0 %v4063
    %v4065 = vand.u32 %v3802, 4294901760
    %4066 = vmatpush.msra.mxu0 %v4065
    %v4067 = vand.u32 %v3800, 4294901760
    %v4068 = vsub.f32 %v3800, %v4067
    %v4069 = vand.u32 %v4068, 4294901760
    %4070 = vmatmul.f32.gmra.mxu0 %v4069
    %v4071 = vpop.f32.mrf.mxu0
    %v4072 = vadd.f32 %v4028, %v4071
    %v4073 = vand.u32 %v3801, 4294901760
    %v4074 = vsub.f32 %v3801, %v4073
    %v4075 = vand.u32 %v4074, 4294901760
    %4076 = vmatmul.f32.gmra.mxu0 %v4075
    %v4077 = vpop.f32.mrf.mxu0
    %v4078 = vadd.f32 %v4033, %v4077
    %4079 = vdwg.mxu0
    %v4080 = vand.u32 %v3817, 4294901760
    %v4081 = vsub.f32 %v3817, %v4080
    %v4082 = vand.u32 %v4081, 4294901760
    %4083 = vmatpush.msra.mxu0 %v4082
    %v4084 = vand.u32 %v3816, 4294901760
    %v4085 = vsub.f32 %v3816, %v4084
    %v4086 = vand.u32 %v4085, 4294901760
    %4087 = vmatpush.msra.mxu0 %v4086
    %v4088 = vand.u32 %v3815, 4294901760
    %v4089 = vsub.f32 %v3815, %v4088
    %v4090 = vand.u32 %v4089, 4294901760
    %4091 = vmatpush.msra.mxu0 %v4090
    %v4092 = vand.u32 %v3814, 4294901760
    %v4093 = vsub.f32 %v3814, %v4092
    %v4094 = vand.u32 %v4093, 4294901760
    %4095 = vmatpush.msra.mxu0 %v4094
    %v4096 = vand.u32 %v3813, 4294901760
    %v4097 = vsub.f32 %v3813, %v4096
    %v4098 = vand.u32 %v4097, 4294901760
    %4099 = vmatpush.msra.mxu0 %v4098
    %v4100 = vand.u32 %v3812, 4294901760
    %v4101 = vsub.f32 %v3812, %v4100
    %v4102 = vand.u32 %v4101, 4294901760
    %4103 = vmatpush.msra.mxu0 %v4102
    %v4104 = vand.u32 %v3811, 4294901760
    %v4105 = vsub.f32 %v3811, %v4104
    %v4106 = vand.u32 %v4105, 4294901760
    %4107 = vmatpush.msra.mxu0 %v4106
    %v4108 = vand.u32 %v3810, 4294901760
    %v4109 = vsub.f32 %v3810, %v4108
    %v4110 = vand.u32 %v4109, 4294901760
    %4111 = vmatpush.msra.mxu0 %v4110
    %v4112 = vand.u32 %v3809, 4294901760
    %v4113 = vsub.f32 %v3809, %v4112
    %v4114 = vand.u32 %v4113, 4294901760
    %4115 = vmatpush.msra.mxu0 %v4114
    %v4116 = vand.u32 %v3808, 4294901760
    %v4117 = vsub.f32 %v3808, %v4116
    %v4118 = vand.u32 %v4117, 4294901760
    %4119 = vmatpush.msra.mxu0 %v4118
    %v4120 = vand.u32 %v3807, 4294901760
    %v4121 = vsub.f32 %v3807, %v4120
    %v4122 = vand.u32 %v4121, 4294901760
    %4123 = vmatpush.msra.mxu0 %v4122
    %v4124 = vand.u32 %v3806, 4294901760
    %v4125 = vsub.f32 %v3806, %v4124
    %v4126 = vand.u32 %v4125, 4294901760
    %4127 = vmatpush.msra.mxu0 %v4126
    %v4128 = vand.u32 %v3805, 4294901760
    %v4129 = vsub.f32 %v3805, %v4128
    %v4130 = vand.u32 %v4129, 4294901760
    %4131 = vmatpush.msra.mxu0 %v4130
    %v4132 = vand.u32 %v3804, 4294901760
    %v4133 = vsub.f32 %v3804, %v4132
    %v4134 = vand.u32 %v4133, 4294901760
    %4135 = vmatpush.msra.mxu0 %v4134
    %v4136 = vand.u32 %v3803, 4294901760
    %v4137 = vsub.f32 %v3803, %v4136
    %v4138 = vand.u32 %v4137, 4294901760
    %4139 = vmatpush.msra.mxu0 %v4138
    %v4140 = vand.u32 %v3802, 4294901760
    %v4141 = vsub.f32 %v3802, %v4140
    %v4142 = vand.u32 %v4141, 4294901760
    %4143 = vmatpush.msra.mxu0 %v4142
    %v4144 = vand.u32 %v3800, 4294901760
    %4145 = vmatmul.f32.gmra.mxu0 %v4144
    %v4146 = vpop.f32.mrf.mxu0
    %v4147 = vadd.f32 %v4072, %v4146
    %v4148 = vand.u32 %v3801, 4294901760
    %4149 = vmatmul.f32.gmra.mxu0 %v4148
    %v4150 = vpop.f32.mrf.mxu0
    %v4151 = vadd.f32 %v4078, %v4150
    %4152 = vdwg.mxu0
    %v4153 = vand.u32 %v3817, 4294901760
    %4154 = vmatpush.msra.mxu0 %v4153
    %v4155 = vand.u32 %v3816, 4294901760
    %4156 = vmatpush.msra.mxu0 %v4155
    %v4157 = vand.u32 %v3815, 4294901760
    %4158 = vmatpush.msra.mxu0 %v4157
    %v4159 = vand.u32 %v3814, 4294901760
    %4160 = vmatpush.msra.mxu0 %v4159
    %v4161 = vand.u32 %v3813, 4294901760
    %4162 = vmatpush.msra.mxu0 %v4161
    %v4163 = vand.u32 %v3812, 4294901760
    %4164 = vmatpush.msra.mxu0 %v4163
    %v4165 = vand.u32 %v3811, 4294901760
    %4166 = vmatpush.msra.mxu0 %v4165
    %v4167 = vand.u32 %v3810, 4294901760
    %4168 = vmatpush.msra.mxu0 %v4167
    %v4169 = vand.u32 %v3809, 4294901760
    %4170 = vmatpush.msra.mxu0 %v4169
    %v4171 = vand.u32 %v3808, 4294901760
    %4172 = vmatpush.msra.mxu0 %v4171
    %v4173 = vand.u32 %v3807, 4294901760
    %4174 = vmatpush.msra.mxu0 %v4173
    %v4175 = vand.u32 %v3806, 4294901760
    %4176 = vmatpush.msra.mxu0 %v4175
    %v4177 = vand.u32 %v3805, 4294901760
    %4178 = vmatpush.msra.mxu0 %v4177
    %v4179 = vand.u32 %v3804, 4294901760
    %4180 = vmatpush.msra.mxu0 %v4179
    %v4181 = vand.u32 %v3803, 4294901760
    %4182 = vmatpush.msra.mxu0 %v4181
    %v4183 = vand.u32 %v3802, 4294901760
    %4184 = vmatpush.msra.mxu0 %v4183
    %v4185 = vand.u32 %v3800, 4294901760
    %4186 = vmatmul.f32.gmra.mxu0 %v4185
    %v4187 = vpop.f32.mrf.mxu0
    %v4188 = vadd.f32 %v4147, %v4187
    %v4189 = vand.u32 %v3801, 4294901760
    %4190 = vmatmul.f32.gmra.mxu0 %v4189
    %v4191 = vpop.f32.mrf.mxu0
    %v4192 = vadd.f32 %v4151, %v4191
    %4193 = vdwg.mxu0
    %v4194 = vmul.f32 %v4188, 0.5
    %v4195 = vmul.f32 %v4192, 0.5
    %v4196 = vmul.f32 %v4188, 0.044715
    %v4197 = vmul.f32 %v4192, 0.044715
    %v4198 = vmul.f32 %v4196, %v4188
    %v4199 = vmul.f32 %v4197, %v4192
    %v4200 = vmul.f32 %v4198, %v4188
    %v4201 = vmul.f32 %v4199, %v4192
    %v4202 = vadd.f32 %v4188, %v4200
    %v4203 = vadd.f32 %v4192, %v4201
    %v4204 = vmul.f32 %v4202, 0.7978846
    %v4205 = vmul.f32 %v4203, 0.7978846
    %v4206 = vtanh.pop %v4204
    %v4207 = vtanh.pop %v4205
    %v4208 = vadd.f32 %v4206, 1.0
    %v4209 = vadd.f32 %v4207, 1.0
    %v4210 = vmul.f32 %v4194, %v4208
    %v4211 = vmul.f32 %v4195, %v4209
    %v4212 = vld [vmem:[%s14] sm:$0xff]
    %v4213 = vld [vmem:[%s14 + $0x8] sm:$0xff]
    %v4214 = vld [vmem:[%s14 + $0x10] sm:$0xff]
    %v4215 = vld [vmem:[%s14 + $0x18] sm:$0xff]
    %v4216 = vld [vmem:[%s14 + $0x20] sm:$0xff]
    %v4217 = vld [vmem:[%s14 + $0x28] sm:$0xff]
    %v4218 = vld [vmem:[%s14 + $0x30] sm:$0xff]
    %v4219 = vld [vmem:[%s14 + $0x38] sm:$0xff]
    %v4220 = vld [vmem:[%s15] sm:$0x1]
    %v4222 = vperm.slane %v4220, 0
    %vm4224 = vcmask 523264
    %v4226 = vsel %vm4224, %v4210, 0
    %v4229 = vsel %vm4224, %v4211, 0
    %4231 = vmatpush.msra.mxu0 0.0
    %4232 = vmatpush.msra.mxu0 0.0
    %4233 = vmatpush.msra.mxu0 0.0
    %4234 = vmatpush.msra.mxu0 0.0
    %4235 = vmatpush.msra.mxu0 0.0
    %4236 = vmatpush.msra.mxu0 0.0
    %4237 = vmatpush.msra.mxu0 0.0
    %4238 = vmatpush.msra.mxu0 0.0
    %v4239 = vand.u32 %v4219, 4294901760
    %4240 = vmatpush.msra.mxu0 %v4239
    %v4241 = vand.u32 %v4218, 4294901760
    %4242 = vmatpush.msra.mxu0 %v4241
    %v4243 = vand.u32 %v4217, 4294901760
    %4244 = vmatpush.msra.mxu0 %v4243
    %v4245 = vand.u32 %v4216, 4294901760
    %4246 = vmatpush.msra.mxu0 %v4245
    %v4247 = vand.u32 %v4215, 4294901760
    %4248 = vmatpush.msra.mxu0 %v4247
    %v4249 = vand.u32 %v4214, 4294901760
    %4250 = vmatpush.msra.mxu0 %v4249
    %v4251 = vand.u32 %v4213, 4294901760
    %4252 = vmatpush.msra.mxu0 %v4251
    %v4253 = vand.u32 %v4212, 4294901760
    %4254 = vmatpush.msra.mxu0 %v4253
    %v4255 = vand.u32 %v4226, 4294901760
    %v4256 = vsub.f32 %v4226, %v4255
    %v4257 = vand.u32 %v4256, 4294901760
    %v4258 = vsub.f32 %v4256, %v4257
    %v4259 = vand.u32 %v4258, 4294901760
    %4260 = vmatmul.f32.gmra.mxu0 %v4259
    %v4261 = vpop.f32.mrf.mxu0
    %v4262 = vadd.f32 %v4222, %v4261
    %v4263 = vand.u32 %v4229, 4294901760
    %v4264 = vsub.f32 %v4229, %v4263
    %v4265 = vand.u32 %v4264, 4294901760
    %v4266 = vsub.f32 %v4264, %v4265
    %v4267 = vand.u32 %v4266, 4294901760
    %4268 = vmatmul.f32.gmra.mxu0 %v4267
    %v4269 = vpop.f32.mrf.mxu0
    %v4270 = vadd.f32 %v4222, %v4269
    %4271 = vdwg.mxu0
    %4272 = vmatpush.msra.mxu0 0.0
    %4273 = vmatpush.msra.mxu0 0.0
    %4274 = vmatpush.msra.mxu0 0.0
    %4275 = vmatpush.msra.mxu0 0.0
    %4276 = vmatpush.msra.mxu0 0.0
    %4277 = vmatpush.msra.mxu0 0.0
    %4278 = vmatpush.msra.mxu0 0.0
    %4279 = vmatpush.msra.mxu0 0.0
    %v4280 = vand.u32 %v4219, 4294901760
    %v4281 = vsub.f32 %v4219, %v4280
    %v4282 = vand.u32 %v4281, 4294901760
    %v4283 = vsub.f32 %v4281, %v4282
    %v4284 = vand.u32 %v4283, 4294901760
    %4285 = vmatpush.msra.mxu0 %v4284
    %v4286 = vand.u32 %v4218, 4294901760
    %v4287 = vsub.f32 %v4218, %v4286
    %v4288 = vand.u32 %v4287, 4294901760
    %v4289 = vsub.f32 %v4287, %v4288
    %v4290 = vand.u32 %v4289, 4294901760
    %4291 = vmatpush.msra.mxu0 %v4290
    %v4292 = vand.u32 %v4217, 4294901760
    %v4293 = vsub.f32 %v4217, %v4292
    %v4294 = vand.u32 %v4293, 4294901760
    %v4295 = vsub.f32 %v4293, %v4294
    %v4296 = vand.u32 %v4295, 4294901760
    %4297 = vmatpush.msra.mxu0 %v4296
    %v4298 = vand.u32 %v4216, 4294901760
    %v4299 = vsub.f32 %v4216, %v4298
    %v4300 = vand.u32 %v4299, 4294901760
    %v4301 = vsub.f32 %v4299, %v4300
    %v4302 = vand.u32 %v4301, 4294901760
    %4303 = vmatpush.msra.mxu0 %v4302
    %v4304 = vand.u32 %v4215, 4294901760
    %v4305 = vsub.f32 %v4215, %v4304
    %v4306 = vand.u32 %v4305, 4294901760
    %v4307 = vsub.f32 %v4305, %v4306
    %v4308 = vand.u32 %v4307, 4294901760
    %4309 = vmatpush.msra.mxu0 %v4308
    %v4310 = vand.u32 %v4214, 4294901760
    %v4311 = vsub.f32 %v4214, %v4310
    %v4312 = vand.u32 %v4311, 4294901760
    %v4313 = vsub.f32 %v4311, %v4312
    %v4314 = vand.u32 %v4313, 4294901760
    %4315 = vmatpush.msra.mxu0 %v4314
    %v4316 = vand.u32 %v4213, 4294901760
    %v4317 = vsub.f32 %v4213, %v4316
    %v4318 = vand.u32 %v4317, 4294901760
    %v4319 = vsub.f32 %v4317, %v4318
    %v4320 = vand.u32 %v4319, 4294901760
    %4321 = vmatpush.msra.mxu0 %v4320
    %v4322 = vand.u32 %v4212, 4294901760
    %v4323 = vsub.f32 %v4212, %v4322
    %v4324 = vand.u32 %v4323, 4294901760
    %v4325 = vsub.f32 %v4323, %v4324
    %v4326 = vand.u32 %v4325, 4294901760
    %4327 = vmatpush.msra.mxu0 %v4326
    %v4328 = vand.u32 %v4226, 4294901760
    %4329 = vmatmul.f32.gmra.mxu0 %v4328
    %v4330 = vpop.f32.mrf.mxu0
    %v4331 = vadd.f32 %v4262, %v4330
    %v4332 = vand.u32 %v4229, 4294901760
    %4333 = vmatmul.f32.gmra.mxu0 %v4332
    %v4334 = vpop.f32.mrf.mxu0
    %v4335 = vadd.f32 %v4270, %v4334
    %4336 = vdwg.mxu0
    %4337 = vmatpush.msra.mxu0 0.0
    %4338 = vmatpush.msra.mxu0 0.0
    %4339 = vmatpush.msra.mxu0 0.0
    %4340 = vmatpush.msra.mxu0 0.0
    %4341 = vmatpush.msra.mxu0 0.0
    %4342 = vmatpush.msra.mxu0 0.0
    %4343 = vmatpush.msra.mxu0 0.0
    %4344 = vmatpush.msra.mxu0 0.0
    %v4345 = vand.u32 %v4219, 4294901760
    %v4346 = vsub.f32 %v4219, %v4345
    %4347 = vmatpush.msra.mxu0 %v4346
    %v4348 = vand.u32 %v4218, 4294901760
    %v4349 = vsub.f32 %v4218, %v4348
    %4350 = vmatpush.msra.mxu0 %v4349
    %v4351 = vand.u32 %v4217, 4294901760
    %v4352 = vsub.f32 %v4217, %v4351
    %4353 = vmatpush.msra.mxu0 %v4352
    %v4354 = vand.u32 %v4216, 4294901760
    %v4355 = vsub.f32 %v4216, %v4354
    %4356 = vmatpush.msra.mxu0 %v4355
    %v4357 = vand.u32 %v4215, 4294901760
    %v4358 = vsub.f32 %v4215, %v4357
    %4359 = vmatpush.msra.mxu0 %v4358
    %v4360 = vand.u32 %v4214, 4294901760
    %v4361 = vsub.f32 %v4214, %v4360
    %4362 = vmatpush.msra.mxu0 %v4361
    %v4363 = vand.u32 %v4213, 4294901760
    %v4364 = vsub.f32 %v4213, %v4363
    %4365 = vmatpush.msra.mxu0 %v4364
    %v4366 = vand.u32 %v4212, 4294901760
    %v4367 = vsub.f32 %v4212, %v4366
    %4368 = vmatpush.msra.mxu0 %v4367
    %v4369 = vand.u32 %v4226, 4294901760
    %v4370 = vsub.f32 %v4226, %v4369
    %4371 = vmatmul.f32.gmra.mxu0 %v4370
    %v4372 = vpop.f32.mrf.mxu0
    %v4373 = vadd.f32 %v4331, %v4372
    %v4374 = vand.u32 %v4229, 4294901760
    %v4375 = vsub.f32 %v4229, %v4374
    %4376 = vmatmul.f32.gmra.mxu0 %v4375
    %v4377 = vpop.f32.mrf.mxu0
    %v4378 = vadd.f32 %v4335, %v4377
    %4379 = vdwg.mxu0
    %4380 = vmatpush.msra.mxu0 0.0
    %4381 = vmatpush.msra.mxu0 0.0
    %4382 = vmatpush.msra.mxu0 0.0
    %4383 = vmatpush.msra.mxu0 0.0
    %4384 = vmatpush.msra.mxu0 0.0
    %4385 = vmatpush.msra.mxu0 0.0
    %4386 = vmatpush.msra.mxu0 0.0
    %4387 = vmatpush.msra.mxu0 0.0
    %v4388 = vand.u32 %v4219, 4294901760
    %4389 = vmatpush.msra.mxu0 %v4388
    %v4390 = vand.u32 %v4218, 4294901760
    %4391 = vmatpush.msra.mxu0 %v4390
    %v4392 = vand.u32 %v4217, 4294901760
    %4393 = vmatpush.msra.mxu0 %v4392
    %v4394 = vand.u32 %v4216, 4294901760
    %4395 = vmatpush.msra.mxu0 %v4394
    %v4396 = vand.u32 %v4215, 4294901760
    %4397 = vmatpush.msra.mxu0 %v4396
    %v4398 = vand.u32 %v4214, 4294901760
    %4399 = vmatpush.msra.mxu0 %v4398
    %v4400 = vand.u32 %v4213, 4294901760
    %4401 = vmatpush.msra.mxu0 %v4400
    %v4402 = vand.u32 %v4212, 4294901760
    %4403 = vmatpush.msra.mxu0 %v4402
    %v4404 = vand.u32 %v4226, 4294901760
    %v4405 = vsub.f32 %v4226, %v4404
    %v4406 = vand.u32 %v4405, 4294901760
    %4407 = vmatmul.f32.gmra.mxu0 %v4406
    %v4408 = vpop.f32.mrf.mxu0
    %v4409 = vadd.f32 %v4373, %v4408
    %v4410 = vand.u32 %v4229, 4294901760
    %v4411 = vsub.f32 %v4229, %v4410
    %v4412 = vand.u32 %v4411, 4294901760
    %4413 = vmatmul.f32.gmra.mxu0 %v4412
    %v4414 = vpop.f32.mrf.mxu0
    %v4415 = vadd.f32 %v4378, %v4414
    %4416 = vdwg.mxu0
    %4417 = vmatpush.msra.mxu0 0.0
    %4418 = vmatpush.msra.mxu0 0.0
    %4419 = vmatpush.msra.mxu0 0.0
    %4420 = vmatpush.msra.mxu0 0.0
    %4421 = vmatpush.msra.mxu0 0.0
    %4422 = vmatpush.msra.mxu0 0.0
    %4423 = vmatpush.msra.mxu0 0.0
    %4424 = vmatpush.msra.mxu0 0.0
    %v4425 = vand.u32 %v4219, 4294901760
    %v4426 = vsub.f32 %v4219, %v4425
    %v4427 = vand.u32 %v4426, 4294901760
    %4428 = vmatpush.msra.mxu0 %v4427
    %v4429 = vand.u32 %v4218, 4294901760
    %v4430 = vsub.f32 %v4218, %v4429
    %v4431 = vand.u32 %v4430, 4294901760
    %4432 = vmatpush.msra.mxu0 %v4431
    %v4433 = vand.u32 %v4217, 4294901760
    %v4434 = vsub.f32 %v4217, %v4433
    %v4435 = vand.u32 %v4434, 4294901760
    %4436 = vmatpush.msra.mxu0 %v4435
    %v4437 = vand.u32 %v4216, 4294901760
    %v4438 = vsub.f32 %v4216, %v4437
    %v4439 = vand.u32 %v4438, 4294901760
    %4440 = vmatpush.msra.mxu0 %v4439
    %v4441 = vand.u32 %v4215, 4294901760
    %v4442 = vsub.f32 %v4215, %v4441
    %v4443 = vand.u32 %v4442, 4294901760
    %4444 = vmatpush.msra.mxu0 %v4443
    %v4445 = vand.u32 %v4214, 4294901760
    %v4446 = vsub.f32 %v4214, %v4445
    %v4447 = vand.u32 %v4446, 4294901760
    %4448 = vmatpush.msra.mxu0 %v4447
    %v4449 = vand.u32 %v4213, 4294901760
    %v4450 = vsub.f32 %v4213, %v4449
    %v4451 = vand.u32 %v4450, 4294901760
    %4452 = vmatpush.msra.mxu0 %v4451
    %v4453 = vand.u32 %v4212, 4294901760
    %v4454 = vsub.f32 %v4212, %v4453
    %v4455 = vand.u32 %v4454, 4294901760
    %4456 = vmatpush.msra.mxu0 %v4455
    %v4457 = vand.u32 %v4226, 4294901760
    %4458 = vmatmul.f32.gmra.mxu0 %v4457
    %v4459 = vpop.f32.mrf.mxu0
    %v4460 = vadd.f32 %v4409, %v4459
    %v4461 = vand.u32 %v4229, 4294901760
    %4462 = vmatmul.f32.gmra.mxu0 %v4461
    %v4463 = vpop.f32.mrf.mxu0
    %v4464 = vadd.f32 %v4415, %v4463
    %4465 = vdwg.mxu0
    %4466 = vmatpush.msra.mxu0 0.0
    %4467 = vmatpush.msra.mxu0 0.0
    %4468 = vmatpush.msra.mxu0 0.0
    %4469 = vmatpush.msra.mxu0 0.0
    %4470 = vmatpush.msra.mxu0 0.0
    %4471 = vmatpush.msra.mxu0 0.0
    %4472 = vmatpush.msra.mxu0 0.0
    %4473 = vmatpush.msra.mxu0 0.0
    %v4474 = vand.u32 %v4219, 4294901760
    %4475 = vmatpush.msra.mxu0 %v4474
    %v4476 = vand.u32 %v4218, 4294901760
    %4477 = vmatpush.msra.mxu0 %v4476
    %v4478 = vand.u32 %v4217, 4294901760
    %4479 = vmatpush.msra.mxu0 %v4478
    %v4480 = vand.u32 %v4216, 4294901760
    %4481 = vmatpush.msra.mxu0 %v4480
    %v4482 = vand.u32 %v4215, 4294901760
    %4483 = vmatpush.msra.mxu0 %v4482
    %v4484 = vand.u32 %v4214, 4294901760
    %4485 = vmatpush.msra.mxu0 %v4484
    %v4486 = vand.u32 %v4213, 4294901760
    %4487 = vmatpush.msra.mxu0 %v4486
    %v4488 = vand.u32 %v4212, 4294901760
    %4489 = vmatpush.msra.mxu0 %v4488
    %v4490 = vand.u32 %v4226, 4294901760
    %4491 = vmatmul.f32.gmra.mxu0 %v4490
    %v4492 = vpop.f32.mrf.mxu0
    %v4493 = vadd.f32 %v4460, %v4492
    %v4494 = vand.u32 %v4229, 4294901760
    %4495 = vmatmul.f32.gmra.mxu0 %v4494
    %v4496 = vpop.f32.mrf.mxu0
    %v4497 = vadd.f32 %v4464, %v4496
    %4498 = vdwg.mxu0
    %v4499 = vadd.f32 %v3496, %v4493
    %v4500 = vadd.f32 %v3497, %v4497
    %4501 = vst.msk [vmem:[#allocation2] sm:$0xff] %vm60, %v4499
    %4502 = vst.msk [vmem:[#allocation2 + $0x8] sm:$0xff] %vm60, %v4500
    // Predicated region
    $region66: #{tpu_custom_call.1} parent=1 // pred_check
      _
    $region67: #{tpu_custom_call.1} parent=1 // pred_check_branch
      %4504 = sbr.rel (0) target = $region69
    $region68: #{tpu_custom_call.1} parent=1 // pred_region
      %4506 = vsyncadd [#allocation3], 0
      %s4507 = sshll.u32 [#allocation2], 4
      %s4508 = int_to_ptr.vmem [resolvable:$true] %s4507
      %s4509 = sshll.u32 %s16, 4
      %s4510 = int_to_ptr.hbm [resolvable:$true] %s4509
      %4515 = dma.vmem_to_hbm [thread:$0]  %s4508, 256, %s4510, [#allocation3], 128, 128, 8
    $region69: #{tpu_custom_call.1} parent=1 // pred_fallthru
      _
    // Predicated region
    $region70: #{tpu_custom_call.1} parent=1 // pred_check
      _
    $region71: #{tpu_custom_call.1} parent=1 // pred_check_branch
      %4517 = sbr.rel (0) target = $region73
    $region72: #{tpu_custom_call.1} parent=1 // pred_region
      %4519 = vsyncadd [#allocation5], 0
      %s4520 = sshll.u32 [#allocation4], 4
      %s4521 = int_to_ptr.vmem [resolvable:$true] %s4520
      %s4522 = sshll.u32 %s17, 4
      %s4523 = int_to_ptr.hbm [resolvable:$true] %s4522
      %4528 = dma.vmem_to_hbm [thread:$0]  %s4521, 1024, %s4523, [#allocation5], 128, 128, 8
    $region73: #{tpu_custom_call.1} parent=1 // pred_fallthru
      _
    // Predicated region
    $region74: #{tpu_custom_call.1} parent=1 // pred_check
      _
    $region75: #{tpu_custom_call.1} parent=1 // pred_check_branch
      %4530 = sbr.rel (0) target = $region77
    $region76: #{tpu_custom_call.1} parent=1 // pred_region
      %4532 = dma.done [#allocation3], 256
    $region77: #{tpu_custom_call.1} parent=1 // pred_fallthru
      _
    // Predicated region
    $region78: #{tpu_custom_call.1} parent=1 // pred_check
      _
    $region79: #{tpu_custom_call.1} parent=1 // pred_check_branch
      %4534 = sbr.rel (0) target = $region81
    $region80: #{tpu_custom_call.1} parent=1 // pred_region
      %4536 = dma.done [#allocation5], 1024
    $region81: #{tpu_custom_call.1} parent=1 // pred_fallthru
      _
    %4537 = vsyncpa [#allocation3], 1
    %4538 = vsyncpa [#allocation5], 1

</llo_original>
